<compile_context>
chip_gen: v5e
topology: v5e:2x2
jax: 0.10.0
libtpu: 0.0.40
codegen_flags: <defaults>
</compile_context>

<pallas_src>
import functools

import jax
import jax.numpy as jnp
from jax import lax
from jax.experimental import pallas as pl
from jax.experimental.pallas import tpu as pltpu


def _silu(x):
    return x * jax.nn.sigmoid(x)


def _round_up(x, m):
    return ((x + m - 1) // m) * m


# ---------------------------------------------------------------------------
# Pass 1: edge-tiled accumulate kernel (gather -> edge MLP -> coord MLP -> scatter)
# ---------------------------------------------------------------------------
def _edge_kernel(row_ref, col_ref, hc_ref,
                 w1a_ref, w1b_ref, w1r_ref, b1_ref, w2_ref, b2_ref,
                 wc1_ref, bc1_ref, wc2_ref,
                 acc_feat_ref, acc_small_ref, *, feat_dim):
    f32 = jnp.float32
    e_blk = pl.program_id(1)
    TE = row_ref.shape[0]
    N = hc_ref.shape[0]
    F = feat_dim

    @pl.when(e_blk == 0)
    def _init():
        acc_feat_ref[...] = jnp.zeros_like(acc_feat_ref)
        acc_small_ref[...] = jnp.zeros_like(acc_small_ref)

    hc = hc_ref[...]                                                  # (N, HCP) = [h | coord | 0]

    # One-hot gather matrices for this edge tile.  Padded edges carry an
    # out-of-range node id -> all-zero one-hot row -> zero contribution.
    node_iota = lax.broadcasted_iota(jnp.int32, (TE, N), 1)           # (TE, N)
    row_oh = (row_ref[...] == node_iota).astype(f32)
    col_oh = (col_ref[...] == node_iota).astype(f32)

    # --- fused, lane-dense gather of [h | coord | 0] (2 matmuls) ---
    g_row = jnp.dot(row_oh, hc, preferred_element_type=f32)           # (TE, HCP)
    g_col = jnp.dot(col_oh, hc, preferred_element_type=f32)

    # --- coord2radial ---
    coord_diff = g_row[:, F:F + 3] - g_col[:, F:F + 3]                # (TE, 3)
    radial = jnp.sum(coord_diff * coord_diff, axis=1, keepdims=True)  # (TE, 1)

    # --- edge_model (first-layer weights zero-extended over coord/pad lanes) ---
    e_pre = (jnp.dot(g_row, w1a_ref[...], preferred_element_type=f32)
             + jnp.dot(g_col, w1b_ref[...], preferred_element_type=f32)
             + radial * w1r_ref[...]
             + b1_ref[...])
    e1 = _silu(e_pre)
    edge_feat = _silu(jnp.dot(e1, w2_ref[...], preferred_element_type=f32)
                      + b2_ref[...])                                  # (TE, HP)

    # --- coord_model (per-edge part) ---
    c1 = _silu(jnp.dot(edge_feat, wc1_ref[...], preferred_element_type=f32)
               + bc1_ref[...])
    scal = jnp.dot(c1, wc2_ref[...], preferred_element_type=f32)      # (TE, 1)
    trans = coord_diff * scal                                         # (TE, 3)

    # --- transpose-free scatter, split into two lane-aligned accumulators ---
    small = jnp.concatenate(
        [trans, jnp.ones((TE, 1), f32), jnp.zeros((TE, 4), f32)], axis=1)   # (TE, 8)
    acc_feat_ref[...] += lax.dot_general(
        row_oh, edge_feat,
        dimension_numbers=(((0,), (0,)), ((), ())),                   # contract edge axis
        preferred_element_type=f32)                                   # (N, HP)
    acc_small_ref[...] += lax.dot_general(
        row_oh, small,
        dimension_numbers=(((0,), (0,)), ((), ())),
        preferred_element_type=f32)                                   # (N, 8)


# ---------------------------------------------------------------------------
# Pass 2: reduce per-core partials, coord mean-agg, node MLP + residual
# ---------------------------------------------------------------------------
def _finalize_kernel(acc_feat_ref, acc_small_ref, hc_ref,
                     wn1h_ref, wn1a_ref, bn1_ref, wn2_ref, bn2_ref,
                     out_ref, *, feat_dim):
    f32 = jnp.float32
    F = feat_dim
    hc = hc_ref[...]                                                  # (N, HCP)
    N, HCP = hc.shape

    acc_feat = jnp.sum(acc_feat_ref[...], axis=0)                     # (N, HP)
    acc_small = jnp.sum(acc_small_ref[...], axis=0)                   # (N, 8)

    agg_c = acc_small[:, 0:3]
    counts = jnp.maximum(acc_small[:, 3:4], 1.0)                      # clamp(min=1) as in ref
    coord_delta = agg_c / counts                                      # (N, 3)

    # node MLP: wn1h is zero-extended over coord/pad lanes of hc, wn2/bn2 are
    # zero-extended over output lanes >= F, so the whole thing stays lane-dense.
    n1 = _silu(jnp.dot(hc, wn1h_ref[...], preferred_element_type=f32)
               + jnp.dot(acc_feat, wn1a_ref[...], preferred_element_type=f32)
               + bn1_ref[...])
    node_out = jnp.dot(n1, wn2_ref[...], preferred_element_type=f32) + bn2_ref[...]  # (N, HCP)

    delta_ext = jnp.concatenate(
        [jnp.zeros((N, F), f32), coord_delta,
         jnp.zeros((N, HCP - F - 3), f32)], axis=1)                   # (N, HCP)

    # hc = [h | coord | 0]  ->  out = [h + node_mlp | coord + mean_agg | 0]
    out_ref[...] = hc + node_out + delta_ext
    # TODO(synk): original module prints a message when coordinates are unchanged
    # (torch.allclose side-effect); not reproduced here.


# ---------------------------------------------------------------------------
# Host-side parameter padding (exact: silu(0) == 0, padded lanes stay 0)
# ---------------------------------------------------------------------------
def _pad_params(params, F, HCP, HP):
    H = params["w2"].shape[0]
    dh = HP - H
    padc = lambda w: jnp.pad(w, ((0, 0), (0, dh)))          # pad output-feature dim
    padr = lambda w: jnp.pad(w, ((0, dh), (0, 0)))          # pad input-feature dim
    padrc = lambda w: jnp.pad(w, ((0, dh), (0, dh)))
    ext_in = lambda w: jnp.pad(w, ((0, HCP - F), (0, dh)))  # (F,H) -> (HCP,HP), extra rows = 0

    return dict(
        w1a=ext_in(params["w1a"]),
        w1b=ext_in(params["w1b"]),
        w1r=padc(params["w1r"]),                            # (1, HP)
        b1=padc(params["b1"]),
        w2=padrc(params["w2"]),                             # (HP, HP)
        b2=padc(params["b2"]),
        wc1=padrc(params["wc1"]),
        bc1=padc(params["bc1"]),
        wc2=padr(params["wc2"]),                            # (HP, 1)
        wn1h=ext_in(params["wn1h"]),                        # (HCP, HP)
        wn1a=padrc(params["wn1a"]),                         # (HP, HP)
        bn1=padc(params["bn1"]),
        wn2=jnp.pad(params["wn2"], ((0, dh), (0, HCP - F))),  # (HP, HCP)
        bn2=jnp.pad(params["bn2"], ((0, 0), (0, HCP - F))),   # (1, HCP)
    )


def _device_kind():
    try:
        return jax.devices()[0].device_kind.lower()
    except Exception:
        return ""


# ---------------------------------------------------------------------------
# Wrapper
# ---------------------------------------------------------------------------
def egcl_forward(params, h, row, col, coord, *, edge_tile=None, num_cores=None):
    """h: (N,F) f32, row/col: (E,) int, coord: (N,3) f32 -> (h_out, coord_out)."""
    N, F = h.shape
    E = row.shape[0]
    H = params["w2"].shape[0]
    HP = _round_up(H, 128)        # padded hidden lanes
    HCP = _round_up(F + 3, 128)   # padded [h | coord] lanes

    kind = _device_kind()
    if edge_tile is None:
        # v5-class MXU is 128 deep; v6e/v7x are 256 deep.
        edge_tile = 128 if "v5" in kind else 256
    if num_cores is None:
        # v7x has 2 TensorCores per chip; split the edge reduction across them.
        num_cores = 2 if "v7" in kind else 1

    TE = int(edge_tile)
    NC = int(num_cores)
    tiles_total = max(1, pl.cdiv(E, TE))          # >= 1 so outputs are written even if E == 0
    tiles_per_core = int(pl.cdiv(tiles_total, NC))
    Ep = NC * tiles_per_core * TE
    pad_e = Ep - E

    p = _pad_params(params, F, HCP, HP)

    row_i = row.astype(jnp.int32)
    col_i = col.astype(jnp.int32)
    if pad_e:
        pad_ids = jnp.full((pad_e,), N, jnp.int32)   # out-of-range sentinel -> no-op edges
        row_i = jnp.concatenate([row_i, pad_ids])
        col_i = jnp.concatenate([col_i, pad_ids])
    row2 = row_i.reshape(Ep, 1)
    col2 = col_i.reshape(Ep, 1)

    # Fused, lane-dense node slab [h | coord | 0] of width HCP.
    hc = jnp.concatenate(
        [h.astype(jnp.float32), coord.astype(jnp.float32),
         jnp.zeros((N, HCP - F - 3), jnp.float32)], axis=1)            # (N, HCP)

    edge_weights = (p["w1a"], p["w1b"], p["w1r"], p["b1"], p["w2"], p["b2"],
                    p["wc1"], p["bc1"], p["wc2"])
    node_weights = (p["wn1h"], p["wn1a"], p["bn1"], p["wn2"], p["bn2"])

    edge_idx_spec = pl.BlockSpec((TE, 1), lambda c, e: (c * tiles_per_core + e, 0))
    full2 = lambda arr: pl.BlockSpec(arr.shape, lambda c, e: (0, 0))   # resident across grid

    in_specs = [edge_idx_spec, edge_idx_spec, full2(hc)] + [full2(w) for w in edge_weights]
    out_specs = (pl.BlockSpec((None, N, HP), lambda c, e: (c, 0, 0)),  # per-core partial
                 pl.BlockSpec((None, N, 8), lambda c, e: (c, 0, 0)))

    # --- VMEM budget derived from actual resident buffers (not a hard-coded cap) ---
    b4 = 4
    weight_bytes = sum(int(w.size) for w in edge_weights) * b4
    resident_bytes = (int(hc.size) + 2 * N * (HP + 8)) * b4            # hc + acc blocks (x2 safety)
    edge_blk_bytes = 2 * 2 * TE * 1 * b4                               # row/col, double-buffered
    interm_bytes = (2 * TE * N + 2 * TE * HCP + 6 * TE * HP) * b4      # one-hots + MLP slabs
    vmem_cap = (56 if "v7" in kind else 100) * 1024 * 1024
    vmem_limit = int(min(vmem_cap,
                         max(32 * 1024 * 1024,
                             int(1.5 * (weight_bytes + resident_bytes
                                        + edge_blk_bytes + interm_bytes)))))

    # Advisory cost estimate (edge pass dominates).
    flops = int(2 * Ep * N * HCP * 2                       # gathers
                + 2 * Ep * N * (HP + 8)                    # scatters
                + 2 * Ep * (2 * HCP * HP + 2 * HP * HP + HP)   # edge + coord MLPs
                + 2 * N * (HCP * HP + HP * HP + HP * HCP))     # node MLP (pass 2)
    transcendentals = int(3 * Ep * HP + N * HP)
    bytes_accessed = int(b4 * (Ep * 2 + int(hc.size)
                               + weight_bytes // b4
                               + NC * N * (HP + 8) + N * HCP))

    acc_feat, acc_small = pl.pallas_call(
        functools.partial(_edge_kernel, feat_dim=F),
        out_shape=(jax.ShapeDtypeStruct((NC, N, HP), jnp.float32),
                   jax.ShapeDtypeStruct((NC, N, 8), jnp.float32)),
        grid_spec=pltpu.PrefetchScalarGridSpec(
            num_scalar_prefetch=0,
            grid=(NC, tiles_per_core),
            in_specs=in_specs,
            out_specs=out_specs),
        compiler_params=pltpu.CompilerParams(
            dimension_semantics=("parallel", "arbitrary"),
            vmem_limit_bytes=vmem_limit),
        cost_estimate=pl.CostEstimate(flops=flops, transcendentals=transcendentals,
                                      bytes_accessed=bytes_accessed),
    )(row2, col2, hc, *edge_weights)

    # --- tiny finalize pass: reduce per-core partials + node MLP + coord mean ---
    fin_inputs = (acc_feat, acc_small, hc) + node_weights
    fin_specs = [pl.BlockSpec(x.shape, lambda i, nd=x.ndim: (0,) * nd) for x in fin_inputs]

    out_slab = pl.pallas_call(
        functools.partial(_finalize_kernel, feat_dim=F),
        out_shape=jax.ShapeDtypeStruct((N, HCP), jnp.float32),
        grid_spec=pltpu.PrefetchScalarGridSpec(
            num_scalar_prefetch=0,
            grid=(1,),
            in_specs=fin_specs,
            out_specs=pl.BlockSpec((N, HCP), lambda i: (0, 0))),
        compiler_params=pltpu.CompilerParams(
            dimension_semantics=("arbitrary",),
            vmem_limit_bytes=32 * 1024 * 1024),
    )(*fin_inputs)

    h_out = out_slab[:, :F]
    coord_out = out_slab[:, F:F + 3]
    return h_out, coord_out


# ---------------------------------------------------------------------------
# Synthetic params + pure-JAX reference (for the self-check)
# ---------------------------------------------------------------------------
def init_params(key, nf, hidden):
    """Deterministic synthetic init (logical shapes match E_GCL with edges_in_d=0)."""
    ks = jax.random.split(key, 12)

    def lin(k, fan_in, fan_out):
        bound = 1.0 / jnp.sqrt(fan_in)
        return jax.random.uniform(k, (fan_in, fan_out), jnp.float32, -bound, bound)

    w1_full = lin(ks[0], 2 * nf + 1, hidden)
    return {
        "w1a": w1_full[:nf],
        "w1b": w1_full[nf:2 * nf],
        "w1r": w1_full[2 * nf:],                              # (1, hidden)
        "b1": jax.random.uniform(ks[1], (1, hidden), jnp.float32, -0.05, 0.05),
        "w2": lin(ks[2], hidden, hidden),
        "b2": jax.random.uniform(ks[3], (1, hidden), jnp.float32, -0.05, 0.05),
        "wc1": lin(ks[4], hidden, hidden),
        "bc1": jax.random.uniform(ks[5], (1, hidden), jnp.float32, -0.05, 0.05),
        "wc2": lin(ks[6], hidden, 1) * 1.4142135623730951,    # xavier-ish gain
        "wn1h": lin(ks[7], nf, hidden),
        "wn1a": lin(ks[8], hidden, hidden),
        "bn1": jax.random.uniform(ks[9], (1, hidden), jnp.float32, -0.05, 0.05),
        "wn2": lin(ks[10], hidden, nf),
        "bn2": jax.random.uniform(ks[11], (1, nf), jnp.float32, -0.05, 0.05),
    }


def egcl_reference(params, h, row, col, coord):
    """Pure-JAX reference mirroring the PyTorch forward."""
    N = h.shape[0]
    cd = coord[row] - coord[col]
    radial = jnp.sum(cd ** 2, axis=1, keepdims=True)
    e = jax.nn.silu(h[row] @ params["w1a"] + h[col] @ params["w1b"]
                    + radial @ params["w1r"] + params["b1"])
    edge_feat = jax.nn.silu(e @ params["w2"] + params["b2"])
    c1 = jax.nn.silu(edge_feat @ params["wc1"] + params["bc1"])
    trans = cd * (c1 @ params["wc2"])
    agg_c = jax.ops.segment_sum(trans, row, N)
    cnt = jax.ops.segment_sum(jnp.ones((row.shape[0], 1), jnp.float32), row, N)
    coord_out = coord + agg_c / jnp.maximum(cnt, 1.0)
    agg_n = jax.ops.segment_sum(edge_feat, row, N)
    n1 = jax.nn.silu(h @ params["wn1h"] + agg_n @ params["wn1a"] + params["bn1"])
    h_out = h + (n1 @ params["wn2"] + params["bn2"])
    return h_out, coord_out


if __name__ == "__main__":
    # Small shapes consistent with the module: input_nf == output_nf == hidden_nf.
    N, F, HID, E = 16, 32, 32, 300
    key = jax.random.PRNGKey(0)
    k_h, k_c, k_r, k_col, k_p = jax.random.split(key, 5)

    h = jax.random.normal(k_h, (N, F), jnp.float32)
    coord = jax.random.normal(k_c, (N, 3), jnp.float32)
    row = jax.random.randint(k_r, (E,), 0, N, jnp.int32)
    col = jax.random.randint(k_col, (E,), 0, N, jnp.int32)
    params = init_params(k_p, F, HID)

    h_ref, c_ref = egcl_reference(params, h, row, col, coord)

    # Default config (tile / core split auto-selected for the local TPU generation).
    h_out, coord_out = egcl_forward(params, h, row, col, coord)
    jax.block_until_ready((h_out, coord_out))
    assert jnp.allclose(h_out, h_ref, atol=5e-4, rtol=5e-4), "h mismatch"
    assert jnp.allclose(coord_out, c_ref, atol=5e-4, rtol=5e-4), "coord mismatch"

    # Also exercise the v5e tile size and the 2-core (v7x-style) split explicitly
    # (correct on any chip; the parallel axis just serializes on 1-TC parts).
    h_out2, coord_out2 = egcl_forward(params, h, row, col, coord,
                                      edge_tile=128, num_cores=2)
    jax.block_until_ready((h_out2, coord_out2))
    assert jnp.allclose(h_out2, h_ref, atol=5e-4, rtol=5e-4), "h mismatch (2-core)"
    assert jnp.allclose(coord_out2, c_ref, atol=5e-4, rtol=5e-4), "coord mismatch (2-core)"

    print("KERNEL_OK")
</pallas_src>

<mosaic_0001>
module attributes {stable_mosaic.version = 11 : i64} {
  func.func @_edge_kernel(%arg0: i32, %arg1: i32, %arg2: memref<256x1xi32, #tpu.memory_space<vmem>>, %arg3: memref<256x1xi32, #tpu.memory_space<vmem>>, %arg4: memref<16x128xf32, #tpu.memory_space<vmem>>, %arg5: memref<128x128xf32, #tpu.memory_space<vmem>>, %arg6: memref<128x128xf32, #tpu.memory_space<vmem>>, %arg7: memref<1x128xf32, #tpu.memory_space<vmem>>, %arg8: memref<1x128xf32, #tpu.memory_space<vmem>>, %arg9: memref<128x128xf32, #tpu.memory_space<vmem>>, %arg10: memref<1x128xf32, #tpu.memory_space<vmem>>, %arg11: memref<128x128xf32, #tpu.memory_space<vmem>>, %arg12: memref<1x128xf32, #tpu.memory_space<vmem>>, %arg13: memref<128x1xf32, #tpu.memory_space<vmem>>, %arg14: memref<1x16x128xf32, #tpu.memory_space<vmem>>, %arg15: memref<1x16x8xf32, #tpu.memory_space<vmem>>) attributes {dimension_semantics = [#tpu.dimension_semantics<parallel>, #tpu.dimension_semantics<arbitrary>], iteration_bounds = array<i64: 1, 2>, scalar_prefetch = 0 : i64, scratch_operands = 0 : i64, tpu.core_type = #tpu.core_type<tc>, window_params = [{transform_indices = @transform_0, window_bounds = array<i64: 256, 1>}, {transform_indices = @transform_1, window_bounds = array<i64: 256, 1>}, {pipeline_mode = #tpu.pipeline_mode<synchronous>, transform_indices = @transform_2, window_bounds = array<i64: 16, 128>}, {pipeline_mode = #tpu.pipeline_mode<synchronous>, transform_indices = @transform_3, window_bounds = array<i64: 128, 128>}, {pipeline_mode = #tpu.pipeline_mode<synchronous>, transform_indices = @transform_4, window_bounds = array<i64: 128, 128>}, {pipeline_mode = #tpu.pipeline_mode<synchronous>, transform_indices = @transform_5, window_bounds = array<i64: 1, 128>}, {pipeline_mode = #tpu.pipeline_mode<synchronous>, transform_indices = @transform_6, window_bounds = array<i64: 1, 128>}, {pipeline_mode = #tpu.pipeline_mode<synchronous>, transform_indices = @transform_7, window_bounds = array<i64: 128, 128>}, {pipeline_mode = #tpu.pipeline_mode<synchronous>, transform_indices = @transform_8, window_bounds = array<i64: 1, 128>}, {pipeline_mode = #tpu.pipeline_mode<synchronous>, transform_indices = @transform_9, window_bounds = array<i64: 128, 128>}, {pipeline_mode = #tpu.pipeline_mode<synchronous>, transform_indices = @transform_10, window_bounds = array<i64: 1, 128>}, {pipeline_mode = #tpu.pipeline_mode<synchronous>, transform_indices = @transform_11, window_bounds = array<i64: 128, 1>}, {transform_indices = @transform_12, window_bounds = array<i64: 1, 16, 128>}, {transform_indices = @transform_13, window_bounds = array<i64: 1, 16, 8>}]} {
    %c0_i32 = arith.constant 0 : i32
    %0 = arith.cmpi eq, %arg1, %c0_i32 : i32
    %1 = arith.extui %0 : i1 to i32
    %c0_i32_0 = arith.constant 0 : i32
    %2 = arith.cmpi ne, %1, %c0_i32_0 : i32
    scf.if %2 {
      %cst_50 = arith.constant 0.000000e+00 : f32
      %85 = vector.broadcast %cst_50 : f32 to vector<16x128xf32>
      %c0_51 = arith.constant 0 : index
      %c0_52 = arith.constant 0 : index
      %c0_53 = arith.constant 0 : index
      %86 = vector.load %arg14[%c0_51, %c0_52, %c0_53] : memref<1x16x128xf32, #tpu.memory_space<vmem>>, vector<1x16x128xf32>
      %87 = vector.shape_cast %86 : vector<1x16x128xf32> to vector<16x128xf32>
      %88 = vector.shape_cast %85 : vector<16x128xf32> to vector<1x16x128xf32>
      tpu.vector_store %arg14[%c0_51, %c0_52, %c0_53], %88 {strides = array<i32>} : memref<1x16x128xf32, #tpu.memory_space<vmem>>, vector<1x16x128xf32>,
      %cst_54 = arith.constant 0.000000e+00 : f32
      %89 = vector.broadcast %cst_54 : f32 to vector<16x8xf32>
      %c0_55 = arith.constant 0 : index
      %c0_56 = arith.constant 0 : index
      %c0_57 = arith.constant 0 : index
      %90 = vector.load %arg15[%c0_55, %c0_56, %c0_57] : memref<1x16x8xf32, #tpu.memory_space<vmem>>, vector<1x16x8xf32>
      %91 = vector.shape_cast %90 : vector<1x16x8xf32> to vector<16x8xf32>
      %92 = vector.shape_cast %89 : vector<16x8xf32> to vector<1x16x8xf32>
      tpu.vector_store %arg15[%c0_55, %c0_56, %c0_57], %92 {strides = array<i32>} : memref<1x16x8xf32, #tpu.memory_space<vmem>>, vector<1x16x8xf32>,
    } else {
    }
    %c0 = arith.constant 0 : index
    %c0_1 = arith.constant 0 : index
    %3 = vector.load %arg4[%c0, %c0_1] : memref<16x128xf32, #tpu.memory_space<vmem>>, vector<16x128xf32>
    %4 = tpu.iota {dimensions = array<i32: 1>} : vector<256x16xi32>
    %c0_2 = arith.constant 0 : index
    %c0_3 = arith.constant 0 : index
    %5 = vector.load %arg2[%c0_2, %c0_3] : memref<256x1xi32, #tpu.memory_space<vmem>>, vector<256x1xi32>
    %6 = vector.broadcast %5 : vector<256x1xi32> to vector<256x16xi32>
    %7 = arith.cmpi eq, %6, %4 : vector<256x16xi32>
    %8 = arith.extui %7 : vector<256x16xi1> to vector<256x16xi32>
    %9 = arith.sitofp %8 : vector<256x16xi32> to vector<256x16xf32>
    %c0_4 = arith.constant 0 : index
    %c0_5 = arith.constant 0 : index
    %10 = vector.load %arg3[%c0_4, %c0_5] : memref<256x1xi32, #tpu.memory_space<vmem>>, vector<256x1xi32>
    %11 = vector.broadcast %10 : vector<256x1xi32> to vector<256x16xi32>
    %12 = arith.cmpi eq, %11, %4 : vector<256x16xi32>
    %13 = arith.extui %12 : vector<256x16xi1> to vector<256x16xi32>
    %14 = arith.sitofp %13 : vector<256x16xi32> to vector<256x16xf32>
    %cst = arith.constant dense<0.000000e+00> : vector<256x128xf32>
    %15 = tpu.matmul %9, %3, %cst {dimension_numbers = #tpu.dot_dimension_numbers<[1], [0], [0], [1], [0, 0, 1, 1], [], []>} : vector<256x16xf32>, vector<16x128xf32>, vector<256x128xf32> -> vector<256x128xf32>
    %cst_6 = arith.constant dense<0.000000e+00> : vector<256x128xf32>
    %16 = tpu.matmul %14, %3, %cst_6 {dimension_numbers = #tpu.dot_dimension_numbers<[1], [0], [0], [1], [0, 0, 1, 1], [], []>} : vector<256x16xf32>, vector<16x128xf32>, vector<256x128xf32> -> vector<256x128xf32>
    %17 = vector.extract_strided_slice %15 {offsets = [0, 32], sizes = [256, 3], strides = [1, 1]} : vector<256x128xf32> to vector<256x3xf32>
    %18 = vector.extract_strided_slice %16 {offsets = [0, 32], sizes = [256, 3], strides = [1, 1]} : vector<256x128xf32> to vector<256x3xf32>
    %19 = arith.subf %17, %18 : vector<256x3xf32>
    %20 = arith.mulf %19, %19 : vector<256x3xf32>
    %cst_7 = arith.constant dense<0.000000e+00> : vector<256xf32>
    %21 = vector.multi_reduction <add>, %20, %cst_7 [1] : vector<256x3xf32> to vector<256xf32>
    %22 = vector.shape_cast %21 : vector<256xf32> to vector<256x1xf32>
    %c0_8 = arith.constant 0 : index
    %c0_9 = arith.constant 0 : index
    %23 = vector.load %arg5[%c0_8, %c0_9] : memref<128x128xf32, #tpu.memory_space<vmem>>, vector<128x128xf32>
    %cst_10 = arith.constant dense<0.000000e+00> : vector<256x128xf32>
    %24 = tpu.matmul %15, %23, %cst_10 {dimension_numbers = #tpu.dot_dimension_numbers<[1], [0], [0], [1], [0, 0, 1, 1], [], []>} : vector<256x128xf32>, vector<128x128xf32>, vector<256x128xf32> -> vector<256x128xf32>
    %c0_11 = arith.constant 0 : index
    %c0_12 = arith.constant 0 : index
    %25 = vector.load %arg6[%c0_11, %c0_12] : memref<128x128xf32, #tpu.memory_space<vmem>>, vector<128x128xf32>
    %cst_13 = arith.constant dense<0.000000e+00> : vector<256x128xf32>
    %26 = tpu.matmul %16, %25, %cst_13 {dimension_numbers = #tpu.dot_dimension_numbers<[1], [0], [0], [1], [0, 0, 1, 1], [], []>} : vector<256x128xf32>, vector<128x128xf32>, vector<256x128xf32> -> vector<256x128xf32>
    %27 = arith.addf %24, %26 : vector<256x128xf32>
    %c0_14 = arith.constant 0 : index
    %c0_15 = arith.constant 0 : index
    %28 = vector.load %arg7[%c0_14, %c0_15] : memref<1x128xf32, #tpu.memory_space<vmem>>, vector<1x128xf32>
    %29 = vector.broadcast %22 : vector<256x1xf32> to vector<256x128xf32>
    %30 = vector.broadcast %28 : vector<1x128xf32> to vector<256x128xf32>
    %31 = arith.mulf %29, %30 : vector<256x128xf32>
    %32 = arith.addf %27, %31 : vector<256x128xf32>
    %c0_16 = arith.constant 0 : index
    %c0_17 = arith.constant 0 : index
    %33 = vector.load %arg8[%c0_16, %c0_17] : memref<1x128xf32, #tpu.memory_space<vmem>>, vector<1x128xf32>
    %34 = vector.broadcast %33 : vector<1x128xf32> to vector<256x128xf32>
    %35 = arith.addf %32, %34 : vector<256x128xf32>
    %36 = arith.negf %35 : vector<256x128xf32>
    %37 = math.exp %36 : vector<256x128xf32>
    %cst_18 = arith.constant 1.000000e+00 : f32
    %38 = vector.broadcast %cst_18 : f32 to vector<256x128xf32>
    %39 = arith.addf %38, %37 : vector<256x128xf32>
    %40 = arith.divf %38, %39 : vector<256x128xf32>
    %41 = arith.mulf %35, %40 : vector<256x128xf32>
    %c0_19 = arith.constant 0 : index
    %c0_20 = arith.constant 0 : index
    %42 = vector.load %arg9[%c0_19, %c0_20] : memref<128x128xf32, #tpu.memory_space<vmem>>, vector<128x128xf32>
    %cst_21 = arith.constant dense<0.000000e+00> : vector<256x128xf32>
    %43 = tpu.matmul %41, %42, %cst_21 {dimension_numbers = #tpu.dot_dimension_numbers<[1], [0], [0], [1], [0, 0, 1, 1], [], []>} : vector<256x128xf32>, vector<128x128xf32>, vector<256x128xf32> -> vector<256x128xf32>
    %c0_22 = arith.constant 0 : index
    %c0_23 = arith.constant 0 : index
    %44 = vector.load %arg10[%c0_22, %c0_23] : memref<1x128xf32, #tpu.memory_space<vmem>>, vector<1x128xf32>
    %45 = vector.broadcast %44 : vector<1x128xf32> to vector<256x128xf32>
    %46 = arith.addf %43, %45 : vector<256x128xf32>
    %47 = arith.negf %46 : vector<256x128xf32>
    %48 = math.exp %47 : vector<256x128xf32>
    %cst_24 = arith.constant 1.000000e+00 : f32
    %49 = vector.broadcast %cst_24 : f32 to vector<256x128xf32>
    %50 = arith.addf %49, %48 : vector<256x128xf32>
    %51 = arith.divf %49, %50 : vector<256x128xf32>
    %52 = arith.mulf %46, %51 : vector<256x128xf32>
    %c0_25 = arith.constant 0 : index
    %c0_26 = arith.constant 0 : index
    %53 = vector.load %arg11[%c0_25, %c0_26] : memref<128x128xf32, #tpu.memory_space<vmem>>, vector<128x128xf32>
    %cst_27 = arith.constant dense<0.000000e+00> : vector<256x128xf32>
    %54 = tpu.matmul %52, %53, %cst_27 {dimension_numbers = #tpu.dot_dimension_numbers<[1], [0], [0], [1], [0, 0, 1, 1], [], []>} : vector<256x128xf32>, vector<128x128xf32>, vector<256x128xf32> -> vector<256x128xf32>
    %c0_28 = arith.constant 0 : index
    %c0_29 = arith.constant 0 : index
    %55 = vector.load %arg12[%c0_28, %c0_29] : memref<1x128xf32, #tpu.memory_space<vmem>>, vector<1x128xf32>
    %56 = vector.broadcast %55 : vector<1x128xf32> to vector<256x128xf32>
    %57 = arith.addf %54, %56 : vector<256x128xf32>
    %58 = arith.negf %57 : vector<256x128xf32>
    %59 = math.exp %58 : vector<256x128xf32>
    %cst_30 = arith.constant 1.000000e+00 : f32
    %60 = vector.broadcast %cst_30 : f32 to vector<256x128xf32>
    %61 = arith.addf %60, %59 : vector<256x128xf32>
    %62 = arith.divf %60, %61 : vector<256x128xf32>
    %63 = arith.mulf %57, %62 : vector<256x128xf32>
    %c0_31 = arith.constant 0 : index
    %c0_32 = arith.constant 0 : index
    %64 = vector.load %arg13[%c0_31, %c0_32] : memref<128x1xf32, #tpu.memory_space<vmem>>, vector<128x1xf32>
    %cst_33 = arith.constant dense<0.000000e+00> : vector<256x1xf32>
    %65 = tpu.matmul %63, %64, %cst_33 {dimension_numbers = #tpu.dot_dimension_numbers<[1], [0], [0], [1], [0, 0, 1, 1], [], []>} : vector<256x128xf32>, vector<128x1xf32>, vector<256x1xf32> -> vector<256x1xf32>
    %66 = vector.broadcast %65 : vector<256x1xf32> to vector<256x3xf32>
    %67 = arith.mulf %19, %66 : vector<256x3xf32>
    %cst_34 = arith.constant 1.000000e+00 : f32
    %68 = vector.broadcast %cst_34 : f32 to vector<256x1xf32>
    %cst_35 = arith.constant 0.000000e+00 : f32
    %69 = vector.broadcast %cst_35 : f32 to vector<256x4xf32>
    %70 = tpu.concatenate %67, %68, %69 in 1 : vector<256x3xf32>, vector<256x1xf32>, vector<256x4xf32> -> vector<256x8xf32>
    %c0_36 = arith.constant 0 : index
    %c0_37 = arith.constant 0 : index
    %c0_38 = arith.constant 0 : index
    %71 = vector.load %arg14[%c0_36, %c0_37, %c0_38] : memref<1x16x128xf32, #tpu.memory_space<vmem>>, vector<1x16x128xf32>
    %72 = vector.shape_cast %71 : vector<1x16x128xf32> to vector<16x128xf32>
    %cst_39 = arith.constant dense<0.000000e+00> : vector<16x128xf32>
    %73 = tpu.matmul %9, %52, %cst_39 {dimension_numbers = #tpu.dot_dimension_numbers<[0], [0], [1], [1], [0, 1, 1, 1], [], []>} : vector<256x16xf32>, vector<256x128xf32>, vector<16x128xf32> -> vector<16x128xf32>
    %74 = arith.addf %72, %73 : vector<16x128xf32>
    %c0_40 = arith.constant 0 : index
    %c0_41 = arith.constant 0 : index
    %c0_42 = arith.constant 0 : index
    %75 = vector.load %arg14[%c0_40, %c0_41, %c0_42] : memref<1x16x128xf32, #tpu.memory_space<vmem>>, vector<1x16x128xf32>
    %76 = vector.shape_cast %75 : vector<1x16x128xf32> to vector<16x128xf32>
    %77 = vector.shape_cast %74 : vector<16x128xf32> to vector<1x16x128xf32>
    tpu.vector_store %arg14[%c0_40, %c0_41, %c0_42], %77 {strides = array<i32>} : memref<1x16x128xf32, #tpu.memory_space<vmem>>, vector<1x16x128xf32>,
    %c0_43 = arith.constant 0 : index
    %c0_44 = arith.constant 0 : index
    %c0_45 = arith.constant 0 : index
    %78 = vector.load %arg15[%c0_43, %c0_44, %c0_45] : memref<1x16x8xf32, #tpu.memory_space<vmem>>, vector<1x16x8xf32>
    %79 = vector.shape_cast %78 : vector<1x16x8xf32> to vector<16x8xf32>
    %cst_46 = arith.constant dense<0.000000e+00> : vector<16x8xf32>
    %80 = tpu.matmul %9, %70, %cst_46 {dimension_numbers = #tpu.dot_dimension_numbers<[0], [0], [1], [1], [0, 1, 1, 1], [], []>} : vector<256x16xf32>, vector<256x8xf32>, vector<16x8xf32> -> vector<16x8xf32>
    %81 = arith.addf %79, %80 : vector<16x8xf32>
    %c0_47 = arith.constant 0 : index
    %c0_48 = arith.constant 0 : index
    %c0_49 = arith.constant 0 : index
    %82 = vector.load %arg15[%c0_47, %c0_48, %c0_49] : memref<1x16x8xf32, #tpu.memory_space<vmem>>, vector<1x16x8xf32>
    %83 = vector.shape_cast %82 : vector<1x16x8xf32> to vector<16x8xf32>
    %84 = vector.shape_cast %81 : vector<16x8xf32> to vector<1x16x8xf32>
    tpu.vector_store %arg15[%c0_47, %c0_48, %c0_49], %84 {strides = array<i32>} : memref<1x16x8xf32, #tpu.memory_space<vmem>>, vector<1x16x8xf32>,
    return
  }
  func.func @transform_0(%arg0: i32, %arg1: i32) -> (i32, i32) {
    %c2_i32 = arith.constant 2 : i32
    %0 = arith.muli %arg0, %c2_i32 : i32
    %1 = arith.addi %0, %arg1 : i32
    %c0_i32 = arith.constant 0 : i32
    %c0_i32_0 = arith.constant 0 : i32
    return %1, %c0_i32 : i32, i32
  }
  func.func @transform_1(%arg0: i32, %arg1: i32) -> (i32, i32) {
    %c2_i32 = arith.constant 2 : i32
    %0 = arith.muli %arg0, %c2_i32 : i32
    %1 = arith.addi %0, %arg1 : i32
    %c0_i32 = arith.constant 0 : i32
    %c0_i32_0 = arith.constant 0 : i32
    return %1, %c0_i32 : i32, i32
  }
  func.func @transform_2(%arg0: i32, %arg1: i32) -> (i32, i32) {
    %c0_i32 = arith.constant 0 : i32
    %c0_i32_0 = arith.constant 0 : i32
    %c0_i32_1 = arith.constant 0 : i32
    return %c0_i32, %c0_i32_0 : i32, i32
  }
  func.func @transform_3(%arg0: i32, %arg1: i32) -> (i32, i32) {
    %c0_i32 = arith.constant 0 : i32
    %c0_i32_0 = arith.constant 0 : i32
    %c0_i32_1 = arith.constant 0 : i32
    return %c0_i32, %c0_i32_0 : i32, i32
  }
  func.func @transform_4(%arg0: i32, %arg1: i32) -> (i32, i32) {
    %c0_i32 = arith.constant 0 : i32
    %c0_i32_0 = arith.constant 0 : i32
    %c0_i32_1 = arith.constant 0 : i32
    return %c0_i32, %c0_i32_0 : i32, i32
  }
  func.func @transform_5(%arg0: i32, %arg1: i32) -> (i32, i32) {
    %c0_i32 = arith.constant 0 : i32
    %c0_i32_0 = arith.constant 0 : i32
    %c0_i32_1 = arith.constant 0 : i32
    return %c0_i32, %c0_i32_0 : i32, i32
  }
  func.func @transform_6(%arg0: i32, %arg1: i32) -> (i32, i32) {
    %c0_i32 = arith.constant 0 : i32
    %c0_i32_0 = arith.constant 0 : i32
    %c0_i32_1 = arith.constant 0 : i32
    return %c0_i32, %c0_i32_0 : i32, i32
  }
  func.func @transform_7(%arg0: i32, %arg1: i32) -> (i32, i32) {
    %c0_i32 = arith.constant 0 : i32
    %c0_i32_0 = arith.constant 0 : i32
    %c0_i32_1 = arith.constant 0 : i32
    return %c0_i32, %c0_i32_0 : i32, i32
  }
  func.func @transform_8(%arg0: i32, %arg1: i32) -> (i32, i32) {
    %c0_i32 = arith.constant 0 : i32
    %c0_i32_0 = arith.constant 0 : i32
    %c0_i32_1 = arith.constant 0 : i32
    return %c0_i32, %c0_i32_0 : i32, i32
  }
  func.func @transform_9(%arg0: i32, %arg1: i32) -> (i32, i32) {
    %c0_i32 = arith.constant 0 : i32
    %c0_i32_0 = arith.constant 0 : i32
    %c0_i32_1 = arith.constant 0 : i32
    return %c0_i32, %c0_i32_0 : i32, i32
  }
  func.func @transform_10(%arg0: i32, %arg1: i32) -> (i32, i32) {
    %c0_i32 = arith.constant 0 : i32
    %c0_i32_0 = arith.constant 0 : i32
    %c0_i32_1 = arith.constant 0 : i32
    return %c0_i32, %c0_i32_0 : i32, i32
  }
  func.func @transform_11(%arg0: i32, %arg1: i32) -> (i32, i32) {
    %c0_i32 = arith.constant 0 : i32
    %c0_i32_0 = arith.constant 0 : i32
    %c0_i32_1 = arith.constant 0 : i32
    return %c0_i32, %c0_i32_0 : i32, i32
  }
  func.func @transform_12(%arg0: i32, %arg1: i32) -> (i32, i32, i32) {
    %c0_i32 = arith.constant 0 : i32
    %c0_i32_0 = arith.constant 0 : i32
    %c0_i32_1 = arith.constant 0 : i32
    return %arg0, %c0_i32, %c0_i32_0 : i32, i32, i32
  }
  func.func @transform_13(%arg0: i32, %arg1: i32) -> (i32, i32, i32) {
    %c0_i32 = arith.constant 0 : i32
    %c0_i32_0 = arith.constant 0 : i32
    %c0_i32_1 = arith.constant 0 : i32
    return %arg0, %c0_i32, %c0_i32_0 : i32, i32, i32
  }
}

</mosaic_0001>

<llo_original>
// kernel: tpu_custom_call.1
$region0: #{tpu_custom_call.1}
  #allocation0 [shape = 'u32[]', space=smem, size = 0x4, offset = 0x4, fixed_abs, tag = 'smem constant byte address 0x4 - core index']
  #allocation1 [shape = 'u32[72,128]{1,0:T(1,128)}', space=vmem, size = 0x9000, scoped, tag = 'internal scratch']
  %s0 = inlined_call_operand.vmem [shape: s32[512,1], index: 0, kind: input, shape index: {}]
  %s1 = inlined_call_operand.vmem [shape: s32[512,1], index: 1, kind: input, shape index: {}]
  %s2 = inlined_call_operand.vmem [shape: f32[16,128], index: 2, kind: input, shape index: {}]
  %s3 = inlined_call_operand.vmem [shape: f32[128,128], index: 3, kind: input, shape index: {}]
  %s4 = inlined_call_operand.vmem [shape: f32[128,128], index: 4, kind: input, shape index: {}]
  %s5 = inlined_call_operand.vmem [shape: f32[1,128], index: 5, kind: input, shape index: {}]
  %s6 = inlined_call_operand.vmem [shape: f32[1,128], index: 6, kind: input, shape index: {}]
  %s7 = inlined_call_operand.vmem [shape: f32[128,128], index: 7, kind: input, shape index: {}]
  %s8 = inlined_call_operand.vmem [shape: f32[1,128], index: 8, kind: input, shape index: {}]
  %s9 = inlined_call_operand.vmem [shape: f32[128,128], index: 9, kind: input, shape index: {}]
  %s10 = inlined_call_operand.vmem [shape: f32[1,128], index: 10, kind: input, shape index: {}]
  %s11 = inlined_call_operand.vmem [shape: f32[128,1], index: 11, kind: input, shape index: {}]
  %s12 = inlined_call_operand.hbm [shape: f32[1,16,128], index: 12, kind: output, shape index: {0}]
  %s13 = inlined_call_operand.vmem [shape: f32[1,16,8], index: 13, kind: output, shape index: {1}]
  %14 = xla_tuple %s12, %s13
  %s15 = sld [smem:[#allocation0]]
  $region93: #{tpu_custom_call.1} parent=0
    _
  %s17 = ssub.s32 1, %s15
  %s18 = scalar_select 0, %s17, %s15
  $region1: #{tpu_custom_call.1} parent=0
    #allocation2 [shape = 'u8[8192]{0}', space=vmem, size = 0x2000, scoped, tag = 'output window, operand 0, single buffered']
    #allocation3 [shape = 's32[2]{0}', space=sflag, size = 0x8, scoped, tag = 'scoped memory for tpu_custom_call.1']
    %19 = vsyncpa [#allocation3], 0
    loop: start=0, step=1, limit=4
    $region2: #{tpu_custom_call.1} parent=1 // loop_pre_header
      _
    $region3: #{tpu_custom_call.1} parent=1 // loop_header
      %s21 = sphi 0, %s25
      %p22 = scmp.ge.s32.totalorder %s21, 4
      %s28 = sphi 0, %s40
      %s29 = sphi 0, %s36
      %s30 = sphi 0, %s28
      %s31 = sphi 0, %s29
      %s32 = sphi 0, %s30
      %s33 = sphi 0, %s31
      %s47 = sphi 0, %s49
      %s50 = sphi 0, %s47
      %s51 = sphi 0, %s50
      %s67 = sphi 0, %s51
      %s77 = sphi 0, %s79
      %s80 = sphi 0, %s77
      %s81 = sphi 0, %s80
      %s97 = sphi 0, %s81
      %s101 = sphi 0, %s101
      %s103 = sphi 0, %s101
      %s104 = sphi 0, %s103
      %s118 = sphi 0, %s104
      %s122 = sphi 0, %s122
      %s124 = sphi 0, %s122
      %s125 = sphi 0, %s124
      %s139 = sphi 0, %s125
      %s143 = sphi 0, %s143
      %s145 = sphi 0, %s143
      %s146 = sphi 0, %s145
      %s160 = sphi 0, %s146
      %s164 = sphi 0, %s164
      %s166 = sphi 0, %s164
      %s167 = sphi 0, %s166
      %s181 = sphi 0, %s167
      %s185 = sphi 0, %s185
      %s187 = sphi 0, %s185
      %s188 = sphi 0, %s187
      %s202 = sphi 0, %s188
      %s206 = sphi 0, %s206
      %s208 = sphi 0, %s206
      %s209 = sphi 0, %s208
      %s223 = sphi 0, %s209
      %s227 = sphi 0, %s227
      %s229 = sphi 0, %s227
      %s230 = sphi 0, %s229
      %s244 = sphi 0, %s230
      %s248 = sphi 0, %s248
      %s250 = sphi 0, %s248
      %s251 = sphi 0, %s250
      %s265 = sphi 0, %s251
      %s269 = sphi 0, %s269
      %s271 = sphi 0, %s269
      %s272 = sphi 0, %s271
      %s286 = sphi 0, %s272
      %s290 = sphi 0, %s290
      %s292 = sphi 0, %s290
      %s293 = sphi 0, %s292
      %s307 = sphi 0, %s293
      %s313 = sphi 0, %s315
      %s316 = sphi 0, %s313
      %s317 = sphi 0, %s316
      %s333 = sphi 0, %s317
      %s339 = sphi 0, %s341
      %s342 = sphi 0, %s339
      %s343 = sphi 0, %s342
      %s359 = sphi 0, %s343
    $region4: #{tpu_custom_call.1} parent=1 // loop_header_branch
      %24 = sbr.rel (%p22) target = $region8
    $region5: #{tpu_custom_call.1} parent=1 // loop_body
      %s26 = ssub.s32 %s21, 1
      %s27 = ssub.s32 %s21, 2
      %s34 = sadd.s32 1, %s29
      %p35 = scmp.ge.s32.totalorder %s34, 2
      %s36 = scalar_select %p35, 0, %s34
      %s37 = sadd.s32 1, %s28
      %s38 = scalar_select %p35, %s37, %s28
      %p39 = scmp.ge.s32.totalorder %s38, 1
      %s40 = scalar_select %p39, 0, %s38
      %s41 = smul.u32 %s28, 2
      %s42 = sadd.s32 %s41, %s29
      %s43 = smul.u32 %s40, 2
      %s44 = sadd.s32 %s43, %s36
      %s45 = ssub.s32 %s42, %s44
      %p46 = scmp.eq.s32.totalorder %s45, 0
      %s48 = sadd.s32 %s47, 1
      %s49 = scalar_select %p46, %s47, %s48
      %p52 = pneg %p46
      %p53 = scmp.eq.s32.totalorder %s21, 1
      %p54 = por %p52, %p53
      %p55 = scmp.ne.s32.totalorder %s47, %s50
      %p56 = scmp.eq.s32.totalorder %s21, 0
      %p57 = por %p55, %p56
      %p58 = scmp.ne.s32.totalorder %s47, %s50
      %p59 = scmp.eq.s32.totalorder %s26, 1
      %p60 = por %p58, %p59
      %p61 = scmp.ne.s32.totalorder %s50, %s51
      %p62 = scmp.eq.s32.totalorder %s26, 0
      %p63 = por %p61, %p62
      %p64 = scmp.ne.s32.totalorder %s50, %s51
      %p65 = scmp.eq.s32.totalorder %s27, 1
      %p66 = por %p64, %p65
      %p68 = scmp.ne.s32.totalorder %s51, %s67
      %p69 = scmp.eq.s32.totalorder %s27, 0
      %p70 = por %p68, %p69
      %s71 = smul.u32 %s28, 2
      %s72 = sadd.s32 %s71, %s29
      %s73 = smul.u32 %s40, 2
      %s74 = sadd.s32 %s73, %s36
      %s75 = ssub.s32 %s72, %s74
      %p76 = scmp.eq.s32.totalorder %s75, 0
      %s78 = sadd.s32 %s77, 1
      %s79 = scalar_select %p76, %s77, %s78
      %p82 = pneg %p76
      %p83 = scmp.eq.s32.totalorder %s21, 1
      %p84 = por %p82, %p83
      %p85 = scmp.ne.s32.totalorder %s77, %s80
      %p86 = scmp.eq.s32.totalorder %s21, 0
      %p87 = por %p85, %p86
      %p88 = scmp.ne.s32.totalorder %s77, %s80
      %p89 = scmp.eq.s32.totalorder %s26, 1
      %p90 = por %p88, %p89
      %p91 = scmp.ne.s32.totalorder %s80, %s81
      %p92 = scmp.eq.s32.totalorder %s26, 0
      %p93 = por %p91, %p92
      %p94 = scmp.ne.s32.totalorder %s80, %s81
      %p95 = scmp.eq.s32.totalorder %s27, 1
      %p96 = por %p94, %p95
      %p98 = scmp.ne.s32.totalorder %s81, %s97
      %p99 = scmp.eq.s32.totalorder %s27, 0
      %p100 = por %p98, %p99
      %s102 = sadd.s32 %s101, 1
      %p105 = scmp.eq.s32.totalorder %s21, 1
      %p106 = scmp.ne.s32.totalorder %s101, %s103
      %p107 = scmp.eq.s32.totalorder %s21, 0
      %p108 = por %p106, %p107
      %p109 = scmp.ne.s32.totalorder %s101, %s103
      %p110 = scmp.eq.s32.totalorder %s26, 1
      %p111 = por %p109, %p110
      %p112 = scmp.ne.s32.totalorder %s103, %s104
      %p113 = scmp.eq.s32.totalorder %s26, 0
      %p114 = por %p112, %p113
      %p115 = scmp.ne.s32.totalorder %s103, %s104
      %p116 = scmp.eq.s32.totalorder %s27, 1
      %p117 = por %p115, %p116
      %p119 = scmp.ne.s32.totalorder %s104, %s118
      %p120 = scmp.eq.s32.totalorder %s27, 0
      %p121 = por %p119, %p120
      %s123 = sadd.s32 %s122, 1
      %p126 = scmp.eq.s32.totalorder %s21, 1
      %p127 = scmp.ne.s32.totalorder %s122, %s124
      %p128 = scmp.eq.s32.totalorder %s21, 0
      %p129 = por %p127, %p128
      %p130 = scmp.ne.s32.totalorder %s122, %s124
      %p131 = scmp.eq.s32.totalorder %s26, 1
      %p132 = por %p130, %p131
      %p133 = scmp.ne.s32.totalorder %s124, %s125
      %p134 = scmp.eq.s32.totalorder %s26, 0
      %p135 = por %p133, %p134
      %p136 = scmp.ne.s32.totalorder %s124, %s125
      %p137 = scmp.eq.s32.totalorder %s27, 1
      %p138 = por %p136, %p137
      %p140 = scmp.ne.s32.totalorder %s125, %s139
      %p141 = scmp.eq.s32.totalorder %s27, 0
      %p142 = por %p140, %p141
      %s144 = sadd.s32 %s143, 1
      %p147 = scmp.eq.s32.totalorder %s21, 1
      %p148 = scmp.ne.s32.totalorder %s143, %s145
      %p149 = scmp.eq.s32.totalorder %s21, 0
      %p150 = por %p148, %p149
      %p151 = scmp.ne.s32.totalorder %s143, %s145
      %p152 = scmp.eq.s32.totalorder %s26, 1
      %p153 = por %p151, %p152
      %p154 = scmp.ne.s32.totalorder %s145, %s146
      %p155 = scmp.eq.s32.totalorder %s26, 0
      %p156 = por %p154, %p155
      %p157 = scmp.ne.s32.totalorder %s145, %s146
      %p158 = scmp.eq.s32.totalorder %s27, 1
      %p159 = por %p157, %p158
      %p161 = scmp.ne.s32.totalorder %s146, %s160
      %p162 = scmp.eq.s32.totalorder %s27, 0
      %p163 = por %p161, %p162
      %s165 = sadd.s32 %s164, 1
      %p168 = scmp.eq.s32.totalorder %s21, 1
      %p169 = scmp.ne.s32.totalorder %s164, %s166
      %p170 = scmp.eq.s32.totalorder %s21, 0
      %p171 = por %p169, %p170
      %p172 = scmp.ne.s32.totalorder %s164, %s166
      %p173 = scmp.eq.s32.totalorder %s26, 1
      %p174 = por %p172, %p173
      %p175 = scmp.ne.s32.totalorder %s166, %s167
      %p176 = scmp.eq.s32.totalorder %s26, 0
      %p177 = por %p175, %p176
      %p178 = scmp.ne.s32.totalorder %s166, %s167
      %p179 = scmp.eq.s32.totalorder %s27, 1
      %p180 = por %p178, %p179
      %p182 = scmp.ne.s32.totalorder %s167, %s181
      %p183 = scmp.eq.s32.totalorder %s27, 0
      %p184 = por %p182, %p183
      %s186 = sadd.s32 %s185, 1
      %p189 = scmp.eq.s32.totalorder %s21, 1
      %p190 = scmp.ne.s32.totalorder %s185, %s187
      %p191 = scmp.eq.s32.totalorder %s21, 0
      %p192 = por %p190, %p191
      %p193 = scmp.ne.s32.totalorder %s185, %s187
      %p194 = scmp.eq.s32.totalorder %s26, 1
      %p195 = por %p193, %p194
      %p196 = scmp.ne.s32.totalorder %s187, %s188
      %p197 = scmp.eq.s32.totalorder %s26, 0
      %p198 = por %p196, %p197
      %p199 = scmp.ne.s32.totalorder %s187, %s188
      %p200 = scmp.eq.s32.totalorder %s27, 1
      %p201 = por %p199, %p200
      %p203 = scmp.ne.s32.totalorder %s188, %s202
      %p204 = scmp.eq.s32.totalorder %s27, 0
      %p205 = por %p203, %p204
      %s207 = sadd.s32 %s206, 1
      %p210 = scmp.eq.s32.totalorder %s21, 1
      %p211 = scmp.ne.s32.totalorder %s206, %s208
      %p212 = scmp.eq.s32.totalorder %s21, 0
      %p213 = por %p211, %p212
      %p214 = scmp.ne.s32.totalorder %s206, %s208
      %p215 = scmp.eq.s32.totalorder %s26, 1
      %p216 = por %p214, %p215
      %p217 = scmp.ne.s32.totalorder %s208, %s209
      %p218 = scmp.eq.s32.totalorder %s26, 0
      %p219 = por %p217, %p218
      %p220 = scmp.ne.s32.totalorder %s208, %s209
      %p221 = scmp.eq.s32.totalorder %s27, 1
      %p222 = por %p220, %p221
      %p224 = scmp.ne.s32.totalorder %s209, %s223
      %p225 = scmp.eq.s32.totalorder %s27, 0
      %p226 = por %p224, %p225
      %s228 = sadd.s32 %s227, 1
      %p231 = scmp.eq.s32.totalorder %s21, 1
      %p232 = scmp.ne.s32.totalorder %s227, %s229
      %p233 = scmp.eq.s32.totalorder %s21, 0
      %p234 = por %p232, %p233
      %p235 = scmp.ne.s32.totalorder %s227, %s229
      %p236 = scmp.eq.s32.totalorder %s26, 1
      %p237 = por %p235, %p236
      %p238 = scmp.ne.s32.totalorder %s229, %s230
      %p239 = scmp.eq.s32.totalorder %s26, 0
      %p240 = por %p238, %p239
      %p241 = scmp.ne.s32.totalorder %s229, %s230
      %p242 = scmp.eq.s32.totalorder %s27, 1
      %p243 = por %p241, %p242
      %p245 = scmp.ne.s32.totalorder %s230, %s244
      %p246 = scmp.eq.s32.totalorder %s27, 0
      %p247 = por %p245, %p246
      %s249 = sadd.s32 %s248, 1
      %p252 = scmp.eq.s32.totalorder %s21, 1
      %p253 = scmp.ne.s32.totalorder %s248, %s250
      %p254 = scmp.eq.s32.totalorder %s21, 0
      %p255 = por %p253, %p254
      %p256 = scmp.ne.s32.totalorder %s248, %s250
      %p257 = scmp.eq.s32.totalorder %s26, 1
      %p258 = por %p256, %p257
      %p259 = scmp.ne.s32.totalorder %s250, %s251
      %p260 = scmp.eq.s32.totalorder %s26, 0
      %p261 = por %p259, %p260
      %p262 = scmp.ne.s32.totalorder %s250, %s251
      %p263 = scmp.eq.s32.totalorder %s27, 1
      %p264 = por %p262, %p263
      %p266 = scmp.ne.s32.totalorder %s251, %s265
      %p267 = scmp.eq.s32.totalorder %s27, 0
      %p268 = por %p266, %p267
      %s270 = sadd.s32 %s269, 1
      %p273 = scmp.eq.s32.totalorder %s21, 1
      %p274 = scmp.ne.s32.totalorder %s269, %s271
      %p275 = scmp.eq.s32.totalorder %s21, 0
      %p276 = por %p274, %p275
      %p277 = scmp.ne.s32.totalorder %s269, %s271
      %p278 = scmp.eq.s32.totalorder %s26, 1
      %p279 = por %p277, %p278
      %p280 = scmp.ne.s32.totalorder %s271, %s272
      %p281 = scmp.eq.s32.totalorder %s26, 0
      %p282 = por %p280, %p281
      %p283 = scmp.ne.s32.totalorder %s271, %s272
      %p284 = scmp.eq.s32.totalorder %s27, 1
      %p285 = por %p283, %p284
      %p287 = scmp.ne.s32.totalorder %s272, %s286
      %p288 = scmp.eq.s32.totalorder %s27, 0
      %p289 = por %p287, %p288
      %s291 = sadd.s32 %s290, 1
      %p294 = scmp.eq.s32.totalorder %s21, 1
      %p295 = scmp.ne.s32.totalorder %s290, %s292
      %p296 = scmp.eq.s32.totalorder %s21, 0
      %p297 = por %p295, %p296
      %p298 = scmp.ne.s32.totalorder %s290, %s292
      %p299 = scmp.eq.s32.totalorder %s26, 1
      %p300 = por %p298, %p299
      %p301 = scmp.ne.s32.totalorder %s292, %s293
      %p302 = scmp.eq.s32.totalorder %s26, 0
      %p303 = por %p301, %p302
      %p304 = scmp.ne.s32.totalorder %s292, %s293
      %p305 = scmp.eq.s32.totalorder %s27, 1
      %p306 = por %p304, %p305
      %p308 = scmp.ne.s32.totalorder %s293, %s307
      %p309 = scmp.eq.s32.totalorder %s27, 0
      %p310 = por %p308, %p309
      %s311 = ssub.s32 %s28, %s40
      %p312 = scmp.eq.s32.totalorder %s311, 0
      %s314 = sadd.s32 %s313, 1
      %s315 = scalar_select %p312, %s313, %s314
      %p318 = pneg %p312
      %p319 = scmp.eq.s32.totalorder %s21, 1
      %p320 = por %p318, %p319
      %p321 = scmp.ne.s32.totalorder %s313, %s316
      %p322 = scmp.eq.s32.totalorder %s21, 0
      %p323 = por %p321, %p322
      %p324 = scmp.ne.s32.totalorder %s313, %s316
      %p325 = scmp.eq.s32.totalorder %s26, 1
      %p326 = por %p324, %p325
      %p327 = scmp.ne.s32.totalorder %s316, %s317
      %p328 = scmp.eq.s32.totalorder %s26, 0
      %p329 = por %p327, %p328
      %p330 = scmp.ne.s32.totalorder %s316, %s317
      %p331 = scmp.eq.s32.totalorder %s27, 1
      %p332 = por %p330, %p331
      %p334 = scmp.ne.s32.totalorder %s317, %s333
      %p335 = scmp.eq.s32.totalorder %s27, 0
      %p336 = por %p334, %p335
      %s337 = ssub.s32 %s28, %s40
      %p338 = scmp.eq.s32.totalorder %s337, 0
      %s340 = sadd.s32 %s339, 1
      %s341 = scalar_select %p338, %s339, %s340
      %p344 = pneg %p338
      %p345 = scmp.eq.s32.totalorder %s21, 1
      %p346 = por %p344, %p345
      %p347 = scmp.ne.s32.totalorder %s339, %s342
      %p348 = scmp.eq.s32.totalorder %s21, 0
      %p349 = por %p347, %p348
      %p350 = scmp.ne.s32.totalorder %s339, %s342
      %p351 = scmp.eq.s32.totalorder %s26, 1
      %p352 = por %p350, %p351
      %p353 = scmp.ne.s32.totalorder %s342, %s343
      %p354 = scmp.eq.s32.totalorder %s26, 0
      %p355 = por %p353, %p354
      %p356 = scmp.ne.s32.totalorder %s342, %s343
      %p357 = scmp.eq.s32.totalorder %s27, 1
      %p358 = por %p356, %p357
      %p360 = scmp.ne.s32.totalorder %s343, %s359
      %p361 = scmp.eq.s32.totalorder %s27, 0
      %p362 = por %p360, %p361
      %p363 = scmp.le.s32.totalorder 1, %s21
      %p364 = scmp.lt.s32.totalorder %s21, 3
      %p365 = pnand %p363, %p364
      %p366 = pneg %p365
      // Predicated region
      $region9: #{tpu_custom_call.1} parent=5 // pred_check
        _
      $region10: #{tpu_custom_call.1} parent=5 // pred_check_branch
        %368 = sbr.rel (%p365) target = $region12
      $region11: #{tpu_custom_call.1} parent=5 // pred_region
        %s369 = ssub.s32 %s21, 1
        // Predicated region
        $region13: #{tpu_custom_call.1} parent=11 // pred_check
          %p370 = pneg %p114
        $region14: #{tpu_custom_call.1} parent=11 // pred_check_branch
          %372 = sbr.rel (%p370) target = $region16
        $region15: #{tpu_custom_call.1} parent=11 // pred_region
          _
        $region16: #{tpu_custom_call.1} parent=11 // pred_fallthru
          _
        // Predicated region
        $region17: #{tpu_custom_call.1} parent=11 // pred_check
          %p373 = pneg %p135
        $region18: #{tpu_custom_call.1} parent=11 // pred_check_branch
          %375 = sbr.rel (%p373) target = $region20
        $region19: #{tpu_custom_call.1} parent=11 // pred_region
          _
        $region20: #{tpu_custom_call.1} parent=11 // pred_fallthru
          _
        // Predicated region
        $region21: #{tpu_custom_call.1} parent=11 // pred_check
          %p376 = pneg %p156
        $region22: #{tpu_custom_call.1} parent=11 // pred_check_branch
          %378 = sbr.rel (%p376) target = $region24
        $region23: #{tpu_custom_call.1} parent=11 // pred_region
          _
        $region24: #{tpu_custom_call.1} parent=11 // pred_fallthru
          _
        // Predicated region
        $region25: #{tpu_custom_call.1} parent=11 // pred_check
          %p379 = pneg %p177
        $region26: #{tpu_custom_call.1} parent=11 // pred_check_branch
          %381 = sbr.rel (%p379) target = $region28
        $region27: #{tpu_custom_call.1} parent=11 // pred_region
          _
        $region28: #{tpu_custom_call.1} parent=11 // pred_fallthru
          _
        // Predicated region
        $region29: #{tpu_custom_call.1} parent=11 // pred_check
          %p382 = pneg %p198
        $region30: #{tpu_custom_call.1} parent=11 // pred_check_branch
          %384 = sbr.rel (%p382) target = $region32
        $region31: #{tpu_custom_call.1} parent=11 // pred_region
          _
        $region32: #{tpu_custom_call.1} parent=11 // pred_fallthru
          _
        // Predicated region
        $region33: #{tpu_custom_call.1} parent=11 // pred_check
          %p385 = pneg %p219
        $region34: #{tpu_custom_call.1} parent=11 // pred_check_branch
          %387 = sbr.rel (%p385) target = $region36
        $region35: #{tpu_custom_call.1} parent=11 // pred_region
          _
        $region36: #{tpu_custom_call.1} parent=11 // pred_fallthru
          _
        // Predicated region
        $region37: #{tpu_custom_call.1} parent=11 // pred_check
          %p388 = pneg %p240
        $region38: #{tpu_custom_call.1} parent=11 // pred_check_branch
          %390 = sbr.rel (%p388) target = $region40
        $region39: #{tpu_custom_call.1} parent=11 // pred_region
          _
        $region40: #{tpu_custom_call.1} parent=11 // pred_fallthru
          _
        // Predicated region
        $region41: #{tpu_custom_call.1} parent=11 // pred_check
          %p391 = pneg %p261
        $region42: #{tpu_custom_call.1} parent=11 // pred_check_branch
          %393 = sbr.rel (%p391) target = $region44
        $region43: #{tpu_custom_call.1} parent=11 // pred_region
          _
        $region44: #{tpu_custom_call.1} parent=11 // pred_fallthru
          _
        // Predicated region
        $region45: #{tpu_custom_call.1} parent=11 // pred_check
          %p394 = pneg %p282
        $region46: #{tpu_custom_call.1} parent=11 // pred_check_branch
          %396 = sbr.rel (%p394) target = $region48
        $region47: #{tpu_custom_call.1} parent=11 // pred_region
          _
        $region48: #{tpu_custom_call.1} parent=11 // pred_fallthru
          _
        // Predicated region
        $region49: #{tpu_custom_call.1} parent=11 // pred_check
          %p397 = pneg %p303
        $region50: #{tpu_custom_call.1} parent=11 // pred_check_branch
          %399 = sbr.rel (%p397) target = $region52
        $region51: #{tpu_custom_call.1} parent=11 // pred_region
          _
        $region52: #{tpu_custom_call.1} parent=11 // pred_fallthru
          _
      $region12: #{tpu_custom_call.1} parent=5 // pred_fallthru
        _
      %p400 = scmp.lt.s32.totalorder %s21, 2
      // Predicated region
      $region53: #{tpu_custom_call.1} parent=5 // pred_check
        %p401 = pneg %p400
      $region54: #{tpu_custom_call.1} parent=5 // pred_check_branch
        %403 = sbr.rel (%p401) target = $region56
      $region55: #{tpu_custom_call.1} parent=5 // pred_region
        // Predicated region
        $region57: #{tpu_custom_call.1} parent=55 // pred_check
          %p404 = pneg %p57
        $region58: #{tpu_custom_call.1} parent=55 // pred_check_branch
          %406 = sbr.rel (%p404) target = $region60
        $region59: #{tpu_custom_call.1} parent=55 // pred_region
          %s407 = smul.u32 %s28, 2
          %s408 = sadd.s32 %s407, %s29
          %s409 = smul.u32 32, %s408
          %p410 = scmp.lt.s32.totalorder %s409, 63
          %s411 = scalar_select %p410, %s409, 63
          %s412 = smul.addr %s411, 8
          %s413 = scalar_lea.vmem %s0, %s412
          %s414 = smul.u32 %s28, 2
          %s415 = sadd.s32 %s414, %s29
          %s416 = smul.u32 32, %s415
        $region60: #{tpu_custom_call.1} parent=55 // pred_fallthru
          _
        // Predicated region
        $region61: #{tpu_custom_call.1} parent=55 // pred_check
          %p417 = pneg %p87
        $region62: #{tpu_custom_call.1} parent=55 // pred_check_branch
          %419 = sbr.rel (%p417) target = $region64
        $region63: #{tpu_custom_call.1} parent=55 // pred_region
          %s420 = smul.u32 %s28, 2
          %s421 = sadd.s32 %s420, %s29
          %s422 = smul.u32 32, %s421
          %p423 = scmp.lt.s32.totalorder %s422, 63
          %s424 = scalar_select %p423, %s422, 63
          %s425 = smul.addr %s424, 8
          %s426 = scalar_lea.vmem %s1, %s425
          %s427 = smul.u32 %s28, 2
          %s428 = sadd.s32 %s427, %s29
          %s429 = smul.u32 32, %s428
        $region64: #{tpu_custom_call.1} parent=55 // pred_fallthru
          _
      $region56: #{tpu_custom_call.1} parent=5 // pred_fallthru
        _
      %p430 = scmp.le.s32.totalorder 1, %s21
      %p431 = scmp.lt.s32.totalorder %s21, 3
      %p432 = pnand %p430, %p431
      %p433 = pneg %p432
      // Predicated region
      $region65: #{tpu_custom_call.1} parent=5 // pred_check
        _
      $region66: #{tpu_custom_call.1} parent=5 // pred_check_branch
        %435 = sbr.rel (%p432) target = $region68
      $region67: #{tpu_custom_call.1} parent=5 // pred_region
        %s436 = ssub.s32 %s21, 1
        %s437 = smul.u32 %s30, 2
        %s438 = sadd.s32 %s437, %s31
        %s439 = smul.u32 32, %s438
        %p440 = scmp.lt.s32.totalorder %s439, 63
        %s441 = scalar_select %p440, %s439, 63
        %s442 = smul.addr %s441, 8
        %s443 = scalar_lea.vmem %s0, %s442
        %p444 = pneg %p63
        %p445 = pneg %p60
        %s446 = smul.u32 %s30, 2
        %s447 = sadd.s32 %s446, %s31
        %s448 = smul.u32 32, %s447
        %p449 = scmp.lt.s32.totalorder %s448, 63
        %s450 = scalar_select %p449, %s448, 63
        %s451 = smul.addr %s450, 8
        %s452 = scalar_lea.vmem %s1, %s451
        %p453 = pneg %p93
        %p454 = pneg %p90
        %p455 = pneg %p114
        %p456 = pneg %p111
        %p457 = pneg %p135
        %p458 = pneg %p132
        %p459 = pneg %p156
        %p460 = pneg %p153
        %p461 = pneg %p177
        %p462 = pneg %p174
        %p463 = pneg %p198
        %p464 = pneg %p195
        %p465 = pneg %p219
        %p466 = pneg %p216
        %p467 = pneg %p240
        %p468 = pneg %p237
        %p469 = pneg %p261
        %p470 = pneg %p258
        %p471 = pneg %p282
        %p472 = pneg %p279
        %p473 = pneg %p303
        %p474 = pneg %p300
        %p475 = pneg %p329
        %p476 = pneg %p326
        %p477 = pneg %p355
        %p478 = pneg %p352
        %p479 = scmp.lt.s32.totalorder %s30, 0
        %s480 = scalar_select %p479, %s30, 0
        %s481 = smul.addr %s480, 2
        %s482 = smul.addr %s481, 8
        %s483 = scalar_lea.vmem %s13, %s482
        %s484 = smul.u32 %s30, 2
        %s485 = sadd.s32 %s484, %s31
        %s486 = smul.u32 32, %s485
        %p487 = scmp.lt.s32.totalorder %s486, 63
        %s488 = scalar_select %p487, %s486, 63
        %s489 = smul.addr %s488, 8
        %s490 = scalar_lea.vmem %s0, %s489
        %s491 = smul.u32 %s30, 2
        %s492 = sadd.s32 %s491, %s31
        %s493 = smul.u32 32, %s492
        %s494 = smul.u32 %s30, 2
        %s495 = sadd.s32 %s494, %s31
        %s496 = smul.u32 32, %s495
        %p497 = scmp.lt.s32.totalorder %s496, 63
        %s498 = scalar_select %p497, %s496, 63
        %s499 = smul.addr %s498, 8
        %s500 = scalar_lea.vmem %s1, %s499
        %s501 = smul.u32 %s30, 2
        %s502 = sadd.s32 %s501, %s31
        %s503 = smul.u32 32, %s502
        %p504 = scmp.lt.s32.totalorder %s30, 0
        %s505 = scalar_select %p504, %s30, 0
        %s506 = smul.addr %s505, 2
        %s507 = smul.addr %s506, 8
        %s508 = scalar_lea.vmem %s13, %s507
        %p509 = scmp.eq.s32.totalorder %s31, 0
        // Predicated region
        $region69: #{tpu_custom_call.1} parent=67 // pred_check
          %p510 = pneg %p509
        $region70: #{tpu_custom_call.1} parent=67 // pred_check_branch
          %512 = sbr.rel (%p510) target = $region72
        $region71: #{tpu_custom_call.1} parent=67 // pred_region
          %513 = vst [vmem:[#allocation2] sm:$0xff] 0.0
          %514 = vst [vmem:[#allocation2 + $0x8] sm:$0xff] 0.0
          %vm515 = vcmask 64512
          %516 = vst.msk [vmem:[%s508] sm:$0xff] %vm515, 0.0
          %517 = vst.msk [vmem:[%s508 + $0x8] sm:$0xff] %vm515, 0.0
        $region72: #{tpu_custom_call.1} parent=67 // pred_fallthru
          _
        %v518 = vld [vmem:[%s2] sm:$0xff]
        %v519 = vld [vmem:[%s2 + $0x8] sm:$0xff]
        %v520 = vlaneseq
        %v521 = vand.u32 %v520, 127
        %v522 = vld [vmem:[%s490] sm:$0xff]
        %v523 = vld [vmem:[%s490 + $0x8] sm:$0xff]
        %v524 = vld [vmem:[%s490 + $0x10] sm:$0xff]
        %v525 = vld [vmem:[%s490 + $0x18] sm:$0xff]
        %v526 = vld [vmem:[%s490 + $0x20] sm:$0xff]
        %v527 = vld [vmem:[%s490 + $0x28] sm:$0xff]
        %v528 = vld [vmem:[%s490 + $0x30] sm:$0xff]
        %v529 = vld [vmem:[%s490 + $0x38] sm:$0xff]
        %v530 = vld [vmem:[%s490 + $0x40] sm:$0xff]
        %v531 = vld [vmem:[%s490 + $0x48] sm:$0xff]
        %v532 = vld [vmem:[%s490 + $0x50] sm:$0xff]
        %v533 = vld [vmem:[%s490 + $0x58] sm:$0xff]
        %v534 = vld [vmem:[%s490 + $0x60] sm:$0xff]
        %v535 = vld [vmem:[%s490 + $0x68] sm:$0xff]
        %v536 = vld [vmem:[%s490 + $0x70] sm:$0xff]
        %v537 = vld [vmem:[%s490 + $0x78] sm:$0xff]
        %v538 = vld [vmem:[%s490 + $0x80] sm:$0xff]
        %v539 = vld [vmem:[%s490 + $0x88] sm:$0xff]
        %v540 = vld [vmem:[%s490 + $0x90] sm:$0xff]
        %v541 = vld [vmem:[%s490 + $0x98] sm:$0xff]
        %v542 = vld [vmem:[%s490 + $0xa0] sm:$0xff]
        %v543 = vld [vmem:[%s490 + $0xa8] sm:$0xff]
        %v544 = vld [vmem:[%s490 + $0xb0] sm:$0xff]
        %v545 = vld [vmem:[%s490 + $0xb8] sm:$0xff]
        %v546 = vld [vmem:[%s490 + $0xc0] sm:$0xff]
        %v547 = vld [vmem:[%s490 + $0xc8] sm:$0xff]
        %v548 = vld [vmem:[%s490 + $0xd0] sm:$0xff]
        %v549 = vld [vmem:[%s490 + $0xd8] sm:$0xff]
        %v550 = vld [vmem:[%s490 + $0xe0] sm:$0xff]
        %v551 = vld [vmem:[%s490 + $0xe8] sm:$0xff]
        %v552 = vld [vmem:[%s490 + $0xf0] sm:$0xff]
        %v553 = vld [vmem:[%s490 + $0xf8] sm:$0xff]
        %554 = vset.pattern.permute.xlu0 0
        %555 = vperm.xlu0 %554, %v522
        %v556 = vpop.permute.xlu0 %555
        %557 = vset.pattern.permute.xlu0 0
        %558 = vperm.xlu0 %557, %v523
        %v559 = vpop.permute.xlu0 %558
        %560 = vset.pattern.permute.xlu0 0
        %561 = vperm.xlu0 %560, %v524
        %v562 = vpop.permute.xlu0 %561
        %563 = vset.pattern.permute.xlu0 0
        %564 = vperm.xlu0 %563, %v525
        %v565 = vpop.permute.xlu0 %564
        %566 = vset.pattern.permute.xlu0 0
        %567 = vperm.xlu0 %566, %v526
        %v568 = vpop.permute.xlu0 %567
        %569 = vset.pattern.permute.xlu0 0
        %570 = vperm.xlu0 %569, %v527
        %v571 = vpop.permute.xlu0 %570
        %572 = vset.pattern.permute.xlu0 0
        %573 = vperm.xlu0 %572, %v528
        %v574 = vpop.permute.xlu0 %573
        %575 = vset.pattern.permute.xlu0 0
        %576 = vperm.xlu0 %575, %v529
        %v577 = vpop.permute.xlu0 %576
        %578 = vset.pattern.permute.xlu0 0
        %579 = vperm.xlu0 %578, %v530
        %v580 = vpop.permute.xlu0 %579
        %581 = vset.pattern.permute.xlu0 0
        %582 = vperm.xlu0 %581, %v531
        %v583 = vpop.permute.xlu0 %582
        %584 = vset.pattern.permute.xlu0 0
        %585 = vperm.xlu0 %584, %v532
        %v586 = vpop.permute.xlu0 %585
        %587 = vset.pattern.permute.xlu0 0
        %588 = vperm.xlu0 %587, %v533
        %v589 = vpop.permute.xlu0 %588
        %590 = vset.pattern.permute.xlu0 0
        %591 = vperm.xlu0 %590, %v534
        %v592 = vpop.permute.xlu0 %591
        %593 = vset.pattern.permute.xlu0 0
        %594 = vperm.xlu0 %593, %v535
        %v595 = vpop.permute.xlu0 %594
        %596 = vset.pattern.permute.xlu0 0
        %597 = vperm.xlu0 %596, %v536
        %v598 = vpop.permute.xlu0 %597
        %599 = vset.pattern.permute.xlu0 0
        %600 = vperm.xlu0 %599, %v537
        %v601 = vpop.permute.xlu0 %600
        %602 = vset.pattern.permute.xlu0 0
        %603 = vperm.xlu0 %602, %v538
        %v604 = vpop.permute.xlu0 %603
        %605 = vset.pattern.permute.xlu0 0
        %606 = vperm.xlu0 %605, %v539
        %v607 = vpop.permute.xlu0 %606
        %608 = vset.pattern.permute.xlu0 0
        %609 = vperm.xlu0 %608, %v540
        %v610 = vpop.permute.xlu0 %609
        %611 = vset.pattern.permute.xlu0 0
        %612 = vperm.xlu0 %611, %v541
        %v613 = vpop.permute.xlu0 %612
        %614 = vset.pattern.permute.xlu0 0
        %615 = vperm.xlu0 %614, %v542
        %v616 = vpop.permute.xlu0 %615
        %617 = vset.pattern.permute.xlu0 0
        %618 = vperm.xlu0 %617, %v543
        %v619 = vpop.permute.xlu0 %618
        %620 = vset.pattern.permute.xlu0 0
        %621 = vperm.xlu0 %620, %v544
        %v622 = vpop.permute.xlu0 %621
        %623 = vset.pattern.permute.xlu0 0
        %624 = vperm.xlu0 %623, %v545
        %v625 = vpop.permute.xlu0 %624
        %626 = vset.pattern.permute.xlu0 0
        %627 = vperm.xlu0 %626, %v546
        %v628 = vpop.permute.xlu0 %627
        %629 = vset.pattern.permute.xlu0 0
        %630 = vperm.xlu0 %629, %v547
        %v631 = vpop.permute.xlu0 %630
        %632 = vset.pattern.permute.xlu0 0
        %633 = vperm.xlu0 %632, %v548
        %v634 = vpop.permute.xlu0 %633
        %635 = vset.pattern.permute.xlu0 0
        %636 = vperm.xlu0 %635, %v549
        %v637 = vpop.permute.xlu0 %636
        %638 = vset.pattern.permute.xlu0 0
        %639 = vperm.xlu0 %638, %v550
        %v640 = vpop.permute.xlu0 %639
        %641 = vset.pattern.permute.xlu0 0
        %642 = vperm.xlu0 %641, %v551
        %v643 = vpop.permute.xlu0 %642
        %644 = vset.pattern.permute.xlu0 0
        %645 = vperm.xlu0 %644, %v552
        %v646 = vpop.permute.xlu0 %645
        %647 = vset.pattern.permute.xlu0 0
        %648 = vperm.xlu0 %647, %v553
        %v649 = vpop.permute.xlu0 %648
        %vm650 = vcmp.eq.s32.totalorder %v556, %v521
        %vm651 = vcmp.eq.s32.totalorder %v559, %v521
        %vm652 = vcmp.eq.s32.totalorder %v562, %v521
        %vm653 = vcmp.eq.s32.totalorder %v565, %v521
        %vm654 = vcmp.eq.s32.totalorder %v568, %v521
        %vm655 = vcmp.eq.s32.totalorder %v571, %v521
        %vm656 = vcmp.eq.s32.totalorder %v574, %v521
        %vm657 = vcmp.eq.s32.totalorder %v577, %v521
        %vm658 = vcmp.eq.s32.totalorder %v580, %v521
        %vm659 = vcmp.eq.s32.totalorder %v583, %v521
        %vm660 = vcmp.eq.s32.totalorder %v586, %v521
        %vm661 = vcmp.eq.s32.totalorder %v589, %v521
        %vm662 = vcmp.eq.s32.totalorder %v592, %v521
        %vm663 = vcmp.eq.s32.totalorder %v595, %v521
        %vm664 = vcmp.eq.s32.totalorder %v598, %v521
        %vm665 = vcmp.eq.s32.totalorder %v601, %v521
        %vm666 = vcmp.eq.s32.totalorder %v604, %v521
        %vm667 = vcmp.eq.s32.totalorder %v607, %v521
        %vm668 = vcmp.eq.s32.totalorder %v610, %v521
        %vm669 = vcmp.eq.s32.totalorder %v613, %v521
        %vm670 = vcmp.eq.s32.totalorder %v616, %v521
        %vm671 = vcmp.eq.s32.totalorder %v619, %v521
        %vm672 = vcmp.eq.s32.totalorder %v622, %v521
        %vm673 = vcmp.eq.s32.totalorder %v625, %v521
        %vm674 = vcmp.eq.s32.totalorder %v628, %v521
        %vm675 = vcmp.eq.s32.totalorder %v631, %v521
        %vm676 = vcmp.eq.s32.totalorder %v634, %v521
        %vm677 = vcmp.eq.s32.totalorder %v637, %v521
        %vm678 = vcmp.eq.s32.totalorder %v640, %v521
        %vm679 = vcmp.eq.s32.totalorder %v643, %v521
        %vm680 = vcmp.eq.s32.totalorder %v646, %v521
        %vm681 = vcmp.eq.s32.totalorder %v649, %v521
        %v682 = vsel %vm650, 1, 0
        %v683 = vsel %vm651, 1, 0
        %v684 = vsel %vm652, 1, 0
        %v685 = vsel %vm653, 1, 0
        %v686 = vsel %vm654, 1, 0
        %v687 = vsel %vm655, 1, 0
        %v688 = vsel %vm656, 1, 0
        %v689 = vsel %vm657, 1, 0
        %v690 = vsel %vm658, 1, 0
        %v691 = vsel %vm659, 1, 0
        %v692 = vsel %vm660, 1, 0
        %v693 = vsel %vm661, 1, 0
        %v694 = vsel %vm662, 1, 0
        %v695 = vsel %vm663, 1, 0
        %v696 = vsel %vm664, 1, 0
        %v697 = vsel %vm665, 1, 0
        %v698 = vsel %vm666, 1, 0
        %v699 = vsel %vm667, 1, 0
        %v700 = vsel %vm668, 1, 0
        %v701 = vsel %vm669, 1, 0
        %v702 = vsel %vm670, 1, 0
        %v703 = vsel %vm671, 1, 0
        %v704 = vsel %vm672, 1, 0
        %v705 = vsel %vm673, 1, 0
        %v706 = vsel %vm674, 1, 0
        %v707 = vsel %vm675, 1, 0
        %v708 = vsel %vm676, 1, 0
        %v709 = vsel %vm677, 1, 0
        %v710 = vsel %vm678, 1, 0
        %v711 = vsel %vm679, 1, 0
        %v712 = vsel %vm680, 1, 0
        %v713 = vsel %vm681, 1, 0
        %v714 = vcvt.s32.f32 %v682
        %v715 = vcvt.s32.f32 %v683
        %v716 = vcvt.s32.f32 %v684
        %v717 = vcvt.s32.f32 %v685
        %v718 = vcvt.s32.f32 %v686
        %v719 = vcvt.s32.f32 %v687
        %v720 = vcvt.s32.f32 %v688
        %v721 = vcvt.s32.f32 %v689
        %v722 = vcvt.s32.f32 %v690
        %v723 = vcvt.s32.f32 %v691
        %v724 = vcvt.s32.f32 %v692
        %v725 = vcvt.s32.f32 %v693
        %v726 = vcvt.s32.f32 %v694
        %v727 = vcvt.s32.f32 %v695
        %v728 = vcvt.s32.f32 %v696
        %v729 = vcvt.s32.f32 %v697
        %v730 = vcvt.s32.f32 %v698
        %v731 = vcvt.s32.f32 %v699
        %v732 = vcvt.s32.f32 %v700
        %v733 = vcvt.s32.f32 %v701
        %v734 = vcvt.s32.f32 %v702
        %v735 = vcvt.s32.f32 %v703
        %v736 = vcvt.s32.f32 %v704
        %v737 = vcvt.s32.f32 %v705
        %v738 = vcvt.s32.f32 %v706
        %v739 = vcvt.s32.f32 %v707
        %v740 = vcvt.s32.f32 %v708
        %v741 = vcvt.s32.f32 %v709
        %v742 = vcvt.s32.f32 %v710
        %v743 = vcvt.s32.f32 %v711
        %v744 = vcvt.s32.f32 %v712
        %v745 = vcvt.s32.f32 %v713
        %v746 = vld [vmem:[%s500] sm:$0xff]
        %v747 = vld [vmem:[%s500 + $0x8] sm:$0xff]
        %v748 = vld [vmem:[%s500 + $0x10] sm:$0xff]
        %v749 = vld [vmem:[%s500 + $0x18] sm:$0xff]
        %v750 = vld [vmem:[%s500 + $0x20] sm:$0xff]
        %v751 = vld [vmem:[%s500 + $0x28] sm:$0xff]
        %v752 = vld [vmem:[%s500 + $0x30] sm:$0xff]
        %v753 = vld [vmem:[%s500 + $0x38] sm:$0xff]
        %v754 = vld [vmem:[%s500 + $0x40] sm:$0xff]
        %v755 = vld [vmem:[%s500 + $0x48] sm:$0xff]
        %v756 = vld [vmem:[%s500 + $0x50] sm:$0xff]
        %v757 = vld [vmem:[%s500 + $0x58] sm:$0xff]
        %v758 = vld [vmem:[%s500 + $0x60] sm:$0xff]
        %v759 = vld [vmem:[%s500 + $0x68] sm:$0xff]
        %v760 = vld [vmem:[%s500 + $0x70] sm:$0xff]
        %v761 = vld [vmem:[%s500 + $0x78] sm:$0xff]
        %v762 = vld [vmem:[%s500 + $0x80] sm:$0xff]
        %v763 = vld [vmem:[%s500 + $0x88] sm:$0xff]
        %v764 = vld [vmem:[%s500 + $0x90] sm:$0xff]
        %v765 = vld [vmem:[%s500 + $0x98] sm:$0xff]
        %v766 = vld [vmem:[%s500 + $0xa0] sm:$0xff]
        %v767 = vld [vmem:[%s500 + $0xa8] sm:$0xff]
        %v768 = vld [vmem:[%s500 + $0xb0] sm:$0xff]
        %v769 = vld [vmem:[%s500 + $0xb8] sm:$0xff]
        %v770 = vld [vmem:[%s500 + $0xc0] sm:$0xff]
        %v771 = vld [vmem:[%s500 + $0xc8] sm:$0xff]
        %v772 = vld [vmem:[%s500 + $0xd0] sm:$0xff]
        %v773 = vld [vmem:[%s500 + $0xd8] sm:$0xff]
        %v774 = vld [vmem:[%s500 + $0xe0] sm:$0xff]
        %v775 = vld [vmem:[%s500 + $0xe8] sm:$0xff]
        %v776 = vld [vmem:[%s500 + $0xf0] sm:$0xff]
        %v777 = vld [vmem:[%s500 + $0xf8] sm:$0xff]
        %778 = vset.pattern.permute.xlu0 0
        %779 = vperm.xlu0 %778, %v746
        %v780 = vpop.permute.xlu0 %779
        %781 = vset.pattern.permute.xlu0 0
        %782 = vperm.xlu0 %781, %v747
        %v783 = vpop.permute.xlu0 %782
        %784 = vset.pattern.permute.xlu0 0
        %785 = vperm.xlu0 %784, %v748
        %v786 = vpop.permute.xlu0 %785
        %787 = vset.pattern.permute.xlu0 0
        %788 = vperm.xlu0 %787, %v749
        %v789 = vpop.permute.xlu0 %788
        %790 = vset.pattern.permute.xlu0 0
        %791 = vperm.xlu0 %790, %v750
        %v792 = vpop.permute.xlu0 %791
        %793 = vset.pattern.permute.xlu0 0
        %794 = vperm.xlu0 %793, %v751
        %v795 = vpop.permute.xlu0 %794
        %796 = vset.pattern.permute.xlu0 0
        %797 = vperm.xlu0 %796, %v752
        %v798 = vpop.permute.xlu0 %797
        %799 = vset.pattern.permute.xlu0 0
        %800 = vperm.xlu0 %799, %v753
        %v801 = vpop.permute.xlu0 %800
        %802 = vset.pattern.permute.xlu0 0
        %803 = vperm.xlu0 %802, %v754
        %v804 = vpop.permute.xlu0 %803
        %805 = vset.pattern.permute.xlu0 0
        %806 = vperm.xlu0 %805, %v755
        %v807 = vpop.permute.xlu0 %806
        %808 = vset.pattern.permute.xlu0 0
        %809 = vperm.xlu0 %808, %v756
        %v810 = vpop.permute.xlu0 %809
        %811 = vset.pattern.permute.xlu0 0
        %812 = vperm.xlu0 %811, %v757
        %v813 = vpop.permute.xlu0 %812
        %814 = vset.pattern.permute.xlu0 0
        %815 = vperm.xlu0 %814, %v758
        %v816 = vpop.permute.xlu0 %815
        %817 = vset.pattern.permute.xlu0 0
        %818 = vperm.xlu0 %817, %v759
        %v819 = vpop.permute.xlu0 %818
        %820 = vset.pattern.permute.xlu0 0
        %821 = vperm.xlu0 %820, %v760
        %v822 = vpop.permute.xlu0 %821
        %823 = vset.pattern.permute.xlu0 0
        %824 = vperm.xlu0 %823, %v761
        %v825 = vpop.permute.xlu0 %824
        %826 = vset.pattern.permute.xlu0 0
        %827 = vperm.xlu0 %826, %v762
        %v828 = vpop.permute.xlu0 %827
        %829 = vset.pattern.permute.xlu0 0
        %830 = vperm.xlu0 %829, %v763
        %v831 = vpop.permute.xlu0 %830
        %832 = vset.pattern.permute.xlu0 0
        %833 = vperm.xlu0 %832, %v764
        %v834 = vpop.permute.xlu0 %833
        %835 = vset.pattern.permute.xlu0 0
        %836 = vperm.xlu0 %835, %v765
        %v837 = vpop.permute.xlu0 %836
        %838 = vset.pattern.permute.xlu0 0
        %839 = vperm.xlu0 %838, %v766
        %v840 = vpop.permute.xlu0 %839
        %841 = vset.pattern.permute.xlu0 0
        %842 = vperm.xlu0 %841, %v767
        %v843 = vpop.permute.xlu0 %842
        %844 = vset.pattern.permute.xlu0 0
        %845 = vperm.xlu0 %844, %v768
        %v846 = vpop.permute.xlu0 %845
        %847 = vset.pattern.permute.xlu0 0
        %848 = vperm.xlu0 %847, %v769
        %v849 = vpop.permute.xlu0 %848
        %850 = vset.pattern.permute.xlu0 0
        %851 = vperm.xlu0 %850, %v770
        %v852 = vpop.permute.xlu0 %851
        %853 = vset.pattern.permute.xlu0 0
        %854 = vperm.xlu0 %853, %v771
        %v855 = vpop.permute.xlu0 %854
        %856 = vset.pattern.permute.xlu0 0
        %857 = vperm.xlu0 %856, %v772
        %v858 = vpop.permute.xlu0 %857
        %859 = vset.pattern.permute.xlu0 0
        %860 = vperm.xlu0 %859, %v773
        %v861 = vpop.permute.xlu0 %860
        %862 = vset.pattern.permute.xlu0 0
        %863 = vperm.xlu0 %862, %v774
        %v864 = vpop.permute.xlu0 %863
        %865 = vset.pattern.permute.xlu0 0
        %866 = vperm.xlu0 %865, %v775
        %v867 = vpop.permute.xlu0 %866
        %868 = vset.pattern.permute.xlu0 0
        %869 = vperm.xlu0 %868, %v776
        %v870 = vpop.permute.xlu0 %869
        %871 = vset.pattern.permute.xlu0 0
        %872 = vperm.xlu0 %871, %v777
        %v873 = vpop.permute.xlu0 %872
        %vm874 = vcmp.eq.s32.totalorder %v780, %v521
        %vm875 = vcmp.eq.s32.totalorder %v783, %v521
        %vm876 = vcmp.eq.s32.totalorder %v786, %v521
        %vm877 = vcmp.eq.s32.totalorder %v789, %v521
        %vm878 = vcmp.eq.s32.totalorder %v792, %v521
        %vm879 = vcmp.eq.s32.totalorder %v795, %v521
        %vm880 = vcmp.eq.s32.totalorder %v798, %v521
        %vm881 = vcmp.eq.s32.totalorder %v801, %v521
        %vm882 = vcmp.eq.s32.totalorder %v804, %v521
        %vm883 = vcmp.eq.s32.totalorder %v807, %v521
        %vm884 = vcmp.eq.s32.totalorder %v810, %v521
        %vm885 = vcmp.eq.s32.totalorder %v813, %v521
        %vm886 = vcmp.eq.s32.totalorder %v816, %v521
        %vm887 = vcmp.eq.s32.totalorder %v819, %v521
        %vm888 = vcmp.eq.s32.totalorder %v822, %v521
        %vm889 = vcmp.eq.s32.totalorder %v825, %v521
        %vm890 = vcmp.eq.s32.totalorder %v828, %v521
        %vm891 = vcmp.eq.s32.totalorder %v831, %v521
        %vm892 = vcmp.eq.s32.totalorder %v834, %v521
        %vm893 = vcmp.eq.s32.totalorder %v837, %v521
        %vm894 = vcmp.eq.s32.totalorder %v840, %v521
        %vm895 = vcmp.eq.s32.totalorder %v843, %v521
        %vm896 = vcmp.eq.s32.totalorder %v846, %v521
        %vm897 = vcmp.eq.s32.totalorder %v849, %v521
        %vm898 = vcmp.eq.s32.totalorder %v852, %v521
        %vm899 = vcmp.eq.s32.totalorder %v855, %v521
        %vm900 = vcmp.eq.s32.totalorder %v858, %v521
        %vm901 = vcmp.eq.s32.totalorder %v861, %v521
        %vm902 = vcmp.eq.s32.totalorder %v864, %v521
        %vm903 = vcmp.eq.s32.totalorder %v867, %v521
        %vm904 = vcmp.eq.s32.totalorder %v870, %v521
        %vm905 = vcmp.eq.s32.totalorder %v873, %v521
        %v906 = vsel %vm874, 1, 0
        %v907 = vsel %vm875, 1, 0
        %v908 = vsel %vm876, 1, 0
        %v909 = vsel %vm877, 1, 0
        %v910 = vsel %vm878, 1, 0
        %v911 = vsel %vm879, 1, 0
        %v912 = vsel %vm880, 1, 0
        %v913 = vsel %vm881, 1, 0
        %v914 = vsel %vm882, 1, 0
        %v915 = vsel %vm883, 1, 0
        %v916 = vsel %vm884, 1, 0
        %v917 = vsel %vm885, 1, 0
        %v918 = vsel %vm886, 1, 0
        %v919 = vsel %vm887, 1, 0
        %v920 = vsel %vm888, 1, 0
        %v921 = vsel %vm889, 1, 0
        %v922 = vsel %vm890, 1, 0
        %v923 = vsel %vm891, 1, 0
        %v924 = vsel %vm892, 1, 0
        %v925 = vsel %vm893, 1, 0
        %v926 = vsel %vm894, 1, 0
        %v927 = vsel %vm895, 1, 0
        %v928 = vsel %vm896, 1, 0
        %v929 = vsel %vm897, 1, 0
        %v930 = vsel %vm898, 1, 0
        %v931 = vsel %vm899, 1, 0
        %v932 = vsel %vm900, 1, 0
        %v933 = vsel %vm901, 1, 0
        %v934 = vsel %vm902, 1, 0
        %v935 = vsel %vm903, 1, 0
        %v936 = vsel %vm904, 1, 0
        %v937 = vsel %vm905, 1, 0
        %v938 = vcvt.s32.f32 %v906
        %v939 = vcvt.s32.f32 %v907
        %v940 = vcvt.s32.f32 %v908
        %v941 = vcvt.s32.f32 %v909
        %v942 = vcvt.s32.f32 %v910
        %v943 = vcvt.s32.f32 %v911
        %v944 = vcvt.s32.f32 %v912
        %v945 = vcvt.s32.f32 %v913
        %v946 = vcvt.s32.f32 %v914
        %v947 = vcvt.s32.f32 %v915
        %v948 = vcvt.s32.f32 %v916
        %v949 = vcvt.s32.f32 %v917
        %v950 = vcvt.s32.f32 %v918
        %v951 = vcvt.s32.f32 %v919
        %v952 = vcvt.s32.f32 %v920
        %v953 = vcvt.s32.f32 %v921
        %v954 = vcvt.s32.f32 %v922
        %v955 = vcvt.s32.f32 %v923
        %v956 = vcvt.s32.f32 %v924
        %v957 = vcvt.s32.f32 %v925
        %v958 = vcvt.s32.f32 %v926
        %v959 = vcvt.s32.f32 %v927
        %v960 = vcvt.s32.f32 %v928
        %v961 = vcvt.s32.f32 %v929
        %v962 = vcvt.s32.f32 %v930
        %v963 = vcvt.s32.f32 %v931
        %v964 = vcvt.s32.f32 %v932
        %v965 = vcvt.s32.f32 %v933
        %v966 = vcvt.s32.f32 %v934
        %v967 = vcvt.s32.f32 %v935
        %v968 = vcvt.s32.f32 %v936
        %v969 = vcvt.s32.f32 %v937
        %vm970 = vcmask 130048
        %v972 = vsel %vm970, %v714, 0
        %v975 = vsel %vm970, %v715, 0
        %v978 = vsel %vm970, %v716, 0
        %v981 = vsel %vm970, %v717, 0
        %v984 = vsel %vm970, %v718, 0
        %v987 = vsel %vm970, %v719, 0
        %v990 = vsel %vm970, %v720, 0
        %v993 = vsel %vm970, %v721, 0
        %v996 = vsel %vm970, %v722, 0
        %v999 = vsel %vm970, %v723, 0
        %v1002 = vsel %vm970, %v724, 0
        %v1005 = vsel %vm970, %v725, 0
        %v1008 = vsel %vm970, %v726, 0
        %v1011 = vsel %vm970, %v727, 0
        %v1014 = vsel %vm970, %v728, 0
        %v1017 = vsel %vm970, %v729, 0
        %v1020 = vsel %vm970, %v730, 0
        %v1023 = vsel %vm970, %v731, 0
        %v1026 = vsel %vm970, %v732, 0
        %v1029 = vsel %vm970, %v733, 0
        %v1032 = vsel %vm970, %v734, 0
        %v1035 = vsel %vm970, %v735, 0
        %v1038 = vsel %vm970, %v736, 0
        %v1041 = vsel %vm970, %v737, 0
        %v1044 = vsel %vm970, %v738, 0
        %v1047 = vsel %vm970, %v739, 0
        %v1050 = vsel %vm970, %v740, 0
        %v1053 = vsel %vm970, %v741, 0
        %v1056 = vsel %vm970, %v742, 0
        %v1059 = vsel %vm970, %v743, 0
        %v1062 = vsel %vm970, %v744, 0
        %v1065 = vsel %vm970, %v745, 0
        %1067 = vmatpush.msra.mxu0 0.0
        %1068 = vmatpush.msra.mxu0 0.0
        %1069 = vmatpush.msra.mxu0 0.0
        %1070 = vmatpush.msra.mxu0 0.0
        %1071 = vmatpush.msra.mxu0 0.0
        %1072 = vmatpush.msra.mxu0 0.0
        %1073 = vmatpush.msra.mxu0 0.0
        %1074 = vmatpush.msra.mxu0 0.0
        %1075 = vmatpush.msra.mxu0 0.0
        %1076 = vmatpush.msra.mxu0 0.0
        %1077 = vmatpush.msra.mxu0 0.0
        %1078 = vmatpush.msra.mxu0 0.0
        %1079 = vmatpush.msra.mxu0 0.0
        %1080 = vmatpush.msra.mxu0 0.0
        %1081 = vmatpush.msra.mxu0 %v519
        %1082 = vmatpush.msra.mxu0 %v518
        %1083 = vmatmul.f32.gmra.mxu0 %v972
        %v1084 = vpop.f32.mrf.mxu0
        %v1085 = vadd.f32 0.0, %v1084
        %1086 = vmatmul.f32.gmra.mxu0 %v975
        %v1087 = vpop.f32.mrf.mxu0
        %v1088 = vadd.f32 0.0, %v1087
        %1089 = vmatmul.f32.gmra.mxu0 %v978
        %v1090 = vpop.f32.mrf.mxu0
        %v1091 = vadd.f32 0.0, %v1090
        %1092 = vmatmul.f32.gmra.mxu0 %v981
        %v1093 = vpop.f32.mrf.mxu0
        %v1094 = vadd.f32 0.0, %v1093
        %1095 = vmatmul.f32.gmra.mxu0 %v984
        %v1096 = vpop.f32.mrf.mxu0
        %v1097 = vadd.f32 0.0, %v1096
        %1098 = vmatmul.f32.gmra.mxu0 %v987
        %v1099 = vpop.f32.mrf.mxu0
        %v1100 = vadd.f32 0.0, %v1099
        %1101 = vmatmul.f32.gmra.mxu0 %v990
        %v1102 = vpop.f32.mrf.mxu0
        %v1103 = vadd.f32 0.0, %v1102
        %1104 = vmatmul.f32.gmra.mxu0 %v993
        %v1105 = vpop.f32.mrf.mxu0
        %v1106 = vadd.f32 0.0, %v1105
        %1107 = vmatmul.f32.gmra.mxu0 %v996
        %v1108 = vpop.f32.mrf.mxu0
        %v1109 = vadd.f32 0.0, %v1108
        %1110 = vmatmul.f32.gmra.mxu0 %v999
        %v1111 = vpop.f32.mrf.mxu0
        %v1112 = vadd.f32 0.0, %v1111
        %1113 = vmatmul.f32.gmra.mxu0 %v1002
        %v1114 = vpop.f32.mrf.mxu0
        %v1115 = vadd.f32 0.0, %v1114
        %1116 = vmatmul.f32.gmra.mxu0 %v1005
        %v1117 = vpop.f32.mrf.mxu0
        %v1118 = vadd.f32 0.0, %v1117
        %1119 = vmatmul.f32.gmra.mxu0 %v1008
        %v1120 = vpop.f32.mrf.mxu0
        %v1121 = vadd.f32 0.0, %v1120
        %1122 = vmatmul.f32.gmra.mxu0 %v1011
        %v1123 = vpop.f32.mrf.mxu0
        %v1124 = vadd.f32 0.0, %v1123
        %1125 = vmatmul.f32.gmra.mxu0 %v1014
        %v1126 = vpop.f32.mrf.mxu0
        %v1127 = vadd.f32 0.0, %v1126
        %1128 = vmatmul.f32.gmra.mxu0 %v1017
        %v1129 = vpop.f32.mrf.mxu0
        %v1130 = vadd.f32 0.0, %v1129
        %1131 = vmatmul.f32.gmra.mxu0 %v1020
        %v1132 = vpop.f32.mrf.mxu0
        %v1133 = vadd.f32 0.0, %v1132
        %1134 = vmatmul.f32.gmra.mxu0 %v1023
        %v1135 = vpop.f32.mrf.mxu0
        %v1136 = vadd.f32 0.0, %v1135
        %1137 = vmatmul.f32.gmra.mxu0 %v1026
        %v1138 = vpop.f32.mrf.mxu0
        %v1139 = vadd.f32 0.0, %v1138
        %1140 = vmatmul.f32.gmra.mxu0 %v1029
        %v1141 = vpop.f32.mrf.mxu0
        %v1142 = vadd.f32 0.0, %v1141
        %1143 = vmatmul.f32.gmra.mxu0 %v1032
        %v1144 = vpop.f32.mrf.mxu0
        %v1145 = vadd.f32 0.0, %v1144
        %1146 = vmatmul.f32.gmra.mxu0 %v1035
        %v1147 = vpop.f32.mrf.mxu0
        %v1148 = vadd.f32 0.0, %v1147
        %1149 = vmatmul.f32.gmra.mxu0 %v1038
        %v1150 = vpop.f32.mrf.mxu0
        %v1151 = vadd.f32 0.0, %v1150
        %1152 = vmatmul.f32.gmra.mxu0 %v1041
        %v1153 = vpop.f32.mrf.mxu0
        %v1154 = vadd.f32 0.0, %v1153
        %1155 = vmatmul.f32.gmra.mxu0 %v1044
        %v1156 = vpop.f32.mrf.mxu0
        %v1157 = vadd.f32 0.0, %v1156
        %1158 = vmatmul.f32.gmra.mxu0 %v1047
        %v1159 = vpop.f32.mrf.mxu0
        %v1160 = vadd.f32 0.0, %v1159
        %1161 = vmatmul.f32.gmra.mxu0 %v1050
        %v1162 = vpop.f32.mrf.mxu0
        %v1163 = vadd.f32 0.0, %v1162
        %1164 = vmatmul.f32.gmra.mxu0 %v1053
        %v1165 = vpop.f32.mrf.mxu0
        %v1166 = vadd.f32 0.0, %v1165
        %1167 = vmatmul.f32.gmra.mxu0 %v1056
        %v1168 = vpop.f32.mrf.mxu0
        %v1169 = vadd.f32 0.0, %v1168
        %1170 = vmatmul.f32.gmra.mxu0 %v1059
        %v1171 = vpop.f32.mrf.mxu0
        %v1172 = vadd.f32 0.0, %v1171
        %1173 = vmatmul.f32.gmra.mxu0 %v1062
        %v1174 = vpop.f32.mrf.mxu0
        %v1175 = vadd.f32 0.0, %v1174
        %1176 = vmatmul.f32.gmra.mxu0 %v1065
        %v1177 = vpop.f32.mrf.mxu0
        %v1178 = vadd.f32 0.0, %v1177
        %1179 = vdwg.mxu0
        %v1181 = vsel %vm970, %v938, 0
        %v1184 = vsel %vm970, %v939, 0
        %v1187 = vsel %vm970, %v940, 0
        %v1190 = vsel %vm970, %v941, 0
        %v1193 = vsel %vm970, %v942, 0
        %v1196 = vsel %vm970, %v943, 0
        %v1199 = vsel %vm970, %v944, 0
        %v1202 = vsel %vm970, %v945, 0
        %v1205 = vsel %vm970, %v946, 0
        %v1208 = vsel %vm970, %v947, 0
        %v1211 = vsel %vm970, %v948, 0
        %v1214 = vsel %vm970, %v949, 0
        %v1217 = vsel %vm970, %v950, 0
        %v1220 = vsel %vm970, %v951, 0
        %v1223 = vsel %vm970, %v952, 0
        %v1226 = vsel %vm970, %v953, 0
        %v1229 = vsel %vm970, %v954, 0
        %v1232 = vsel %vm970, %v955, 0
        %v1235 = vsel %vm970, %v956, 0
        %v1238 = vsel %vm970, %v957, 0
        %v1241 = vsel %vm970, %v958, 0
        %v1244 = vsel %vm970, %v959, 0
        %v1247 = vsel %vm970, %v960, 0
        %v1250 = vsel %vm970, %v961, 0
        %v1253 = vsel %vm970, %v962, 0
        %v1256 = vsel %vm970, %v963, 0
        %v1259 = vsel %vm970, %v964, 0
        %v1262 = vsel %vm970, %v965, 0
        %v1265 = vsel %vm970, %v966, 0
        %v1268 = vsel %vm970, %v967, 0
        %v1271 = vsel %vm970, %v968, 0
        %v1274 = vsel %vm970, %v969, 0
        %1276 = vmatpush.msra.mxu0 0.0
        %1277 = vmatpush.msra.mxu0 0.0
        %1278 = vmatpush.msra.mxu0 0.0
        %1279 = vmatpush.msra.mxu0 0.0
        %1280 = vmatpush.msra.mxu0 0.0
        %1281 = vmatpush.msra.mxu0 0.0
        %1282 = vmatpush.msra.mxu0 0.0
        %1283 = vmatpush.msra.mxu0 0.0
        %1284 = vmatpush.msra.mxu0 0.0
        %1285 = vmatpush.msra.mxu0 0.0
        %1286 = vmatpush.msra.mxu0 0.0
        %1287 = vmatpush.msra.mxu0 0.0
        %1288 = vmatpush.msra.mxu0 0.0
        %1289 = vmatpush.msra.mxu0 0.0
        %1290 = vmatpush.msra.mxu0 %v519
        %1291 = vmatpush.msra.mxu0 %v518
        %1292 = vmatmul.f32.gmra.mxu0 %v1181
        %v1293 = vpop.f32.mrf.mxu0
        %v1294 = vadd.f32 0.0, %v1293
        %1295 = vmatmul.f32.gmra.mxu0 %v1184
        %v1296 = vpop.f32.mrf.mxu0
        %v1297 = vadd.f32 0.0, %v1296
        %1298 = vmatmul.f32.gmra.mxu0 %v1187
        %v1299 = vpop.f32.mrf.mxu0
        %v1300 = vadd.f32 0.0, %v1299
        %1301 = vmatmul.f32.gmra.mxu0 %v1190
        %v1302 = vpop.f32.mrf.mxu0
        %v1303 = vadd.f32 0.0, %v1302
        %1304 = vmatmul.f32.gmra.mxu0 %v1193
        %v1305 = vpop.f32.mrf.mxu0
        %v1306 = vadd.f32 0.0, %v1305
        %1307 = vmatmul.f32.gmra.mxu0 %v1196
        %v1308 = vpop.f32.mrf.mxu0
        %v1309 = vadd.f32 0.0, %v1308
        %1310 = vmatmul.f32.gmra.mxu0 %v1199
        %v1311 = vpop.f32.mrf.mxu0
        %v1312 = vadd.f32 0.0, %v1311
        %1313 = vmatmul.f32.gmra.mxu0 %v1202
        %v1314 = vpop.f32.mrf.mxu0
        %v1315 = vadd.f32 0.0, %v1314
        %1316 = vmatmul.f32.gmra.mxu0 %v1205
        %v1317 = vpop.f32.mrf.mxu0
        %v1318 = vadd.f32 0.0, %v1317
        %1319 = vmatmul.f32.gmra.mxu0 %v1208
        %v1320 = vpop.f32.mrf.mxu0
        %v1321 = vadd.f32 0.0, %v1320
        %1322 = vmatmul.f32.gmra.mxu0 %v1211
        %v1323 = vpop.f32.mrf.mxu0
        %v1324 = vadd.f32 0.0, %v1323
        %1325 = vmatmul.f32.gmra.mxu0 %v1214
        %v1326 = vpop.f32.mrf.mxu0
        %v1327 = vadd.f32 0.0, %v1326
        %1328 = vmatmul.f32.gmra.mxu0 %v1217
        %v1329 = vpop.f32.mrf.mxu0
        %v1330 = vadd.f32 0.0, %v1329
        %1331 = vmatmul.f32.gmra.mxu0 %v1220
        %v1332 = vpop.f32.mrf.mxu0
        %v1333 = vadd.f32 0.0, %v1332
        %1334 = vmatmul.f32.gmra.mxu0 %v1223
        %v1335 = vpop.f32.mrf.mxu0
        %v1336 = vadd.f32 0.0, %v1335
        %1337 = vmatmul.f32.gmra.mxu0 %v1226
        %v1338 = vpop.f32.mrf.mxu0
        %v1339 = vadd.f32 0.0, %v1338
        %1340 = vmatmul.f32.gmra.mxu0 %v1229
        %v1341 = vpop.f32.mrf.mxu0
        %v1342 = vadd.f32 0.0, %v1341
        %1343 = vmatmul.f32.gmra.mxu0 %v1232
        %v1344 = vpop.f32.mrf.mxu0
        %v1345 = vadd.f32 0.0, %v1344
        %1346 = vmatmul.f32.gmra.mxu0 %v1235
        %v1347 = vpop.f32.mrf.mxu0
        %v1348 = vadd.f32 0.0, %v1347
        %1349 = vmatmul.f32.gmra.mxu0 %v1238
        %v1350 = vpop.f32.mrf.mxu0
        %v1351 = vadd.f32 0.0, %v1350
        %1352 = vmatmul.f32.gmra.mxu0 %v1241
        %v1353 = vpop.f32.mrf.mxu0
        %v1354 = vadd.f32 0.0, %v1353
        %1355 = vmatmul.f32.gmra.mxu0 %v1244
        %v1356 = vpop.f32.mrf.mxu0
        %v1357 = vadd.f32 0.0, %v1356
        %1358 = vmatmul.f32.gmra.mxu0 %v1247
        %v1359 = vpop.f32.mrf.mxu0
        %v1360 = vadd.f32 0.0, %v1359
        %1361 = vmatmul.f32.gmra.mxu0 %v1250
        %v1362 = vpop.f32.mrf.mxu0
        %v1363 = vadd.f32 0.0, %v1362
        %1364 = vmatmul.f32.gmra.mxu0 %v1253
        %v1365 = vpop.f32.mrf.mxu0
        %v1366 = vadd.f32 0.0, %v1365
        %1367 = vmatmul.f32.gmra.mxu0 %v1256
        %v1368 = vpop.f32.mrf.mxu0
        %v1369 = vadd.f32 0.0, %v1368
        %1370 = vmatmul.f32.gmra.mxu0 %v1259
        %v1371 = vpop.f32.mrf.mxu0
        %v1372 = vadd.f32 0.0, %v1371
        %1373 = vmatmul.f32.gmra.mxu0 %v1262
        %v1374 = vpop.f32.mrf.mxu0
        %v1375 = vadd.f32 0.0, %v1374
        %1376 = vmatmul.f32.gmra.mxu0 %v1265
        %v1377 = vpop.f32.mrf.mxu0
        %v1378 = vadd.f32 0.0, %v1377
        %1379 = vmatmul.f32.gmra.mxu0 %v1268
        %v1380 = vpop.f32.mrf.mxu0
        %v1381 = vadd.f32 0.0, %v1380
        %1382 = vmatmul.f32.gmra.mxu0 %v1271
        %v1383 = vpop.f32.mrf.mxu0
        %v1384 = vadd.f32 0.0, %v1383
        %1385 = vmatmul.f32.gmra.mxu0 %v1274
        %v1386 = vpop.f32.mrf.mxu0
        %v1387 = vadd.f32 0.0, %v1386
        %1388 = vdwg.mxu0
        %v1389 = vsub.f32 %v1085, %v1294
        %v1390 = vsub.f32 %v1088, %v1297
        %v1391 = vsub.f32 %v1091, %v1300
        %v1392 = vsub.f32 %v1094, %v1303
        %v1393 = vsub.f32 %v1097, %v1306
        %v1394 = vsub.f32 %v1100, %v1309
        %v1395 = vsub.f32 %v1103, %v1312
        %v1396 = vsub.f32 %v1106, %v1315
        %v1397 = vsub.f32 %v1109, %v1318
        %v1398 = vsub.f32 %v1112, %v1321
        %v1399 = vsub.f32 %v1115, %v1324
        %v1400 = vsub.f32 %v1118, %v1327
        %v1401 = vsub.f32 %v1121, %v1330
        %v1402 = vsub.f32 %v1124, %v1333
        %v1403 = vsub.f32 %v1127, %v1336
        %v1404 = vsub.f32 %v1130, %v1339
        %v1405 = vsub.f32 %v1133, %v1342
        %v1406 = vsub.f32 %v1136, %v1345
        %v1407 = vsub.f32 %v1139, %v1348
        %v1408 = vsub.f32 %v1142, %v1351
        %v1409 = vsub.f32 %v1145, %v1354
        %v1410 = vsub.f32 %v1148, %v1357
        %v1411 = vsub.f32 %v1151, %v1360
        %v1412 = vsub.f32 %v1154, %v1363
        %v1413 = vsub.f32 %v1157, %v1366
        %v1414 = vsub.f32 %v1160, %v1369
        %v1415 = vsub.f32 %v1163, %v1372
        %v1416 = vsub.f32 %v1166, %v1375
        %v1417 = vsub.f32 %v1169, %v1378
        %v1418 = vsub.f32 %v1172, %v1381
        %v1419 = vsub.f32 %v1175, %v1384
        %v1420 = vsub.f32 %v1178, %v1387
        %v1421 = vmul.f32 %v1389, %v1389
        %v1422 = vmul.f32 %v1390, %v1390
        %v1423 = vmul.f32 %v1391, %v1391
        %v1424 = vmul.f32 %v1392, %v1392
        %v1425 = vmul.f32 %v1393, %v1393
        %v1426 = vmul.f32 %v1394, %v1394
        %v1427 = vmul.f32 %v1395, %v1395
        %v1428 = vmul.f32 %v1396, %v1396
        %v1429 = vmul.f32 %v1397, %v1397
        %v1430 = vmul.f32 %v1398, %v1398
        %v1431 = vmul.f32 %v1399, %v1399
        %v1432 = vmul.f32 %v1400, %v1400
        %v1433 = vmul.f32 %v1401, %v1401
        %v1434 = vmul.f32 %v1402, %v1402
        %v1435 = vmul.f32 %v1403, %v1403
        %v1436 = vmul.f32 %v1404, %v1404
        %v1437 = vmul.f32 %v1405, %v1405
        %v1438 = vmul.f32 %v1406, %v1406
        %v1439 = vmul.f32 %v1407, %v1407
        %v1440 = vmul.f32 %v1408, %v1408
        %v1441 = vmul.f32 %v1409, %v1409
        %v1442 = vmul.f32 %v1410, %v1410
        %v1443 = vmul.f32 %v1411, %v1411
        %v1444 = vmul.f32 %v1412, %v1412
        %v1445 = vmul.f32 %v1413, %v1413
        %v1446 = vmul.f32 %v1414, %v1414
        %v1447 = vmul.f32 %v1415, %v1415
        %v1448 = vmul.f32 %v1416, %v1416
        %v1449 = vmul.f32 %v1417, %v1417
        %v1450 = vmul.f32 %v1418, %v1418
        %v1451 = vmul.f32 %v1419, %v1419
        %v1452 = vmul.f32 %v1420, %v1420
        %1485 = vrot.lane.b32.xlu0 %v1421, 96
        %v1486 = vpop.permute.xlu0 %1485
        %1487 = vrot.lane.b32.xlu0 %v1422, 96
        %v1488 = vpop.permute.xlu0 %1487
        %1489 = vrot.lane.b32.xlu0 %v1423, 96
        %v1490 = vpop.permute.xlu0 %1489
        %1491 = vrot.lane.b32.xlu0 %v1424, 96
        %v1492 = vpop.permute.xlu0 %1491
        %1493 = vrot.lane.b32.xlu0 %v1425, 96
        %v1494 = vpop.permute.xlu0 %1493
        %1495 = vrot.lane.b32.xlu0 %v1426, 96
        %v1496 = vpop.permute.xlu0 %1495
        %1497 = vrot.lane.b32.xlu0 %v1427, 96
        %v1498 = vpop.permute.xlu0 %1497
        %1499 = vrot.lane.b32.xlu0 %v1428, 96
        %v1500 = vpop.permute.xlu0 %1499
        %1501 = vrot.lane.b32.xlu0 %v1429, 96
        %v1502 = vpop.permute.xlu0 %1501
        %1503 = vrot.lane.b32.xlu0 %v1430, 96
        %v1504 = vpop.permute.xlu0 %1503
        %1505 = vrot.lane.b32.xlu0 %v1431, 96
        %v1506 = vpop.permute.xlu0 %1505
        %1507 = vrot.lane.b32.xlu0 %v1432, 96
        %v1508 = vpop.permute.xlu0 %1507
        %1509 = vrot.lane.b32.xlu0 %v1433, 96
        %v1510 = vpop.permute.xlu0 %1509
        %1511 = vrot.lane.b32.xlu0 %v1434, 96
        %v1512 = vpop.permute.xlu0 %1511
        %1513 = vrot.lane.b32.xlu0 %v1435, 96
        %v1514 = vpop.permute.xlu0 %1513
        %1515 = vrot.lane.b32.xlu0 %v1436, 96
        %v1516 = vpop.permute.xlu0 %1515
        %1517 = vrot.lane.b32.xlu0 %v1437, 96
        %v1518 = vpop.permute.xlu0 %1517
        %1519 = vrot.lane.b32.xlu0 %v1438, 96
        %v1520 = vpop.permute.xlu0 %1519
        %1521 = vrot.lane.b32.xlu0 %v1439, 96
        %v1522 = vpop.permute.xlu0 %1521
        %1523 = vrot.lane.b32.xlu0 %v1440, 96
        %v1524 = vpop.permute.xlu0 %1523
        %1525 = vrot.lane.b32.xlu0 %v1441, 96
        %v1526 = vpop.permute.xlu0 %1525
        %1527 = vrot.lane.b32.xlu0 %v1442, 96
        %v1528 = vpop.permute.xlu0 %1527
        %1529 = vrot.lane.b32.xlu0 %v1443, 96
        %v1530 = vpop.permute.xlu0 %1529
        %1531 = vrot.lane.b32.xlu0 %v1444, 96
        %v1532 = vpop.permute.xlu0 %1531
        %1533 = vrot.lane.b32.xlu0 %v1445, 96
        %v1534 = vpop.permute.xlu0 %1533
        %1535 = vrot.lane.b32.xlu0 %v1446, 96
        %v1536 = vpop.permute.xlu0 %1535
        %1537 = vrot.lane.b32.xlu0 %v1447, 96
        %v1538 = vpop.permute.xlu0 %1537
        %1539 = vrot.lane.b32.xlu0 %v1448, 96
        %v1540 = vpop.permute.xlu0 %1539
        %1541 = vrot.lane.b32.xlu0 %v1449, 96
        %v1542 = vpop.permute.xlu0 %1541
        %1543 = vrot.lane.b32.xlu0 %v1450, 96
        %v1544 = vpop.permute.xlu0 %1543
        %1545 = vrot.lane.b32.xlu0 %v1451, 96
        %v1546 = vpop.permute.xlu0 %1545
        %1547 = vrot.lane.b32.xlu0 %v1452, 96
        %v1548 = vpop.permute.xlu0 %1547
        %vm1581 = vcmask 23552
        %v1582 = vsel %vm1581, %v1486, 0.0
        %1583 = vadd.xlane.f32.xlu0 %v1582
        %v1584 = vpop.xlane.xlu0 %1583
        %v1585 = vsel %vm1581, %v1488, 0.0
        %1586 = vadd.xlane.f32.xlu0 %v1585
        %v1587 = vpop.xlane.xlu0 %1586
        %v1588 = vsel %vm1581, %v1490, 0.0
        %1589 = vadd.xlane.f32.xlu0 %v1588
        %v1590 = vpop.xlane.xlu0 %1589
        %v1591 = vsel %vm1581, %v1492, 0.0
        %1592 = vadd.xlane.f32.xlu0 %v1591
        %v1593 = vpop.xlane.xlu0 %1592
        %v1594 = vsel %vm1581, %v1494, 0.0
        %1595 = vadd.xlane.f32.xlu0 %v1594
        %v1596 = vpop.xlane.xlu0 %1595
        %v1597 = vsel %vm1581, %v1496, 0.0
        %1598 = vadd.xlane.f32.xlu0 %v1597
        %v1599 = vpop.xlane.xlu0 %1598
        %v1600 = vsel %vm1581, %v1498, 0.0
        %1601 = vadd.xlane.f32.xlu0 %v1600
        %v1602 = vpop.xlane.xlu0 %1601
        %v1603 = vsel %vm1581, %v1500, 0.0
        %1604 = vadd.xlane.f32.xlu0 %v1603
        %v1605 = vpop.xlane.xlu0 %1604
        %v1606 = vsel %vm1581, %v1502, 0.0
        %1607 = vadd.xlane.f32.xlu0 %v1606
        %v1608 = vpop.xlane.xlu0 %1607
        %v1609 = vsel %vm1581, %v1504, 0.0
        %1610 = vadd.xlane.f32.xlu0 %v1609
        %v1611 = vpop.xlane.xlu0 %1610
        %v1612 = vsel %vm1581, %v1506, 0.0
        %1613 = vadd.xlane.f32.xlu0 %v1612
        %v1614 = vpop.xlane.xlu0 %1613
        %v1615 = vsel %vm1581, %v1508, 0.0
        %1616 = vadd.xlane.f32.xlu0 %v1615
        %v1617 = vpop.xlane.xlu0 %1616
        %v1618 = vsel %vm1581, %v1510, 0.0
        %1619 = vadd.xlane.f32.xlu0 %v1618
        %v1620 = vpop.xlane.xlu0 %1619
        %v1621 = vsel %vm1581, %v1512, 0.0
        %1622 = vadd.xlane.f32.xlu0 %v1621
        %v1623 = vpop.xlane.xlu0 %1622
        %v1624 = vsel %vm1581, %v1514, 0.0
        %1625 = vadd.xlane.f32.xlu0 %v1624
        %v1626 = vpop.xlane.xlu0 %1625
        %v1627 = vsel %vm1581, %v1516, 0.0
        %1628 = vadd.xlane.f32.xlu0 %v1627
        %v1629 = vpop.xlane.xlu0 %1628
        %v1630 = vsel %vm1581, %v1518, 0.0
        %1631 = vadd.xlane.f32.xlu0 %v1630
        %v1632 = vpop.xlane.xlu0 %1631
        %v1633 = vsel %vm1581, %v1520, 0.0
        %1634 = vadd.xlane.f32.xlu0 %v1633
        %v1635 = vpop.xlane.xlu0 %1634
        %v1636 = vsel %vm1581, %v1522, 0.0
        %1637 = vadd.xlane.f32.xlu0 %v1636
        %v1638 = vpop.xlane.xlu0 %1637
        %v1639 = vsel %vm1581, %v1524, 0.0
        %1640 = vadd.xlane.f32.xlu0 %v1639
        %v1641 = vpop.xlane.xlu0 %1640
        %v1642 = vsel %vm1581, %v1526, 0.0
        %1643 = vadd.xlane.f32.xlu0 %v1642
        %v1644 = vpop.xlane.xlu0 %1643
        %v1645 = vsel %vm1581, %v1528, 0.0
        %1646 = vadd.xlane.f32.xlu0 %v1645
        %v1647 = vpop.xlane.xlu0 %1646
        %v1648 = vsel %vm1581, %v1530, 0.0
        %1649 = vadd.xlane.f32.xlu0 %v1648
        %v1650 = vpop.xlane.xlu0 %1649
        %v1651 = vsel %vm1581, %v1532, 0.0
        %1652 = vadd.xlane.f32.xlu0 %v1651
        %v1653 = vpop.xlane.xlu0 %1652
        %v1654 = vsel %vm1581, %v1534, 0.0
        %1655 = vadd.xlane.f32.xlu0 %v1654
        %v1656 = vpop.xlane.xlu0 %1655
        %v1657 = vsel %vm1581, %v1536, 0.0
        %1658 = vadd.xlane.f32.xlu0 %v1657
        %v1659 = vpop.xlane.xlu0 %1658
        %v1660 = vsel %vm1581, %v1538, 0.0
        %1661 = vadd.xlane.f32.xlu0 %v1660
        %v1662 = vpop.xlane.xlu0 %1661
        %v1663 = vsel %vm1581, %v1540, 0.0
        %1664 = vadd.xlane.f32.xlu0 %v1663
        %v1665 = vpop.xlane.xlu0 %1664
        %v1666 = vsel %vm1581, %v1542, 0.0
        %1667 = vadd.xlane.f32.xlu0 %v1666
        %v1668 = vpop.xlane.xlu0 %1667
        %v1669 = vsel %vm1581, %v1544, 0.0
        %1670 = vadd.xlane.f32.xlu0 %v1669
        %v1671 = vpop.xlane.xlu0 %1670
        %v1672 = vsel %vm1581, %v1546, 0.0
        %1673 = vadd.xlane.f32.xlu0 %v1672
        %v1674 = vpop.xlane.xlu0 %1673
        %v1675 = vsel %vm1581, %v1548, 0.0
        %1676 = vadd.xlane.f32.xlu0 %v1675
        %v1677 = vpop.xlane.xlu0 %1676
        %v1678 = vld [vmem:[%s3] sm:$0xff]
        %v1679 = vld [vmem:[%s3 + $0x8] sm:$0xff]
        %v1680 = vld [vmem:[%s3 + $0x10] sm:$0xff]
        %v1681 = vld [vmem:[%s3 + $0x18] sm:$0xff]
        %v1682 = vld [vmem:[%s3 + $0x20] sm:$0xff]
        %v1683 = vld [vmem:[%s3 + $0x28] sm:$0xff]
        %v1684 = vld [vmem:[%s3 + $0x30] sm:$0xff]
        %v1685 = vld [vmem:[%s3 + $0x38] sm:$0xff]
        %v1686 = vld [vmem:[%s3 + $0x40] sm:$0xff]
        %v1687 = vld [vmem:[%s3 + $0x48] sm:$0xff]
        %v1688 = vld [vmem:[%s3 + $0x50] sm:$0xff]
        %v1689 = vld [vmem:[%s3 + $0x58] sm:$0xff]
        %v1690 = vld [vmem:[%s3 + $0x60] sm:$0xff]
        %v1691 = vld [vmem:[%s3 + $0x68] sm:$0xff]
        %v1692 = vld [vmem:[%s3 + $0x70] sm:$0xff]
        %v1693 = vld [vmem:[%s3 + $0x78] sm:$0xff]
        %v1694 = vld [vmem:[%s4] sm:$0xff]
        %v1695 = vld [vmem:[%s4 + $0x8] sm:$0xff]
        %v1696 = vld [vmem:[%s4 + $0x10] sm:$0xff]
        %v1697 = vld [vmem:[%s4 + $0x18] sm:$0xff]
        %v1698 = vld [vmem:[%s4 + $0x20] sm:$0xff]
        %v1699 = vld [vmem:[%s4 + $0x28] sm:$0xff]
        %v1700 = vld [vmem:[%s4 + $0x30] sm:$0xff]
        %v1701 = vld [vmem:[%s4 + $0x38] sm:$0xff]
        %v1702 = vld [vmem:[%s4 + $0x40] sm:$0xff]
        %v1703 = vld [vmem:[%s4 + $0x48] sm:$0xff]
        %v1704 = vld [vmem:[%s4 + $0x50] sm:$0xff]
        %v1705 = vld [vmem:[%s4 + $0x58] sm:$0xff]
        %v1706 = vld [vmem:[%s4 + $0x60] sm:$0xff]
        %v1707 = vld [vmem:[%s4 + $0x68] sm:$0xff]
        %v1708 = vld [vmem:[%s4 + $0x70] sm:$0xff]
        %v1709 = vld [vmem:[%s4 + $0x78] sm:$0xff]
        %1710 = vmatpush.msra.mxu0 %v1709
        %1711 = vmatpush.msra.mxu0 %v1708
        %1712 = vmatpush.msra.mxu0 %v1707
        %1713 = vmatpush.msra.mxu0 %v1706
        %1714 = vmatpush.msra.mxu0 %v1705
        %1715 = vmatpush.msra.mxu0 %v1704
        %1716 = vmatpush.msra.mxu0 %v1703
        %1717 = vmatpush.msra.mxu0 %v1702
        %1718 = vmatpush.msra.mxu0 %v1701
        %1719 = vmatpush.msra.mxu0 %v1700
        %1720 = vmatpush.msra.mxu0 %v1699
        %1721 = vmatpush.msra.mxu0 %v1698
        %1722 = vmatpush.msra.mxu0 %v1697
        %1723 = vmatpush.msra.mxu0 %v1696
        %1724 = vmatpush.msra.mxu0 %v1695
        %1725 = vmatpush.msra.mxu0 %v1694
        %1726 = vmatmul.f32.gmra.mxu0 %v1294
        %v1727 = vpop.f32.mrf.mxu0
        %v1728 = vadd.f32 0.0, %v1727
        %1729 = vmatmul.f32.gmra.mxu0 %v1297
        %v1730 = vpop.f32.mrf.mxu0
        %v1731 = vadd.f32 0.0, %v1730
        %1732 = vmatmul.f32.gmra.mxu0 %v1300
        %v1733 = vpop.f32.mrf.mxu0
        %v1734 = vadd.f32 0.0, %v1733
        %1735 = vmatmul.f32.gmra.mxu0 %v1303
        %v1736 = vpop.f32.mrf.mxu0
        %v1737 = vadd.f32 0.0, %v1736
        %1738 = vmatmul.f32.gmra.mxu0 %v1306
        %v1739 = vpop.f32.mrf.mxu0
        %v1740 = vadd.f32 0.0, %v1739
        %1741 = vmatmul.f32.gmra.mxu0 %v1309
        %v1742 = vpop.f32.mrf.mxu0
        %v1743 = vadd.f32 0.0, %v1742
        %1744 = vmatmul.f32.gmra.mxu0 %v1312
        %v1745 = vpop.f32.mrf.mxu0
        %v1746 = vadd.f32 0.0, %v1745
        %1747 = vmatmul.f32.gmra.mxu0 %v1315
        %v1748 = vpop.f32.mrf.mxu0
        %v1749 = vadd.f32 0.0, %v1748
        %1750 = vmatmul.f32.gmra.mxu0 %v1318
        %v1751 = vpop.f32.mrf.mxu0
        %v1752 = vadd.f32 0.0, %v1751
        %1753 = vmatmul.f32.gmra.mxu0 %v1321
        %v1754 = vpop.f32.mrf.mxu0
        %v1755 = vadd.f32 0.0, %v1754
        %1756 = vmatmul.f32.gmra.mxu0 %v1324
        %v1757 = vpop.f32.mrf.mxu0
        %v1758 = vadd.f32 0.0, %v1757
        %1759 = vmatmul.f32.gmra.mxu0 %v1327
        %v1760 = vpop.f32.mrf.mxu0
        %v1761 = vadd.f32 0.0, %v1760
        %1762 = vmatmul.f32.gmra.mxu0 %v1330
        %v1763 = vpop.f32.mrf.mxu0
        %v1764 = vadd.f32 0.0, %v1763
        %1765 = vmatmul.f32.gmra.mxu0 %v1333
        %v1766 = vpop.f32.mrf.mxu0
        %v1767 = vadd.f32 0.0, %v1766
        %1768 = vmatmul.f32.gmra.mxu0 %v1336
        %v1769 = vpop.f32.mrf.mxu0
        %v1770 = vadd.f32 0.0, %v1769
        %1771 = vmatmul.f32.gmra.mxu0 %v1339
        %v1772 = vpop.f32.mrf.mxu0
        %v1773 = vadd.f32 0.0, %v1772
        %1774 = vmatmul.f32.gmra.mxu0 %v1342
        %v1775 = vpop.f32.mrf.mxu0
        %v1776 = vadd.f32 0.0, %v1775
        %1777 = vmatmul.f32.gmra.mxu0 %v1345
        %v1778 = vpop.f32.mrf.mxu0
        %v1779 = vadd.f32 0.0, %v1778
        %1780 = vmatmul.f32.gmra.mxu0 %v1348
        %v1781 = vpop.f32.mrf.mxu0
        %v1782 = vadd.f32 0.0, %v1781
        %1783 = vmatmul.f32.gmra.mxu0 %v1351
        %v1784 = vpop.f32.mrf.mxu0
        %v1785 = vadd.f32 0.0, %v1784
        %1786 = vmatmul.f32.gmra.mxu0 %v1354
        %v1787 = vpop.f32.mrf.mxu0
        %v1788 = vadd.f32 0.0, %v1787
        %1789 = vmatmul.f32.gmra.mxu0 %v1357
        %v1790 = vpop.f32.mrf.mxu0
        %v1791 = vadd.f32 0.0, %v1790
        %1792 = vmatmul.f32.gmra.mxu0 %v1360
        %v1793 = vpop.f32.mrf.mxu0
        %v1794 = vadd.f32 0.0, %v1793
        %1795 = vmatmul.f32.gmra.mxu0 %v1363
        %v1796 = vpop.f32.mrf.mxu0
        %v1797 = vadd.f32 0.0, %v1796
        %1798 = vmatmul.f32.gmra.mxu0 %v1366
        %v1799 = vpop.f32.mrf.mxu0
        %v1800 = vadd.f32 0.0, %v1799
        %1801 = vmatmul.f32.gmra.mxu0 %v1369
        %v1802 = vpop.f32.mrf.mxu0
        %v1803 = vadd.f32 0.0, %v1802
        %1804 = vmatmul.f32.gmra.mxu0 %v1372
        %v1805 = vpop.f32.mrf.mxu0
        %v1806 = vadd.f32 0.0, %v1805
        %1807 = vmatmul.f32.gmra.mxu0 %v1375
        %v1808 = vpop.f32.mrf.mxu0
        %v1809 = vadd.f32 0.0, %v1808
        %1810 = vmatmul.f32.gmra.mxu0 %v1378
        %v1811 = vpop.f32.mrf.mxu0
        %v1812 = vadd.f32 0.0, %v1811
        %1813 = vmatmul.f32.gmra.mxu0 %v1381
        %v1814 = vpop.f32.mrf.mxu0
        %v1815 = vadd.f32 0.0, %v1814
        %1816 = vmatmul.f32.gmra.mxu0 %v1384
        %v1817 = vpop.f32.mrf.mxu0
        %v1818 = vadd.f32 0.0, %v1817
        %1819 = vmatmul.f32.gmra.mxu0 %v1387
        %v1820 = vpop.f32.mrf.mxu0
        %v1821 = vadd.f32 0.0, %v1820
        %1822 = vdwg.mxu0
        %1823 = vmatpush.msra.mxu0 %v1693
        %1824 = vmatpush.msra.mxu0 %v1692
        %1825 = vmatpush.msra.mxu0 %v1691
        %1826 = vmatpush.msra.mxu0 %v1690
        %1827 = vmatpush.msra.mxu0 %v1689
        %1828 = vmatpush.msra.mxu0 %v1688
        %1829 = vmatpush.msra.mxu0 %v1687
        %1830 = vmatpush.msra.mxu0 %v1686
        %1831 = vmatpush.msra.mxu0 %v1685
        %1832 = vmatpush.msra.mxu0 %v1684
        %1833 = vmatpush.msra.mxu0 %v1683
        %1834 = vmatpush.msra.mxu0 %v1682
        %1835 = vmatpush.msra.mxu0 %v1681
        %1836 = vmatpush.msra.mxu0 %v1680
        %1837 = vmatpush.msra.mxu0 %v1679
        %1838 = vmatpush.msra.mxu0 %v1678
        %1839 = vmatmul.f32.gmra.mxu0 %v1085
        %v1840 = vpop.f32.mrf.mxu0
        %v1841 = vadd.f32 %v1728, %v1840
        %1842 = vmatmul.f32.gmra.mxu0 %v1088
        %v1843 = vpop.f32.mrf.mxu0
        %v1844 = vadd.f32 %v1731, %v1843
        %1845 = vmatmul.f32.gmra.mxu0 %v1091
        %v1846 = vpop.f32.mrf.mxu0
        %v1847 = vadd.f32 %v1734, %v1846
        %1848 = vmatmul.f32.gmra.mxu0 %v1094
        %v1849 = vpop.f32.mrf.mxu0
        %v1850 = vadd.f32 %v1737, %v1849
        %1851 = vmatmul.f32.gmra.mxu0 %v1097
        %v1852 = vpop.f32.mrf.mxu0
        %v1853 = vadd.f32 %v1740, %v1852
        %1854 = vmatmul.f32.gmra.mxu0 %v1100
        %v1855 = vpop.f32.mrf.mxu0
        %v1856 = vadd.f32 %v1743, %v1855
        %1857 = vmatmul.f32.gmra.mxu0 %v1103
        %v1858 = vpop.f32.mrf.mxu0
        %v1859 = vadd.f32 %v1746, %v1858
        %1860 = vmatmul.f32.gmra.mxu0 %v1106
        %v1861 = vpop.f32.mrf.mxu0
        %v1862 = vadd.f32 %v1749, %v1861
        %1863 = vmatmul.f32.gmra.mxu0 %v1109
        %v1864 = vpop.f32.mrf.mxu0
        %v1865 = vadd.f32 %v1752, %v1864
        %1866 = vmatmul.f32.gmra.mxu0 %v1112
        %v1867 = vpop.f32.mrf.mxu0
        %v1868 = vadd.f32 %v1755, %v1867
        %1869 = vmatmul.f32.gmra.mxu0 %v1115
        %v1870 = vpop.f32.mrf.mxu0
        %v1871 = vadd.f32 %v1758, %v1870
        %1872 = vmatmul.f32.gmra.mxu0 %v1118
        %v1873 = vpop.f32.mrf.mxu0
        %v1874 = vadd.f32 %v1761, %v1873
        %1875 = vmatmul.f32.gmra.mxu0 %v1121
        %v1876 = vpop.f32.mrf.mxu0
        %v1877 = vadd.f32 %v1764, %v1876
        %1878 = vmatmul.f32.gmra.mxu0 %v1124
        %v1879 = vpop.f32.mrf.mxu0
        %v1880 = vadd.f32 %v1767, %v1879
        %1881 = vmatmul.f32.gmra.mxu0 %v1127
        %v1882 = vpop.f32.mrf.mxu0
        %v1883 = vadd.f32 %v1770, %v1882
        %1884 = vmatmul.f32.gmra.mxu0 %v1130
        %v1885 = vpop.f32.mrf.mxu0
        %v1886 = vadd.f32 %v1773, %v1885
        %1887 = vmatmul.f32.gmra.mxu0 %v1133
        %v1888 = vpop.f32.mrf.mxu0
        %v1889 = vadd.f32 %v1776, %v1888
        %1890 = vmatmul.f32.gmra.mxu0 %v1136
        %v1891 = vpop.f32.mrf.mxu0
        %v1892 = vadd.f32 %v1779, %v1891
        %1893 = vmatmul.f32.gmra.mxu0 %v1139
        %v1894 = vpop.f32.mrf.mxu0
        %v1895 = vadd.f32 %v1782, %v1894
        %1896 = vmatmul.f32.gmra.mxu0 %v1142
        %v1897 = vpop.f32.mrf.mxu0
        %v1898 = vadd.f32 %v1785, %v1897
        %1899 = vmatmul.f32.gmra.mxu0 %v1145
        %v1900 = vpop.f32.mrf.mxu0
        %v1901 = vadd.f32 %v1788, %v1900
        %1902 = vmatmul.f32.gmra.mxu0 %v1148
        %v1903 = vpop.f32.mrf.mxu0
        %v1904 = vadd.f32 %v1791, %v1903
        %1905 = vmatmul.f32.gmra.mxu0 %v1151
        %v1906 = vpop.f32.mrf.mxu0
        %v1907 = vadd.f32 %v1794, %v1906
        %1908 = vmatmul.f32.gmra.mxu0 %v1154
        %v1909 = vpop.f32.mrf.mxu0
        %v1910 = vadd.f32 %v1797, %v1909
        %1911 = vmatmul.f32.gmra.mxu0 %v1157
        %v1912 = vpop.f32.mrf.mxu0
        %v1913 = vadd.f32 %v1800, %v1912
        %1914 = vmatmul.f32.gmra.mxu0 %v1160
        %v1915 = vpop.f32.mrf.mxu0
        %v1916 = vadd.f32 %v1803, %v1915
        %1917 = vmatmul.f32.gmra.mxu0 %v1163
        %v1918 = vpop.f32.mrf.mxu0
        %v1919 = vadd.f32 %v1806, %v1918
        %1920 = vmatmul.f32.gmra.mxu0 %v1166
        %v1921 = vpop.f32.mrf.mxu0
        %v1922 = vadd.f32 %v1809, %v1921
        %1923 = vmatmul.f32.gmra.mxu0 %v1169
        %v1924 = vpop.f32.mrf.mxu0
        %v1925 = vadd.f32 %v1812, %v1924
        %1926 = vmatmul.f32.gmra.mxu0 %v1172
        %v1927 = vpop.f32.mrf.mxu0
        %v1928 = vadd.f32 %v1815, %v1927
        %1929 = vmatmul.f32.gmra.mxu0 %v1175
        %v1930 = vpop.f32.mrf.mxu0
        %v1931 = vadd.f32 %v1818, %v1930
        %1932 = vmatmul.f32.gmra.mxu0 %v1178
        %v1933 = vpop.f32.mrf.mxu0
        %v1934 = vadd.f32 %v1821, %v1933
        %1935 = vdwg.mxu0
        %v1936 = vld [vmem:[%s5] sm:$0x1]
        %v1938 = vperm.slane %v1936, 0
        %v1940 = vmul.f32 %v1584, %v1938
        %v1941 = vmul.f32 %v1587, %v1938
        %v1942 = vmul.f32 %v1590, %v1938
        %v1943 = vmul.f32 %v1593, %v1938
        %v1944 = vmul.f32 %v1596, %v1938
        %v1945 = vmul.f32 %v1599, %v1938
        %v1946 = vmul.f32 %v1602, %v1938
        %v1947 = vmul.f32 %v1605, %v1938
        %v1948 = vmul.f32 %v1608, %v1938
        %v1949 = vmul.f32 %v1611, %v1938
        %v1950 = vmul.f32 %v1614, %v1938
        %v1951 = vmul.f32 %v1617, %v1938
        %v1952 = vmul.f32 %v1620, %v1938
        %v1953 = vmul.f32 %v1623, %v1938
        %v1954 = vmul.f32 %v1626, %v1938
        %v1955 = vmul.f32 %v1629, %v1938
        %v1956 = vmul.f32 %v1632, %v1938
        %v1957 = vmul.f32 %v1635, %v1938
        %v1958 = vmul.f32 %v1638, %v1938
        %v1959 = vmul.f32 %v1641, %v1938
        %v1960 = vmul.f32 %v1644, %v1938
        %v1961 = vmul.f32 %v1647, %v1938
        %v1962 = vmul.f32 %v1650, %v1938
        %v1963 = vmul.f32 %v1653, %v1938
        %v1964 = vmul.f32 %v1656, %v1938
        %v1965 = vmul.f32 %v1659, %v1938
        %v1966 = vmul.f32 %v1662, %v1938
        %v1967 = vmul.f32 %v1665, %v1938
        %v1968 = vmul.f32 %v1668, %v1938
        %v1969 = vmul.f32 %v1671, %v1938
        %v1970 = vmul.f32 %v1674, %v1938
        %v1971 = vmul.f32 %v1677, %v1938
        %v1972 = vadd.f32 %v1841, %v1940
        %v1973 = vadd.f32 %v1844, %v1941
        %v1974 = vadd.f32 %v1847, %v1942
        %v1975 = vadd.f32 %v1850, %v1943
        %v1976 = vadd.f32 %v1853, %v1944
        %v1977 = vadd.f32 %v1856, %v1945
        %v1978 = vadd.f32 %v1859, %v1946
        %v1979 = vadd.f32 %v1862, %v1947
        %v1980 = vadd.f32 %v1865, %v1948
        %v1981 = vadd.f32 %v1868, %v1949
        %v1982 = vadd.f32 %v1871, %v1950
        %v1983 = vadd.f32 %v1874, %v1951
        %v1984 = vadd.f32 %v1877, %v1952
        %v1985 = vadd.f32 %v1880, %v1953
        %v1986 = vadd.f32 %v1883, %v1954
        %v1987 = vadd.f32 %v1886, %v1955
        %v1988 = vadd.f32 %v1889, %v1956
        %v1989 = vadd.f32 %v1892, %v1957
        %v1990 = vadd.f32 %v1895, %v1958
        %v1991 = vadd.f32 %v1898, %v1959
        %v1992 = vadd.f32 %v1901, %v1960
        %v1993 = vadd.f32 %v1904, %v1961
        %v1994 = vadd.f32 %v1907, %v1962
        %v1995 = vadd.f32 %v1910, %v1963
        %v1996 = vadd.f32 %v1913, %v1964
        %v1997 = vadd.f32 %v1916, %v1965
        %v1998 = vadd.f32 %v1919, %v1966
        %v1999 = vadd.f32 %v1922, %v1967
        %v2000 = vadd.f32 %v1925, %v1968
        %v2001 = vadd.f32 %v1928, %v1969
        %v2002 = vadd.f32 %v1931, %v1970
        %v2003 = vadd.f32 %v1934, %v1971
        %v2004 = vld [vmem:[%s6] sm:$0x1]
        %v2006 = vperm.slane %v2004, 0
        %v2008 = vadd.f32 %v1972, %v2006
        %v2009 = vadd.f32 %v1973, %v2006
        %v2010 = vadd.f32 %v1974, %v2006
        %v2011 = vadd.f32 %v1975, %v2006
        %v2012 = vadd.f32 %v1976, %v2006
        %v2013 = vadd.f32 %v1977, %v2006
        %v2014 = vadd.f32 %v1978, %v2006
        %v2015 = vadd.f32 %v1979, %v2006
        %v2016 = vadd.f32 %v1980, %v2006
        %v2017 = vadd.f32 %v1981, %v2006
        %v2018 = vadd.f32 %v1982, %v2006
        %v2019 = vadd.f32 %v1983, %v2006
        %v2020 = vadd.f32 %v1984, %v2006
        %v2021 = vadd.f32 %v1985, %v2006
        %v2022 = vadd.f32 %v1986, %v2006
        %v2023 = vadd.f32 %v1987, %v2006
        %v2024 = vadd.f32 %v1988, %v2006
        %v2025 = vadd.f32 %v1989, %v2006
        %v2026 = vadd.f32 %v1990, %v2006
        %v2027 = vadd.f32 %v1991, %v2006
        %v2028 = vadd.f32 %v1992, %v2006
        %v2029 = vadd.f32 %v1993, %v2006
        %v2030 = vadd.f32 %v1994, %v2006
        %v2031 = vadd.f32 %v1995, %v2006
        %v2032 = vadd.f32 %v1996, %v2006
        %v2033 = vadd.f32 %v1997, %v2006
        %v2034 = vadd.f32 %v1998, %v2006
        %v2035 = vadd.f32 %v1999, %v2006
        %v2036 = vadd.f32 %v2000, %v2006
        %v2037 = vadd.f32 %v2001, %v2006
        %v2038 = vadd.f32 %v2002, %v2006
        %v2039 = vadd.f32 %v2003, %v2006
        %v2040 = vxor.u32 %v2008, 2147483648
        %v2041 = vxor.u32 %v2009, 2147483648
        %v2042 = vxor.u32 %v2010, 2147483648
        %v2043 = vxor.u32 %v2011, 2147483648
        %v2044 = vxor.u32 %v2012, 2147483648
        %v2045 = vxor.u32 %v2013, 2147483648
        %v2046 = vxor.u32 %v2014, 2147483648
        %v2047 = vxor.u32 %v2015, 2147483648
        %v2048 = vxor.u32 %v2016, 2147483648
        %v2049 = vxor.u32 %v2017, 2147483648
        %v2050 = vxor.u32 %v2018, 2147483648
        %v2051 = vxor.u32 %v2019, 2147483648
        %v2052 = vxor.u32 %v2020, 2147483648
        %v2053 = vxor.u32 %v2021, 2147483648
        %v2054 = vxor.u32 %v2022, 2147483648
        %v2055 = vxor.u32 %v2023, 2147483648
        %v2056 = vxor.u32 %v2024, 2147483648
        %v2057 = vxor.u32 %v2025, 2147483648
        %v2058 = vxor.u32 %v2026, 2147483648
        %v2059 = vxor.u32 %v2027, 2147483648
        %v2060 = vxor.u32 %v2028, 2147483648
        %v2061 = vxor.u32 %v2029, 2147483648
        %v2062 = vxor.u32 %v2030, 2147483648
        %v2063 = vxor.u32 %v2031, 2147483648
        %v2064 = vxor.u32 %v2032, 2147483648
        %v2065 = vxor.u32 %v2033, 2147483648
        %v2066 = vxor.u32 %v2034, 2147483648
        %v2067 = vxor.u32 %v2035, 2147483648
        %v2068 = vxor.u32 %v2036, 2147483648
        %v2069 = vxor.u32 %v2037, 2147483648
        %v2070 = vxor.u32 %v2038, 2147483648
        %v2071 = vxor.u32 %v2039, 2147483648
        %v2072 = vmul.f32 %v2040, 1.442695
        %v2073 = vpow.pop %v2072
        %v2074 = vmul.f32 %v2041, 1.442695
        %v2075 = vpow.pop %v2074
        %v2076 = vmul.f32 %v2042, 1.442695
        %v2077 = vpow.pop %v2076
        %v2078 = vmul.f32 %v2043, 1.442695
        %v2079 = vpow.pop %v2078
        %v2080 = vmul.f32 %v2044, 1.442695
        %v2081 = vpow.pop %v2080
        %v2082 = vmul.f32 %v2045, 1.442695
        %v2083 = vpow.pop %v2082
        %v2084 = vmul.f32 %v2046, 1.442695
        %v2085 = vpow.pop %v2084
        %v2086 = vmul.f32 %v2047, 1.442695
        %v2087 = vpow.pop %v2086
        %v2088 = vmul.f32 %v2048, 1.442695
        %v2089 = vpow.pop %v2088
        %v2090 = vmul.f32 %v2049, 1.442695
        %v2091 = vpow.pop %v2090
        %v2092 = vmul.f32 %v2050, 1.442695
        %v2093 = vpow.pop %v2092
        %v2094 = vmul.f32 %v2051, 1.442695
        %v2095 = vpow.pop %v2094
        %v2096 = vmul.f32 %v2052, 1.442695
        %v2097 = vpow.pop %v2096
        %v2098 = vmul.f32 %v2053, 1.442695
        %v2099 = vpow.pop %v2098
        %v2100 = vmul.f32 %v2054, 1.442695
        %v2101 = vpow.pop %v2100
        %v2102 = vmul.f32 %v2055, 1.442695
        %v2103 = vpow.pop %v2102
        %v2104 = vmul.f32 %v2056, 1.442695
        %v2105 = vpow.pop %v2104
        %v2106 = vmul.f32 %v2057, 1.442695
        %v2107 = vpow.pop %v2106
        %v2108 = vmul.f32 %v2058, 1.442695
        %v2109 = vpow.pop %v2108
        %v2110 = vmul.f32 %v2059, 1.442695
        %v2111 = vpow.pop %v2110
        %v2112 = vmul.f32 %v2060, 1.442695
        %v2113 = vpow.pop %v2112
        %v2114 = vmul.f32 %v2061, 1.442695
        %v2115 = vpow.pop %v2114
        %v2116 = vmul.f32 %v2062, 1.442695
        %v2117 = vpow.pop %v2116
        %v2118 = vmul.f32 %v2063, 1.442695
        %v2119 = vpow.pop %v2118
        %v2120 = vmul.f32 %v2064, 1.442695
        %v2121 = vpow.pop %v2120
        %v2122 = vmul.f32 %v2065, 1.442695
        %v2123 = vpow.pop %v2122
        %v2124 = vmul.f32 %v2066, 1.442695
        %v2125 = vpow.pop %v2124
        %v2126 = vmul.f32 %v2067, 1.442695
        %v2127 = vpow.pop %v2126
        %v2128 = vmul.f32 %v2068, 1.442695
        %v2129 = vpow.pop %v2128
        %v2130 = vmul.f32 %v2069, 1.442695
        %v2131 = vpow.pop %v2130
        %v2132 = vmul.f32 %v2070, 1.442695
        %v2133 = vpow.pop %v2132
        %v2134 = vmul.f32 %v2071, 1.442695
        %v2135 = vpow.pop %v2134
        %v2136 = vadd.f32 %v2073, 1.0
        %v2137 = vadd.f32 %v2075, 1.0
        %v2138 = vadd.f32 %v2077, 1.0
        %v2139 = vadd.f32 %v2079, 1.0
        %v2140 = vadd.f32 %v2081, 1.0
        %v2141 = vadd.f32 %v2083, 1.0
        %v2142 = vadd.f32 %v2085, 1.0
        %v2143 = vadd.f32 %v2087, 1.0
        %v2144 = vadd.f32 %v2089, 1.0
        %v2145 = vadd.f32 %v2091, 1.0
        %v2146 = vadd.f32 %v2093, 1.0
        %v2147 = vadd.f32 %v2095, 1.0
        %v2148 = vadd.f32 %v2097, 1.0
        %v2149 = vadd.f32 %v2099, 1.0
        %v2150 = vadd.f32 %v2101, 1.0
        %v2151 = vadd.f32 %v2103, 1.0
        %v2152 = vadd.f32 %v2105, 1.0
        %v2153 = vadd.f32 %v2107, 1.0
        %v2154 = vadd.f32 %v2109, 1.0
        %v2155 = vadd.f32 %v2111, 1.0
        %v2156 = vadd.f32 %v2113, 1.0
        %v2157 = vadd.f32 %v2115, 1.0
        %v2158 = vadd.f32 %v2117, 1.0
        %v2159 = vadd.f32 %v2119, 1.0
        %v2160 = vadd.f32 %v2121, 1.0
        %v2161 = vadd.f32 %v2123, 1.0
        %v2162 = vadd.f32 %v2125, 1.0
        %v2163 = vadd.f32 %v2127, 1.0
        %v2164 = vadd.f32 %v2129, 1.0
        %v2165 = vadd.f32 %v2131, 1.0
        %v2166 = vadd.f32 %v2133, 1.0
        %v2167 = vadd.f32 %v2135, 1.0
        %v2168 = vrcp.pop %v2136
        %v2169 = vmul.f32 %v2136, %v2168
        %v2170 = vsub.f32 1.0, %v2169
        %v2171 = vmul.f32 %v2168, %v2170
        %v2172 = vadd.f32 %v2168, %v2171
        %vm2173 = vweird.f32 %v2136
        %vm2174 = vweird.f32 %v2168
        %vm2175 = vmor %vm2173, %vm2174
        %v2176 = vsel %vm2175, %v2168, %v2172
        %v2177 = vand.u32 2147483647, %v2136
        %vm2178 = vcmp.eq.f32.partialorder %v2177, 8.507059e+37
        %v2179 = vand.u32 %v2136, 2147483648
        %v2180 = vor.u32 1.1754944e-38, %v2179
        %v2181 = vsel %vm2178, %v2180, %v2176
        %v2182 = vmul.f32 1.0, %v2181
        %v2183 = vrcp.pop %v2137
        %v2184 = vmul.f32 %v2137, %v2183
        %v2185 = vsub.f32 1.0, %v2184
        %v2186 = vmul.f32 %v2183, %v2185
        %v2187 = vadd.f32 %v2183, %v2186
        %vm2188 = vweird.f32 %v2137
        %vm2189 = vweird.f32 %v2183
        %vm2190 = vmor %vm2188, %vm2189
        %v2191 = vsel %vm2190, %v2183, %v2187
        %v2192 = vand.u32 2147483647, %v2137
        %vm2193 = vcmp.eq.f32.partialorder %v2192, 8.507059e+37
        %v2194 = vand.u32 %v2137, 2147483648
        %v2195 = vor.u32 1.1754944e-38, %v2194
        %v2196 = vsel %vm2193, %v2195, %v2191
        %v2197 = vmul.f32 1.0, %v2196
        %v2198 = vrcp.pop %v2138
        %v2199 = vmul.f32 %v2138, %v2198
        %v2200 = vsub.f32 1.0, %v2199
        %v2201 = vmul.f32 %v2198, %v2200
        %v2202 = vadd.f32 %v2198, %v2201
        %vm2203 = vweird.f32 %v2138
        %vm2204 = vweird.f32 %v2198
        %vm2205 = vmor %vm2203, %vm2204
        %v2206 = vsel %vm2205, %v2198, %v2202
        %v2207 = vand.u32 2147483647, %v2138
        %vm2208 = vcmp.eq.f32.partialorder %v2207, 8.507059e+37
        %v2209 = vand.u32 %v2138, 2147483648
        %v2210 = vor.u32 1.1754944e-38, %v2209
        %v2211 = vsel %vm2208, %v2210, %v2206
        %v2212 = vmul.f32 1.0, %v2211
        %v2213 = vrcp.pop %v2139
        %v2214 = vmul.f32 %v2139, %v2213
        %v2215 = vsub.f32 1.0, %v2214
        %v2216 = vmul.f32 %v2213, %v2215
        %v2217 = vadd.f32 %v2213, %v2216
        %vm2218 = vweird.f32 %v2139
        %vm2219 = vweird.f32 %v2213
        %vm2220 = vmor %vm2218, %vm2219
        %v2221 = vsel %vm2220, %v2213, %v2217
        %v2222 = vand.u32 2147483647, %v2139
        %vm2223 = vcmp.eq.f32.partialorder %v2222, 8.507059e+37
        %v2224 = vand.u32 %v2139, 2147483648
        %v2225 = vor.u32 1.1754944e-38, %v2224
        %v2226 = vsel %vm2223, %v2225, %v2221
        %v2227 = vmul.f32 1.0, %v2226
        %v2228 = vrcp.pop %v2140
        %v2229 = vmul.f32 %v2140, %v2228
        %v2230 = vsub.f32 1.0, %v2229
        %v2231 = vmul.f32 %v2228, %v2230
        %v2232 = vadd.f32 %v2228, %v2231
        %vm2233 = vweird.f32 %v2140
        %vm2234 = vweird.f32 %v2228
        %vm2235 = vmor %vm2233, %vm2234
        %v2236 = vsel %vm2235, %v2228, %v2232
        %v2237 = vand.u32 2147483647, %v2140
        %vm2238 = vcmp.eq.f32.partialorder %v2237, 8.507059e+37
        %v2239 = vand.u32 %v2140, 2147483648
        %v2240 = vor.u32 1.1754944e-38, %v2239
        %v2241 = vsel %vm2238, %v2240, %v2236
        %v2242 = vmul.f32 1.0, %v2241
        %v2243 = vrcp.pop %v2141
        %v2244 = vmul.f32 %v2141, %v2243
        %v2245 = vsub.f32 1.0, %v2244
        %v2246 = vmul.f32 %v2243, %v2245
        %v2247 = vadd.f32 %v2243, %v2246
        %vm2248 = vweird.f32 %v2141
        %vm2249 = vweird.f32 %v2243
        %vm2250 = vmor %vm2248, %vm2249
        %v2251 = vsel %vm2250, %v2243, %v2247
        %v2252 = vand.u32 2147483647, %v2141
        %vm2253 = vcmp.eq.f32.partialorder %v2252, 8.507059e+37
        %v2254 = vand.u32 %v2141, 2147483648
        %v2255 = vor.u32 1.1754944e-38, %v2254
        %v2256 = vsel %vm2253, %v2255, %v2251
        %v2257 = vmul.f32 1.0, %v2256
        %v2258 = vrcp.pop %v2142
        %v2259 = vmul.f32 %v2142, %v2258
        %v2260 = vsub.f32 1.0, %v2259
        %v2261 = vmul.f32 %v2258, %v2260
        %v2262 = vadd.f32 %v2258, %v2261
        %vm2263 = vweird.f32 %v2142
        %vm2264 = vweird.f32 %v2258
        %vm2265 = vmor %vm2263, %vm2264
        %v2266 = vsel %vm2265, %v2258, %v2262
        %v2267 = vand.u32 2147483647, %v2142
        %vm2268 = vcmp.eq.f32.partialorder %v2267, 8.507059e+37
        %v2269 = vand.u32 %v2142, 2147483648
        %v2270 = vor.u32 1.1754944e-38, %v2269
        %v2271 = vsel %vm2268, %v2270, %v2266
        %v2272 = vmul.f32 1.0, %v2271
        %v2273 = vrcp.pop %v2143
        %v2274 = vmul.f32 %v2143, %v2273
        %v2275 = vsub.f32 1.0, %v2274
        %v2276 = vmul.f32 %v2273, %v2275
        %v2277 = vadd.f32 %v2273, %v2276
        %vm2278 = vweird.f32 %v2143
        %vm2279 = vweird.f32 %v2273
        %vm2280 = vmor %vm2278, %vm2279
        %v2281 = vsel %vm2280, %v2273, %v2277
        %v2282 = vand.u32 2147483647, %v2143
        %vm2283 = vcmp.eq.f32.partialorder %v2282, 8.507059e+37
        %v2284 = vand.u32 %v2143, 2147483648
        %v2285 = vor.u32 1.1754944e-38, %v2284
        %v2286 = vsel %vm2283, %v2285, %v2281
        %v2287 = vmul.f32 1.0, %v2286
        %v2288 = vrcp.pop %v2144
        %v2289 = vmul.f32 %v2144, %v2288
        %v2290 = vsub.f32 1.0, %v2289
        %v2291 = vmul.f32 %v2288, %v2290
        %v2292 = vadd.f32 %v2288, %v2291
        %vm2293 = vweird.f32 %v2144
        %vm2294 = vweird.f32 %v2288
        %vm2295 = vmor %vm2293, %vm2294
        %v2296 = vsel %vm2295, %v2288, %v2292
        %v2297 = vand.u32 2147483647, %v2144
        %vm2298 = vcmp.eq.f32.partialorder %v2297, 8.507059e+37
        %v2299 = vand.u32 %v2144, 2147483648
        %v2300 = vor.u32 1.1754944e-38, %v2299
        %v2301 = vsel %vm2298, %v2300, %v2296
        %v2302 = vmul.f32 1.0, %v2301
        %v2303 = vrcp.pop %v2145
        %v2304 = vmul.f32 %v2145, %v2303
        %v2305 = vsub.f32 1.0, %v2304
        %v2306 = vmul.f32 %v2303, %v2305
        %v2307 = vadd.f32 %v2303, %v2306
        %vm2308 = vweird.f32 %v2145
        %vm2309 = vweird.f32 %v2303
        %vm2310 = vmor %vm2308, %vm2309
        %v2311 = vsel %vm2310, %v2303, %v2307
        %v2312 = vand.u32 2147483647, %v2145
        %vm2313 = vcmp.eq.f32.partialorder %v2312, 8.507059e+37
        %v2314 = vand.u32 %v2145, 2147483648
        %v2315 = vor.u32 1.1754944e-38, %v2314
        %v2316 = vsel %vm2313, %v2315, %v2311
        %v2317 = vmul.f32 1.0, %v2316
        %v2318 = vrcp.pop %v2146
        %v2319 = vmul.f32 %v2146, %v2318
        %v2320 = vsub.f32 1.0, %v2319
        %v2321 = vmul.f32 %v2318, %v2320
        %v2322 = vadd.f32 %v2318, %v2321
        %vm2323 = vweird.f32 %v2146
        %vm2324 = vweird.f32 %v2318
        %vm2325 = vmor %vm2323, %vm2324
        %v2326 = vsel %vm2325, %v2318, %v2322
        %v2327 = vand.u32 2147483647, %v2146
        %vm2328 = vcmp.eq.f32.partialorder %v2327, 8.507059e+37
        %v2329 = vand.u32 %v2146, 2147483648
        %v2330 = vor.u32 1.1754944e-38, %v2329
        %v2331 = vsel %vm2328, %v2330, %v2326
        %v2332 = vmul.f32 1.0, %v2331
        %v2333 = vrcp.pop %v2147
        %v2334 = vmul.f32 %v2147, %v2333
        %v2335 = vsub.f32 1.0, %v2334
        %v2336 = vmul.f32 %v2333, %v2335
        %v2337 = vadd.f32 %v2333, %v2336
        %vm2338 = vweird.f32 %v2147
        %vm2339 = vweird.f32 %v2333
        %vm2340 = vmor %vm2338, %vm2339
        %v2341 = vsel %vm2340, %v2333, %v2337
        %v2342 = vand.u32 2147483647, %v2147
        %vm2343 = vcmp.eq.f32.partialorder %v2342, 8.507059e+37
        %v2344 = vand.u32 %v2147, 2147483648
        %v2345 = vor.u32 1.1754944e-38, %v2344
        %v2346 = vsel %vm2343, %v2345, %v2341
        %v2347 = vmul.f32 1.0, %v2346
        %v2348 = vrcp.pop %v2148
        %v2349 = vmul.f32 %v2148, %v2348
        %v2350 = vsub.f32 1.0, %v2349
        %v2351 = vmul.f32 %v2348, %v2350
        %v2352 = vadd.f32 %v2348, %v2351
        %vm2353 = vweird.f32 %v2148
        %vm2354 = vweird.f32 %v2348
        %vm2355 = vmor %vm2353, %vm2354
        %v2356 = vsel %vm2355, %v2348, %v2352
        %v2357 = vand.u32 2147483647, %v2148
        %vm2358 = vcmp.eq.f32.partialorder %v2357, 8.507059e+37
        %v2359 = vand.u32 %v2148, 2147483648
        %v2360 = vor.u32 1.1754944e-38, %v2359
        %v2361 = vsel %vm2358, %v2360, %v2356
        %v2362 = vmul.f32 1.0, %v2361
        %v2363 = vrcp.pop %v2149
        %v2364 = vmul.f32 %v2149, %v2363
        %v2365 = vsub.f32 1.0, %v2364
        %v2366 = vmul.f32 %v2363, %v2365
        %v2367 = vadd.f32 %v2363, %v2366
        %vm2368 = vweird.f32 %v2149
        %vm2369 = vweird.f32 %v2363
        %vm2370 = vmor %vm2368, %vm2369
        %v2371 = vsel %vm2370, %v2363, %v2367
        %v2372 = vand.u32 2147483647, %v2149
        %vm2373 = vcmp.eq.f32.partialorder %v2372, 8.507059e+37
        %v2374 = vand.u32 %v2149, 2147483648
        %v2375 = vor.u32 1.1754944e-38, %v2374
        %v2376 = vsel %vm2373, %v2375, %v2371
        %v2377 = vmul.f32 1.0, %v2376
        %v2378 = vrcp.pop %v2150
        %v2379 = vmul.f32 %v2150, %v2378
        %v2380 = vsub.f32 1.0, %v2379
        %v2381 = vmul.f32 %v2378, %v2380
        %v2382 = vadd.f32 %v2378, %v2381
        %vm2383 = vweird.f32 %v2150
        %vm2384 = vweird.f32 %v2378
        %vm2385 = vmor %vm2383, %vm2384
        %v2386 = vsel %vm2385, %v2378, %v2382
        %v2387 = vand.u32 2147483647, %v2150
        %vm2388 = vcmp.eq.f32.partialorder %v2387, 8.507059e+37
        %v2389 = vand.u32 %v2150, 2147483648
        %v2390 = vor.u32 1.1754944e-38, %v2389
        %v2391 = vsel %vm2388, %v2390, %v2386
        %v2392 = vmul.f32 1.0, %v2391
        %v2393 = vrcp.pop %v2151
        %v2394 = vmul.f32 %v2151, %v2393
        %v2395 = vsub.f32 1.0, %v2394
        %v2396 = vmul.f32 %v2393, %v2395
        %v2397 = vadd.f32 %v2393, %v2396
        %vm2398 = vweird.f32 %v2151
        %vm2399 = vweird.f32 %v2393
        %vm2400 = vmor %vm2398, %vm2399
        %v2401 = vsel %vm2400, %v2393, %v2397
        %v2402 = vand.u32 2147483647, %v2151
        %vm2403 = vcmp.eq.f32.partialorder %v2402, 8.507059e+37
        %v2404 = vand.u32 %v2151, 2147483648
        %v2405 = vor.u32 1.1754944e-38, %v2404
        %v2406 = vsel %vm2403, %v2405, %v2401
        %v2407 = vmul.f32 1.0, %v2406
        %v2408 = vrcp.pop %v2152
        %v2409 = vmul.f32 %v2152, %v2408
        %v2410 = vsub.f32 1.0, %v2409
        %v2411 = vmul.f32 %v2408, %v2410
        %v2412 = vadd.f32 %v2408, %v2411
        %vm2413 = vweird.f32 %v2152
        %vm2414 = vweird.f32 %v2408
        %vm2415 = vmor %vm2413, %vm2414
        %v2416 = vsel %vm2415, %v2408, %v2412
        %v2417 = vand.u32 2147483647, %v2152
        %vm2418 = vcmp.eq.f32.partialorder %v2417, 8.507059e+37
        %v2419 = vand.u32 %v2152, 2147483648
        %v2420 = vor.u32 1.1754944e-38, %v2419
        %v2421 = vsel %vm2418, %v2420, %v2416
        %v2422 = vmul.f32 1.0, %v2421
        %v2423 = vrcp.pop %v2153
        %v2424 = vmul.f32 %v2153, %v2423
        %v2425 = vsub.f32 1.0, %v2424
        %v2426 = vmul.f32 %v2423, %v2425
        %v2427 = vadd.f32 %v2423, %v2426
        %vm2428 = vweird.f32 %v2153
        %vm2429 = vweird.f32 %v2423
        %vm2430 = vmor %vm2428, %vm2429
        %v2431 = vsel %vm2430, %v2423, %v2427
        %v2432 = vand.u32 2147483647, %v2153
        %vm2433 = vcmp.eq.f32.partialorder %v2432, 8.507059e+37
        %v2434 = vand.u32 %v2153, 2147483648
        %v2435 = vor.u32 1.1754944e-38, %v2434
        %v2436 = vsel %vm2433, %v2435, %v2431
        %v2437 = vmul.f32 1.0, %v2436
        %v2438 = vrcp.pop %v2154
        %v2439 = vmul.f32 %v2154, %v2438
        %v2440 = vsub.f32 1.0, %v2439
        %v2441 = vmul.f32 %v2438, %v2440
        %v2442 = vadd.f32 %v2438, %v2441
        %vm2443 = vweird.f32 %v2154
        %vm2444 = vweird.f32 %v2438
        %vm2445 = vmor %vm2443, %vm2444
        %v2446 = vsel %vm2445, %v2438, %v2442
        %v2447 = vand.u32 2147483647, %v2154
        %vm2448 = vcmp.eq.f32.partialorder %v2447, 8.507059e+37
        %v2449 = vand.u32 %v2154, 2147483648
        %v2450 = vor.u32 1.1754944e-38, %v2449
        %v2451 = vsel %vm2448, %v2450, %v2446
        %v2452 = vmul.f32 1.0, %v2451
        %v2453 = vrcp.pop %v2155
        %v2454 = vmul.f32 %v2155, %v2453
        %v2455 = vsub.f32 1.0, %v2454
        %v2456 = vmul.f32 %v2453, %v2455
        %v2457 = vadd.f32 %v2453, %v2456
        %vm2458 = vweird.f32 %v2155
        %vm2459 = vweird.f32 %v2453
        %vm2460 = vmor %vm2458, %vm2459
        %v2461 = vsel %vm2460, %v2453, %v2457
        %v2462 = vand.u32 2147483647, %v2155
        %vm2463 = vcmp.eq.f32.partialorder %v2462, 8.507059e+37
        %v2464 = vand.u32 %v2155, 2147483648
        %v2465 = vor.u32 1.1754944e-38, %v2464
        %v2466 = vsel %vm2463, %v2465, %v2461
        %v2467 = vmul.f32 1.0, %v2466
        %v2468 = vrcp.pop %v2156
        %v2469 = vmul.f32 %v2156, %v2468
        %v2470 = vsub.f32 1.0, %v2469
        %v2471 = vmul.f32 %v2468, %v2470
        %v2472 = vadd.f32 %v2468, %v2471
        %vm2473 = vweird.f32 %v2156
        %vm2474 = vweird.f32 %v2468
        %vm2475 = vmor %vm2473, %vm2474
        %v2476 = vsel %vm2475, %v2468, %v2472
        %v2477 = vand.u32 2147483647, %v2156
        %vm2478 = vcmp.eq.f32.partialorder %v2477, 8.507059e+37
        %v2479 = vand.u32 %v2156, 2147483648
        %v2480 = vor.u32 1.1754944e-38, %v2479
        %v2481 = vsel %vm2478, %v2480, %v2476
        %v2482 = vmul.f32 1.0, %v2481
        %v2483 = vrcp.pop %v2157
        %v2484 = vmul.f32 %v2157, %v2483
        %v2485 = vsub.f32 1.0, %v2484
        %v2486 = vmul.f32 %v2483, %v2485
        %v2487 = vadd.f32 %v2483, %v2486
        %vm2488 = vweird.f32 %v2157
        %vm2489 = vweird.f32 %v2483
        %vm2490 = vmor %vm2488, %vm2489
        %v2491 = vsel %vm2490, %v2483, %v2487
        %v2492 = vand.u32 2147483647, %v2157
        %vm2493 = vcmp.eq.f32.partialorder %v2492, 8.507059e+37
        %v2494 = vand.u32 %v2157, 2147483648
        %v2495 = vor.u32 1.1754944e-38, %v2494
        %v2496 = vsel %vm2493, %v2495, %v2491
        %v2497 = vmul.f32 1.0, %v2496
        %v2498 = vrcp.pop %v2158
        %v2499 = vmul.f32 %v2158, %v2498
        %v2500 = vsub.f32 1.0, %v2499
        %v2501 = vmul.f32 %v2498, %v2500
        %v2502 = vadd.f32 %v2498, %v2501
        %vm2503 = vweird.f32 %v2158
        %vm2504 = vweird.f32 %v2498
        %vm2505 = vmor %vm2503, %vm2504
        %v2506 = vsel %vm2505, %v2498, %v2502
        %v2507 = vand.u32 2147483647, %v2158
        %vm2508 = vcmp.eq.f32.partialorder %v2507, 8.507059e+37
        %v2509 = vand.u32 %v2158, 2147483648
        %v2510 = vor.u32 1.1754944e-38, %v2509
        %v2511 = vsel %vm2508, %v2510, %v2506
        %v2512 = vmul.f32 1.0, %v2511
        %v2513 = vrcp.pop %v2159
        %v2514 = vmul.f32 %v2159, %v2513
        %v2515 = vsub.f32 1.0, %v2514
        %v2516 = vmul.f32 %v2513, %v2515
        %v2517 = vadd.f32 %v2513, %v2516
        %vm2518 = vweird.f32 %v2159
        %vm2519 = vweird.f32 %v2513
        %vm2520 = vmor %vm2518, %vm2519
        %v2521 = vsel %vm2520, %v2513, %v2517
        %v2522 = vand.u32 2147483647, %v2159
        %vm2523 = vcmp.eq.f32.partialorder %v2522, 8.507059e+37
        %v2524 = vand.u32 %v2159, 2147483648
        %v2525 = vor.u32 1.1754944e-38, %v2524
        %v2526 = vsel %vm2523, %v2525, %v2521
        %v2527 = vmul.f32 1.0, %v2526
        %v2528 = vrcp.pop %v2160
        %v2529 = vmul.f32 %v2160, %v2528
        %v2530 = vsub.f32 1.0, %v2529
        %v2531 = vmul.f32 %v2528, %v2530
        %v2532 = vadd.f32 %v2528, %v2531
        %vm2533 = vweird.f32 %v2160
        %vm2534 = vweird.f32 %v2528
        %vm2535 = vmor %vm2533, %vm2534
        %v2536 = vsel %vm2535, %v2528, %v2532
        %v2537 = vand.u32 2147483647, %v2160
        %vm2538 = vcmp.eq.f32.partialorder %v2537, 8.507059e+37
        %v2539 = vand.u32 %v2160, 2147483648
        %v2540 = vor.u32 1.1754944e-38, %v2539
        %v2541 = vsel %vm2538, %v2540, %v2536
        %v2542 = vmul.f32 1.0, %v2541
        %v2543 = vrcp.pop %v2161
        %v2544 = vmul.f32 %v2161, %v2543
        %v2545 = vsub.f32 1.0, %v2544
        %v2546 = vmul.f32 %v2543, %v2545
        %v2547 = vadd.f32 %v2543, %v2546
        %vm2548 = vweird.f32 %v2161
        %vm2549 = vweird.f32 %v2543
        %vm2550 = vmor %vm2548, %vm2549
        %v2551 = vsel %vm2550, %v2543, %v2547
        %v2552 = vand.u32 2147483647, %v2161
        %vm2553 = vcmp.eq.f32.partialorder %v2552, 8.507059e+37
        %v2554 = vand.u32 %v2161, 2147483648
        %v2555 = vor.u32 1.1754944e-38, %v2554
        %v2556 = vsel %vm2553, %v2555, %v2551
        %v2557 = vmul.f32 1.0, %v2556
        %v2558 = vrcp.pop %v2162
        %v2559 = vmul.f32 %v2162, %v2558
        %v2560 = vsub.f32 1.0, %v2559
        %v2561 = vmul.f32 %v2558, %v2560
        %v2562 = vadd.f32 %v2558, %v2561
        %vm2563 = vweird.f32 %v2162
        %vm2564 = vweird.f32 %v2558
        %vm2565 = vmor %vm2563, %vm2564
        %v2566 = vsel %vm2565, %v2558, %v2562
        %v2567 = vand.u32 2147483647, %v2162
        %vm2568 = vcmp.eq.f32.partialorder %v2567, 8.507059e+37
        %v2569 = vand.u32 %v2162, 2147483648
        %v2570 = vor.u32 1.1754944e-38, %v2569
        %v2571 = vsel %vm2568, %v2570, %v2566
        %v2572 = vmul.f32 1.0, %v2571
        %v2573 = vrcp.pop %v2163
        %v2574 = vmul.f32 %v2163, %v2573
        %v2575 = vsub.f32 1.0, %v2574
        %v2576 = vmul.f32 %v2573, %v2575
        %v2577 = vadd.f32 %v2573, %v2576
        %vm2578 = vweird.f32 %v2163
        %vm2579 = vweird.f32 %v2573
        %vm2580 = vmor %vm2578, %vm2579
        %v2581 = vsel %vm2580, %v2573, %v2577
        %v2582 = vand.u32 2147483647, %v2163
        %vm2583 = vcmp.eq.f32.partialorder %v2582, 8.507059e+37
        %v2584 = vand.u32 %v2163, 2147483648
        %v2585 = vor.u32 1.1754944e-38, %v2584
        %v2586 = vsel %vm2583, %v2585, %v2581
        %v2587 = vmul.f32 1.0, %v2586
        %v2588 = vrcp.pop %v2164
        %v2589 = vmul.f32 %v2164, %v2588
        %v2590 = vsub.f32 1.0, %v2589
        %v2591 = vmul.f32 %v2588, %v2590
        %v2592 = vadd.f32 %v2588, %v2591
        %vm2593 = vweird.f32 %v2164
        %vm2594 = vweird.f32 %v2588
        %vm2595 = vmor %vm2593, %vm2594
        %v2596 = vsel %vm2595, %v2588, %v2592
        %v2597 = vand.u32 2147483647, %v2164
        %vm2598 = vcmp.eq.f32.partialorder %v2597, 8.507059e+37
        %v2599 = vand.u32 %v2164, 2147483648
        %v2600 = vor.u32 1.1754944e-38, %v2599
        %v2601 = vsel %vm2598, %v2600, %v2596
        %v2602 = vmul.f32 1.0, %v2601
        %v2603 = vrcp.pop %v2165
        %v2604 = vmul.f32 %v2165, %v2603
        %v2605 = vsub.f32 1.0, %v2604
        %v2606 = vmul.f32 %v2603, %v2605
        %v2607 = vadd.f32 %v2603, %v2606
        %vm2608 = vweird.f32 %v2165
        %vm2609 = vweird.f32 %v2603
        %vm2610 = vmor %vm2608, %vm2609
        %v2611 = vsel %vm2610, %v2603, %v2607
        %v2612 = vand.u32 2147483647, %v2165
        %vm2613 = vcmp.eq.f32.partialorder %v2612, 8.507059e+37
        %v2614 = vand.u32 %v2165, 2147483648
        %v2615 = vor.u32 1.1754944e-38, %v2614
        %v2616 = vsel %vm2613, %v2615, %v2611
        %v2617 = vmul.f32 1.0, %v2616
        %v2618 = vrcp.pop %v2166
        %v2619 = vmul.f32 %v2166, %v2618
        %v2620 = vsub.f32 1.0, %v2619
        %v2621 = vmul.f32 %v2618, %v2620
        %v2622 = vadd.f32 %v2618, %v2621
        %vm2623 = vweird.f32 %v2166
        %vm2624 = vweird.f32 %v2618
        %vm2625 = vmor %vm2623, %vm2624
        %v2626 = vsel %vm2625, %v2618, %v2622
        %v2627 = vand.u32 2147483647, %v2166
        %vm2628 = vcmp.eq.f32.partialorder %v2627, 8.507059e+37
        %v2629 = vand.u32 %v2166, 2147483648
        %v2630 = vor.u32 1.1754944e-38, %v2629
        %v2631 = vsel %vm2628, %v2630, %v2626
        %v2632 = vmul.f32 1.0, %v2631
        %v2633 = vrcp.pop %v2167
        %v2634 = vmul.f32 %v2167, %v2633
        %v2635 = vsub.f32 1.0, %v2634
        %v2636 = vmul.f32 %v2633, %v2635
        %v2637 = vadd.f32 %v2633, %v2636
        %vm2638 = vweird.f32 %v2167
        %vm2639 = vweird.f32 %v2633
        %vm2640 = vmor %vm2638, %vm2639
        %v2641 = vsel %vm2640, %v2633, %v2637
        %v2642 = vand.u32 2147483647, %v2167
        %vm2643 = vcmp.eq.f32.partialorder %v2642, 8.507059e+37
        %v2644 = vand.u32 %v2167, 2147483648
        %v2645 = vor.u32 1.1754944e-38, %v2644
        %v2646 = vsel %vm2643, %v2645, %v2641
        %v2647 = vmul.f32 1.0, %v2646
        %v2648 = vmul.f32 %v2008, %v2182
        %v2649 = vmul.f32 %v2009, %v2197
        %v2650 = vmul.f32 %v2010, %v2212
        %v2651 = vmul.f32 %v2011, %v2227
        %v2652 = vmul.f32 %v2012, %v2242
        %v2653 = vmul.f32 %v2013, %v2257
        %v2654 = vmul.f32 %v2014, %v2272
        %v2655 = vmul.f32 %v2015, %v2287
        %v2656 = vmul.f32 %v2016, %v2302
        %v2657 = vmul.f32 %v2017, %v2317
        %v2658 = vmul.f32 %v2018, %v2332
        %v2659 = vmul.f32 %v2019, %v2347
        %v2660 = vmul.f32 %v2020, %v2362
        %v2661 = vmul.f32 %v2021, %v2377
        %v2662 = vmul.f32 %v2022, %v2392
        %v2663 = vmul.f32 %v2023, %v2407
        %v2664 = vmul.f32 %v2024, %v2422
        %v2665 = vmul.f32 %v2025, %v2437
        %v2666 = vmul.f32 %v2026, %v2452
        %v2667 = vmul.f32 %v2027, %v2467
        %v2668 = vmul.f32 %v2028, %v2482
        %v2669 = vmul.f32 %v2029, %v2497
        %v2670 = vmul.f32 %v2030, %v2512
        %v2671 = vmul.f32 %v2031, %v2527
        %v2672 = vmul.f32 %v2032, %v2542
        %v2673 = vmul.f32 %v2033, %v2557
        %v2674 = vmul.f32 %v2034, %v2572
        %v2675 = vmul.f32 %v2035, %v2587
        %v2676 = vmul.f32 %v2036, %v2602
        %v2677 = vmul.f32 %v2037, %v2617
        %v2678 = vmul.f32 %v2038, %v2632
        %v2679 = vmul.f32 %v2039, %v2647
        %v2680 = vld [vmem:[%s7] sm:$0xff]
        %v2681 = vld [vmem:[%s7 + $0x8] sm:$0xff]
        %v2682 = vld [vmem:[%s7 + $0x10] sm:$0xff]
        %v2683 = vld [vmem:[%s7 + $0x18] sm:$0xff]
        %v2684 = vld [vmem:[%s7 + $0x20] sm:$0xff]
        %v2685 = vld [vmem:[%s7 + $0x28] sm:$0xff]
        %v2686 = vld [vmem:[%s7 + $0x30] sm:$0xff]
        %v2687 = vld [vmem:[%s7 + $0x38] sm:$0xff]
        %v2688 = vld [vmem:[%s7 + $0x40] sm:$0xff]
        %v2689 = vld [vmem:[%s7 + $0x48] sm:$0xff]
        %v2690 = vld [vmem:[%s7 + $0x50] sm:$0xff]
        %v2691 = vld [vmem:[%s7 + $0x58] sm:$0xff]
        %v2692 = vld [vmem:[%s7 + $0x60] sm:$0xff]
        %v2693 = vld [vmem:[%s7 + $0x68] sm:$0xff]
        %v2694 = vld [vmem:[%s7 + $0x70] sm:$0xff]
        %v2695 = vld [vmem:[%s7 + $0x78] sm:$0xff]
        %v2696 = vld [vmem:[%s8] sm:$0x1]
        %v2698 = vperm.slane %v2696, 0
        %2700 = vmatpush.msra.mxu0 %v2695
        %2701 = vmatpush.msra.mxu0 %v2694
        %2702 = vmatpush.msra.mxu0 %v2693
        %2703 = vmatpush.msra.mxu0 %v2692
        %2704 = vmatpush.msra.mxu0 %v2691
        %2705 = vmatpush.msra.mxu0 %v2690
        %2706 = vmatpush.msra.mxu0 %v2689
        %2707 = vmatpush.msra.mxu0 %v2688
        %2708 = vmatpush.msra.mxu0 %v2687
        %2709 = vmatpush.msra.mxu0 %v2686
        %2710 = vmatpush.msra.mxu0 %v2685
        %2711 = vmatpush.msra.mxu0 %v2684
        %2712 = vmatpush.msra.mxu0 %v2683
        %2713 = vmatpush.msra.mxu0 %v2682
        %2714 = vmatpush.msra.mxu0 %v2681
        %2715 = vmatpush.msra.mxu0 %v2680
        %2716 = vmatmul.f32.gmra.mxu0 %v2648
        %v2717 = vpop.f32.mrf.mxu0
        %v2718 = vadd.f32 %v2698, %v2717
        %2719 = vmatmul.f32.gmra.mxu0 %v2649
        %v2720 = vpop.f32.mrf.mxu0
        %v2721 = vadd.f32 %v2698, %v2720
        %2722 = vmatmul.f32.gmra.mxu0 %v2650
        %v2723 = vpop.f32.mrf.mxu0
        %v2724 = vadd.f32 %v2698, %v2723
        %2725 = vmatmul.f32.gmra.mxu0 %v2651
        %v2726 = vpop.f32.mrf.mxu0
        %v2727 = vadd.f32 %v2698, %v2726
        %2728 = vmatmul.f32.gmra.mxu0 %v2652
        %v2729 = vpop.f32.mrf.mxu0
        %v2730 = vadd.f32 %v2698, %v2729
        %2731 = vmatmul.f32.gmra.mxu0 %v2653
        %v2732 = vpop.f32.mrf.mxu0
        %v2733 = vadd.f32 %v2698, %v2732
        %2734 = vmatmul.f32.gmra.mxu0 %v2654
        %v2735 = vpop.f32.mrf.mxu0
        %v2736 = vadd.f32 %v2698, %v2735
        %2737 = vmatmul.f32.gmra.mxu0 %v2655
        %v2738 = vpop.f32.mrf.mxu0
        %v2739 = vadd.f32 %v2698, %v2738
        %2740 = vmatmul.f32.gmra.mxu0 %v2656
        %v2741 = vpop.f32.mrf.mxu0
        %v2742 = vadd.f32 %v2698, %v2741
        %2743 = vmatmul.f32.gmra.mxu0 %v2657
        %v2744 = vpop.f32.mrf.mxu0
        %v2745 = vadd.f32 %v2698, %v2744
        %2746 = vmatmul.f32.gmra.mxu0 %v2658
        %v2747 = vpop.f32.mrf.mxu0
        %v2748 = vadd.f32 %v2698, %v2747
        %2749 = vmatmul.f32.gmra.mxu0 %v2659
        %v2750 = vpop.f32.mrf.mxu0
        %v2751 = vadd.f32 %v2698, %v2750
        %2752 = vmatmul.f32.gmra.mxu0 %v2660
        %v2753 = vpop.f32.mrf.mxu0
        %v2754 = vadd.f32 %v2698, %v2753
        %2755 = vmatmul.f32.gmra.mxu0 %v2661
        %v2756 = vpop.f32.mrf.mxu0
        %v2757 = vadd.f32 %v2698, %v2756
        %2758 = vmatmul.f32.gmra.mxu0 %v2662
        %v2759 = vpop.f32.mrf.mxu0
        %v2760 = vadd.f32 %v2698, %v2759
        %2761 = vmatmul.f32.gmra.mxu0 %v2663
        %v2762 = vpop.f32.mrf.mxu0
        %v2763 = vadd.f32 %v2698, %v2762
        %2764 = vmatmul.f32.gmra.mxu0 %v2664
        %v2765 = vpop.f32.mrf.mxu0
        %v2766 = vadd.f32 %v2698, %v2765
        %2767 = vmatmul.f32.gmra.mxu0 %v2665
        %v2768 = vpop.f32.mrf.mxu0
        %v2769 = vadd.f32 %v2698, %v2768
        %2770 = vmatmul.f32.gmra.mxu0 %v2666
        %v2771 = vpop.f32.mrf.mxu0
        %v2772 = vadd.f32 %v2698, %v2771
        %2773 = vmatmul.f32.gmra.mxu0 %v2667
        %v2774 = vpop.f32.mrf.mxu0
        %v2775 = vadd.f32 %v2698, %v2774
        %2776 = vmatmul.f32.gmra.mxu0 %v2668
        %v2777 = vpop.f32.mrf.mxu0
        %v2778 = vadd.f32 %v2698, %v2777
        %2779 = vmatmul.f32.gmra.mxu0 %v2669
        %v2780 = vpop.f32.mrf.mxu0
        %v2781 = vadd.f32 %v2698, %v2780
        %2782 = vmatmul.f32.gmra.mxu0 %v2670
        %v2783 = vpop.f32.mrf.mxu0
        %v2784 = vadd.f32 %v2698, %v2783
        %2785 = vmatmul.f32.gmra.mxu0 %v2671
        %v2786 = vpop.f32.mrf.mxu0
        %v2787 = vadd.f32 %v2698, %v2786
        %2788 = vmatmul.f32.gmra.mxu0 %v2672
        %v2789 = vpop.f32.mrf.mxu0
        %v2790 = vadd.f32 %v2698, %v2789
        %2791 = vmatmul.f32.gmra.mxu0 %v2673
        %v2792 = vpop.f32.mrf.mxu0
        %v2793 = vadd.f32 %v2698, %v2792
        %2794 = vmatmul.f32.gmra.mxu0 %v2674
        %v2795 = vpop.f32.mrf.mxu0
        %v2796 = vadd.f32 %v2698, %v2795
        %2797 = vmatmul.f32.gmra.mxu0 %v2675
        %v2798 = vpop.f32.mrf.mxu0
        %v2799 = vadd.f32 %v2698, %v2798
        %2800 = vmatmul.f32.gmra.mxu0 %v2676
        %v2801 = vpop.f32.mrf.mxu0
        %v2802 = vadd.f32 %v2698, %v2801
        %2803 = vmatmul.f32.gmra.mxu0 %v2677
        %v2804 = vpop.f32.mrf.mxu0
        %v2805 = vadd.f32 %v2698, %v2804
        %2806 = vmatmul.f32.gmra.mxu0 %v2678
        %v2807 = vpop.f32.mrf.mxu0
        %v2808 = vadd.f32 %v2698, %v2807
        %2809 = vmatmul.f32.gmra.mxu0 %v2679
        %v2810 = vpop.f32.mrf.mxu0
        %v2811 = vadd.f32 %v2698, %v2810
        %2812 = vdwg.mxu0
        %v2813 = vxor.u32 %v2718, 2147483648
        %v2814 = vxor.u32 %v2721, 2147483648
        %v2815 = vxor.u32 %v2724, 2147483648
        %v2816 = vxor.u32 %v2727, 2147483648
        %v2817 = vxor.u32 %v2730, 2147483648
        %v2818 = vxor.u32 %v2733, 2147483648
        %v2819 = vxor.u32 %v2736, 2147483648
        %v2820 = vxor.u32 %v2739, 2147483648
        %v2821 = vxor.u32 %v2742, 2147483648
        %v2822 = vxor.u32 %v2745, 2147483648
        %v2823 = vxor.u32 %v2748, 2147483648
        %v2824 = vxor.u32 %v2751, 2147483648
        %v2825 = vxor.u32 %v2754, 2147483648
        %v2826 = vxor.u32 %v2757, 2147483648
        %v2827 = vxor.u32 %v2760, 2147483648
        %v2828 = vxor.u32 %v2763, 2147483648
        %v2829 = vxor.u32 %v2766, 2147483648
        %v2830 = vxor.u32 %v2769, 2147483648
        %v2831 = vxor.u32 %v2772, 2147483648
        %v2832 = vxor.u32 %v2775, 2147483648
        %v2833 = vxor.u32 %v2778, 2147483648
        %v2834 = vxor.u32 %v2781, 2147483648
        %v2835 = vxor.u32 %v2784, 2147483648
        %v2836 = vxor.u32 %v2787, 2147483648
        %v2837 = vxor.u32 %v2790, 2147483648
        %v2838 = vxor.u32 %v2793, 2147483648
        %v2839 = vxor.u32 %v2796, 2147483648
        %v2840 = vxor.u32 %v2799, 2147483648
        %v2841 = vxor.u32 %v2802, 2147483648
        %v2842 = vxor.u32 %v2805, 2147483648
        %v2843 = vxor.u32 %v2808, 2147483648
        %v2844 = vxor.u32 %v2811, 2147483648
        %v2845 = vmul.f32 %v2813, 1.442695
        %v2846 = vpow.pop %v2845
        %v2847 = vmul.f32 %v2814, 1.442695
        %v2848 = vpow.pop %v2847
        %v2849 = vmul.f32 %v2815, 1.442695
        %v2850 = vpow.pop %v2849
        %v2851 = vmul.f32 %v2816, 1.442695
        %v2852 = vpow.pop %v2851
        %v2853 = vmul.f32 %v2817, 1.442695
        %v2854 = vpow.pop %v2853
        %v2855 = vmul.f32 %v2818, 1.442695
        %v2856 = vpow.pop %v2855
        %v2857 = vmul.f32 %v2819, 1.442695
        %v2858 = vpow.pop %v2857
        %v2859 = vmul.f32 %v2820, 1.442695
        %v2860 = vpow.pop %v2859
        %v2861 = vmul.f32 %v2821, 1.442695
        %v2862 = vpow.pop %v2861
        %v2863 = vmul.f32 %v2822, 1.442695
        %v2864 = vpow.pop %v2863
        %v2865 = vmul.f32 %v2823, 1.442695
        %v2866 = vpow.pop %v2865
        %v2867 = vmul.f32 %v2824, 1.442695
        %v2868 = vpow.pop %v2867
        %v2869 = vmul.f32 %v2825, 1.442695
        %v2870 = vpow.pop %v2869
        %v2871 = vmul.f32 %v2826, 1.442695
        %v2872 = vpow.pop %v2871
        %v2873 = vmul.f32 %v2827, 1.442695
        %v2874 = vpow.pop %v2873
        %v2875 = vmul.f32 %v2828, 1.442695
        %v2876 = vpow.pop %v2875
        %v2877 = vmul.f32 %v2829, 1.442695
        %v2878 = vpow.pop %v2877
        %v2879 = vmul.f32 %v2830, 1.442695
        %v2880 = vpow.pop %v2879
        %v2881 = vmul.f32 %v2831, 1.442695
        %v2882 = vpow.pop %v2881
        %v2883 = vmul.f32 %v2832, 1.442695
        %v2884 = vpow.pop %v2883
        %v2885 = vmul.f32 %v2833, 1.442695
        %v2886 = vpow.pop %v2885
        %v2887 = vmul.f32 %v2834, 1.442695
        %v2888 = vpow.pop %v2887
        %v2889 = vmul.f32 %v2835, 1.442695
        %v2890 = vpow.pop %v2889
        %v2891 = vmul.f32 %v2836, 1.442695
        %v2892 = vpow.pop %v2891
        %v2893 = vmul.f32 %v2837, 1.442695
        %v2894 = vpow.pop %v2893
        %v2895 = vmul.f32 %v2838, 1.442695
        %v2896 = vpow.pop %v2895
        %v2897 = vmul.f32 %v2839, 1.442695
        %v2898 = vpow.pop %v2897
        %v2899 = vmul.f32 %v2840, 1.442695
        %v2900 = vpow.pop %v2899
        %v2901 = vmul.f32 %v2841, 1.442695
        %v2902 = vpow.pop %v2901
        %v2903 = vmul.f32 %v2842, 1.442695
        %v2904 = vpow.pop %v2903
        %v2905 = vmul.f32 %v2843, 1.442695
        %v2906 = vpow.pop %v2905
        %v2907 = vmul.f32 %v2844, 1.442695
        %v2908 = vpow.pop %v2907
        %v2909 = vadd.f32 %v2846, 1.0
        %v2910 = vadd.f32 %v2848, 1.0
        %v2911 = vadd.f32 %v2850, 1.0
        %v2912 = vadd.f32 %v2852, 1.0
        %v2913 = vadd.f32 %v2854, 1.0
        %v2914 = vadd.f32 %v2856, 1.0
        %v2915 = vadd.f32 %v2858, 1.0
        %v2916 = vadd.f32 %v2860, 1.0
        %v2917 = vadd.f32 %v2862, 1.0
        %v2918 = vadd.f32 %v2864, 1.0
        %v2919 = vadd.f32 %v2866, 1.0
        %v2920 = vadd.f32 %v2868, 1.0
        %v2921 = vadd.f32 %v2870, 1.0
        %v2922 = vadd.f32 %v2872, 1.0
        %v2923 = vadd.f32 %v2874, 1.0
        %v2924 = vadd.f32 %v2876, 1.0
        %v2925 = vadd.f32 %v2878, 1.0
        %v2926 = vadd.f32 %v2880, 1.0
        %v2927 = vadd.f32 %v2882, 1.0
        %v2928 = vadd.f32 %v2884, 1.0
        %v2929 = vadd.f32 %v2886, 1.0
        %v2930 = vadd.f32 %v2888, 1.0
        %v2931 = vadd.f32 %v2890, 1.0
        %v2932 = vadd.f32 %v2892, 1.0
        %v2933 = vadd.f32 %v2894, 1.0
        %v2934 = vadd.f32 %v2896, 1.0
        %v2935 = vadd.f32 %v2898, 1.0
        %v2936 = vadd.f32 %v2900, 1.0
        %v2937 = vadd.f32 %v2902, 1.0
        %v2938 = vadd.f32 %v2904, 1.0
        %v2939 = vadd.f32 %v2906, 1.0
        %v2940 = vadd.f32 %v2908, 1.0
        %v2941 = vrcp.pop %v2909
        %v2942 = vmul.f32 %v2909, %v2941
        %v2943 = vsub.f32 1.0, %v2942
        %v2944 = vmul.f32 %v2941, %v2943
        %v2945 = vadd.f32 %v2941, %v2944
        %vm2946 = vweird.f32 %v2909
        %vm2947 = vweird.f32 %v2941
        %vm2948 = vmor %vm2946, %vm2947
        %v2949 = vsel %vm2948, %v2941, %v2945
        %v2950 = vand.u32 2147483647, %v2909
        %vm2951 = vcmp.eq.f32.partialorder %v2950, 8.507059e+37
        %v2952 = vand.u32 %v2909, 2147483648
        %v2953 = vor.u32 1.1754944e-38, %v2952
        %v2954 = vsel %vm2951, %v2953, %v2949
        %v2955 = vmul.f32 1.0, %v2954
        %v2956 = vrcp.pop %v2910
        %v2957 = vmul.f32 %v2910, %v2956
        %v2958 = vsub.f32 1.0, %v2957
        %v2959 = vmul.f32 %v2956, %v2958
        %v2960 = vadd.f32 %v2956, %v2959
        %vm2961 = vweird.f32 %v2910
        %vm2962 = vweird.f32 %v2956
        %vm2963 = vmor %vm2961, %vm2962
        %v2964 = vsel %vm2963, %v2956, %v2960
        %v2965 = vand.u32 2147483647, %v2910
        %vm2966 = vcmp.eq.f32.partialorder %v2965, 8.507059e+37
        %v2967 = vand.u32 %v2910, 2147483648
        %v2968 = vor.u32 1.1754944e-38, %v2967
        %v2969 = vsel %vm2966, %v2968, %v2964
        %v2970 = vmul.f32 1.0, %v2969
        %v2971 = vrcp.pop %v2911
        %v2972 = vmul.f32 %v2911, %v2971
        %v2973 = vsub.f32 1.0, %v2972
        %v2974 = vmul.f32 %v2971, %v2973
        %v2975 = vadd.f32 %v2971, %v2974
        %vm2976 = vweird.f32 %v2911
        %vm2977 = vweird.f32 %v2971
        %vm2978 = vmor %vm2976, %vm2977
        %v2979 = vsel %vm2978, %v2971, %v2975
        %v2980 = vand.u32 2147483647, %v2911
        %vm2981 = vcmp.eq.f32.partialorder %v2980, 8.507059e+37
        %v2982 = vand.u32 %v2911, 2147483648
        %v2983 = vor.u32 1.1754944e-38, %v2982
        %v2984 = vsel %vm2981, %v2983, %v2979
        %v2985 = vmul.f32 1.0, %v2984
        %v2986 = vrcp.pop %v2912
        %v2987 = vmul.f32 %v2912, %v2986
        %v2988 = vsub.f32 1.0, %v2987
        %v2989 = vmul.f32 %v2986, %v2988
        %v2990 = vadd.f32 %v2986, %v2989
        %vm2991 = vweird.f32 %v2912
        %vm2992 = vweird.f32 %v2986
        %vm2993 = vmor %vm2991, %vm2992
        %v2994 = vsel %vm2993, %v2986, %v2990
        %v2995 = vand.u32 2147483647, %v2912
        %vm2996 = vcmp.eq.f32.partialorder %v2995, 8.507059e+37
        %v2997 = vand.u32 %v2912, 2147483648
        %v2998 = vor.u32 1.1754944e-38, %v2997
        %v2999 = vsel %vm2996, %v2998, %v2994
        %v3000 = vmul.f32 1.0, %v2999
        %v3001 = vrcp.pop %v2913
        %v3002 = vmul.f32 %v2913, %v3001
        %v3003 = vsub.f32 1.0, %v3002
        %v3004 = vmul.f32 %v3001, %v3003
        %v3005 = vadd.f32 %v3001, %v3004
        %vm3006 = vweird.f32 %v2913
        %vm3007 = vweird.f32 %v3001
        %vm3008 = vmor %vm3006, %vm3007
        %v3009 = vsel %vm3008, %v3001, %v3005
        %v3010 = vand.u32 2147483647, %v2913
        %vm3011 = vcmp.eq.f32.partialorder %v3010, 8.507059e+37
        %v3012 = vand.u32 %v2913, 2147483648
        %v3013 = vor.u32 1.1754944e-38, %v3012
        %v3014 = vsel %vm3011, %v3013, %v3009
        %v3015 = vmul.f32 1.0, %v3014
        %v3016 = vrcp.pop %v2914
        %v3017 = vmul.f32 %v2914, %v3016
        %v3018 = vsub.f32 1.0, %v3017
        %v3019 = vmul.f32 %v3016, %v3018
        %v3020 = vadd.f32 %v3016, %v3019
        %vm3021 = vweird.f32 %v2914
        %vm3022 = vweird.f32 %v3016
        %vm3023 = vmor %vm3021, %vm3022
        %v3024 = vsel %vm3023, %v3016, %v3020
        %v3025 = vand.u32 2147483647, %v2914
        %vm3026 = vcmp.eq.f32.partialorder %v3025, 8.507059e+37
        %v3027 = vand.u32 %v2914, 2147483648
        %v3028 = vor.u32 1.1754944e-38, %v3027
        %v3029 = vsel %vm3026, %v3028, %v3024
        %v3030 = vmul.f32 1.0, %v3029
        %v3031 = vrcp.pop %v2915
        %v3032 = vmul.f32 %v2915, %v3031
        %v3033 = vsub.f32 1.0, %v3032
        %v3034 = vmul.f32 %v3031, %v3033
        %v3035 = vadd.f32 %v3031, %v3034
        %vm3036 = vweird.f32 %v2915
        %vm3037 = vweird.f32 %v3031
        %vm3038 = vmor %vm3036, %vm3037
        %v3039 = vsel %vm3038, %v3031, %v3035
        %v3040 = vand.u32 2147483647, %v2915
        %vm3041 = vcmp.eq.f32.partialorder %v3040, 8.507059e+37
        %v3042 = vand.u32 %v2915, 2147483648
        %v3043 = vor.u32 1.1754944e-38, %v3042
        %v3044 = vsel %vm3041, %v3043, %v3039
        %v3045 = vmul.f32 1.0, %v3044
        %v3046 = vrcp.pop %v2916
        %v3047 = vmul.f32 %v2916, %v3046
        %v3048 = vsub.f32 1.0, %v3047
        %v3049 = vmul.f32 %v3046, %v3048
        %v3050 = vadd.f32 %v3046, %v3049
        %vm3051 = vweird.f32 %v2916
        %vm3052 = vweird.f32 %v3046
        %vm3053 = vmor %vm3051, %vm3052
        %v3054 = vsel %vm3053, %v3046, %v3050
        %v3055 = vand.u32 2147483647, %v2916
        %vm3056 = vcmp.eq.f32.partialorder %v3055, 8.507059e+37
        %v3057 = vand.u32 %v2916, 2147483648
        %v3058 = vor.u32 1.1754944e-38, %v3057
        %v3059 = vsel %vm3056, %v3058, %v3054
        %v3060 = vmul.f32 1.0, %v3059
        %v3061 = vrcp.pop %v2917
        %v3062 = vmul.f32 %v2917, %v3061
        %v3063 = vsub.f32 1.0, %v3062
        %v3064 = vmul.f32 %v3061, %v3063
        %v3065 = vadd.f32 %v3061, %v3064
        %vm3066 = vweird.f32 %v2917
        %vm3067 = vweird.f32 %v3061
        %vm3068 = vmor %vm3066, %vm3067
        %v3069 = vsel %vm3068, %v3061, %v3065
        %v3070 = vand.u32 2147483647, %v2917
        %vm3071 = vcmp.eq.f32.partialorder %v3070, 8.507059e+37
        %v3072 = vand.u32 %v2917, 2147483648
        %v3073 = vor.u32 1.1754944e-38, %v3072
        %v3074 = vsel %vm3071, %v3073, %v3069
        %v3075 = vmul.f32 1.0, %v3074
        %v3076 = vrcp.pop %v2918
        %v3077 = vmul.f32 %v2918, %v3076
        %v3078 = vsub.f32 1.0, %v3077
        %v3079 = vmul.f32 %v3076, %v3078
        %v3080 = vadd.f32 %v3076, %v3079
        %vm3081 = vweird.f32 %v2918
        %vm3082 = vweird.f32 %v3076
        %vm3083 = vmor %vm3081, %vm3082
        %v3084 = vsel %vm3083, %v3076, %v3080
        %v3085 = vand.u32 2147483647, %v2918
        %vm3086 = vcmp.eq.f32.partialorder %v3085, 8.507059e+37
        %v3087 = vand.u32 %v2918, 2147483648
        %v3088 = vor.u32 1.1754944e-38, %v3087
        %v3089 = vsel %vm3086, %v3088, %v3084
        %v3090 = vmul.f32 1.0, %v3089
        %v3091 = vrcp.pop %v2919
        %v3092 = vmul.f32 %v2919, %v3091
        %v3093 = vsub.f32 1.0, %v3092
        %v3094 = vmul.f32 %v3091, %v3093
        %v3095 = vadd.f32 %v3091, %v3094
        %vm3096 = vweird.f32 %v2919
        %vm3097 = vweird.f32 %v3091
        %vm3098 = vmor %vm3096, %vm3097
        %v3099 = vsel %vm3098, %v3091, %v3095
        %v3100 = vand.u32 2147483647, %v2919
        %vm3101 = vcmp.eq.f32.partialorder %v3100, 8.507059e+37
        %v3102 = vand.u32 %v2919, 2147483648
        %v3103 = vor.u32 1.1754944e-38, %v3102
        %v3104 = vsel %vm3101, %v3103, %v3099
        %v3105 = vmul.f32 1.0, %v3104
        %v3106 = vrcp.pop %v2920
        %v3107 = vmul.f32 %v2920, %v3106
        %v3108 = vsub.f32 1.0, %v3107
        %v3109 = vmul.f32 %v3106, %v3108
        %v3110 = vadd.f32 %v3106, %v3109
        %vm3111 = vweird.f32 %v2920
        %vm3112 = vweird.f32 %v3106
        %vm3113 = vmor %vm3111, %vm3112
        %v3114 = vsel %vm3113, %v3106, %v3110
        %v3115 = vand.u32 2147483647, %v2920
        %vm3116 = vcmp.eq.f32.partialorder %v3115, 8.507059e+37
        %v3117 = vand.u32 %v2920, 2147483648
        %v3118 = vor.u32 1.1754944e-38, %v3117
        %v3119 = vsel %vm3116, %v3118, %v3114
        %v3120 = vmul.f32 1.0, %v3119
        %v3121 = vrcp.pop %v2921
        %v3122 = vmul.f32 %v2921, %v3121
        %v3123 = vsub.f32 1.0, %v3122
        %v3124 = vmul.f32 %v3121, %v3123
        %v3125 = vadd.f32 %v3121, %v3124
        %vm3126 = vweird.f32 %v2921
        %vm3127 = vweird.f32 %v3121
        %vm3128 = vmor %vm3126, %vm3127
        %v3129 = vsel %vm3128, %v3121, %v3125
        %v3130 = vand.u32 2147483647, %v2921
        %vm3131 = vcmp.eq.f32.partialorder %v3130, 8.507059e+37
        %v3132 = vand.u32 %v2921, 2147483648
        %v3133 = vor.u32 1.1754944e-38, %v3132
        %v3134 = vsel %vm3131, %v3133, %v3129
        %v3135 = vmul.f32 1.0, %v3134
        %v3136 = vrcp.pop %v2922
        %v3137 = vmul.f32 %v2922, %v3136
        %v3138 = vsub.f32 1.0, %v3137
        %v3139 = vmul.f32 %v3136, %v3138
        %v3140 = vadd.f32 %v3136, %v3139
        %vm3141 = vweird.f32 %v2922
        %vm3142 = vweird.f32 %v3136
        %vm3143 = vmor %vm3141, %vm3142
        %v3144 = vsel %vm3143, %v3136, %v3140
        %v3145 = vand.u32 2147483647, %v2922
        %vm3146 = vcmp.eq.f32.partialorder %v3145, 8.507059e+37
        %v3147 = vand.u32 %v2922, 2147483648
        %v3148 = vor.u32 1.1754944e-38, %v3147
        %v3149 = vsel %vm3146, %v3148, %v3144
        %v3150 = vmul.f32 1.0, %v3149
        %v3151 = vrcp.pop %v2923
        %v3152 = vmul.f32 %v2923, %v3151
        %v3153 = vsub.f32 1.0, %v3152
        %v3154 = vmul.f32 %v3151, %v3153
        %v3155 = vadd.f32 %v3151, %v3154
        %vm3156 = vweird.f32 %v2923
        %vm3157 = vweird.f32 %v3151
        %vm3158 = vmor %vm3156, %vm3157
        %v3159 = vsel %vm3158, %v3151, %v3155
        %v3160 = vand.u32 2147483647, %v2923
        %vm3161 = vcmp.eq.f32.partialorder %v3160, 8.507059e+37
        %v3162 = vand.u32 %v2923, 2147483648
        %v3163 = vor.u32 1.1754944e-38, %v3162
        %v3164 = vsel %vm3161, %v3163, %v3159
        %v3165 = vmul.f32 1.0, %v3164
        %v3166 = vrcp.pop %v2924
        %v3167 = vmul.f32 %v2924, %v3166
        %v3168 = vsub.f32 1.0, %v3167
        %v3169 = vmul.f32 %v3166, %v3168
        %v3170 = vadd.f32 %v3166, %v3169
        %vm3171 = vweird.f32 %v2924
        %vm3172 = vweird.f32 %v3166
        %vm3173 = vmor %vm3171, %vm3172
        %v3174 = vsel %vm3173, %v3166, %v3170
        %v3175 = vand.u32 2147483647, %v2924
        %vm3176 = vcmp.eq.f32.partialorder %v3175, 8.507059e+37
        %v3177 = vand.u32 %v2924, 2147483648
        %v3178 = vor.u32 1.1754944e-38, %v3177
        %v3179 = vsel %vm3176, %v3178, %v3174
        %v3180 = vmul.f32 1.0, %v3179
        %v3181 = vrcp.pop %v2925
        %v3182 = vmul.f32 %v2925, %v3181
        %v3183 = vsub.f32 1.0, %v3182
        %v3184 = vmul.f32 %v3181, %v3183
        %v3185 = vadd.f32 %v3181, %v3184
        %vm3186 = vweird.f32 %v2925
        %vm3187 = vweird.f32 %v3181
        %vm3188 = vmor %vm3186, %vm3187
        %v3189 = vsel %vm3188, %v3181, %v3185
        %v3190 = vand.u32 2147483647, %v2925
        %vm3191 = vcmp.eq.f32.partialorder %v3190, 8.507059e+37
        %v3192 = vand.u32 %v2925, 2147483648
        %v3193 = vor.u32 1.1754944e-38, %v3192
        %v3194 = vsel %vm3191, %v3193, %v3189
        %v3195 = vmul.f32 1.0, %v3194
        %v3196 = vrcp.pop %v2926
        %v3197 = vmul.f32 %v2926, %v3196
        %v3198 = vsub.f32 1.0, %v3197
        %v3199 = vmul.f32 %v3196, %v3198
        %v3200 = vadd.f32 %v3196, %v3199
        %vm3201 = vweird.f32 %v2926
        %vm3202 = vweird.f32 %v3196
        %vm3203 = vmor %vm3201, %vm3202
        %v3204 = vsel %vm3203, %v3196, %v3200
        %v3205 = vand.u32 2147483647, %v2926
        %vm3206 = vcmp.eq.f32.partialorder %v3205, 8.507059e+37
        %v3207 = vand.u32 %v2926, 2147483648
        %v3208 = vor.u32 1.1754944e-38, %v3207
        %v3209 = vsel %vm3206, %v3208, %v3204
        %v3210 = vmul.f32 1.0, %v3209
        %v3211 = vrcp.pop %v2927
        %v3212 = vmul.f32 %v2927, %v3211
        %v3213 = vsub.f32 1.0, %v3212
        %v3214 = vmul.f32 %v3211, %v3213
        %v3215 = vadd.f32 %v3211, %v3214
        %vm3216 = vweird.f32 %v2927
        %vm3217 = vweird.f32 %v3211
        %vm3218 = vmor %vm3216, %vm3217
        %v3219 = vsel %vm3218, %v3211, %v3215
        %v3220 = vand.u32 2147483647, %v2927
        %vm3221 = vcmp.eq.f32.partialorder %v3220, 8.507059e+37
        %v3222 = vand.u32 %v2927, 2147483648
        %v3223 = vor.u32 1.1754944e-38, %v3222
        %v3224 = vsel %vm3221, %v3223, %v3219
        %v3225 = vmul.f32 1.0, %v3224
        %v3226 = vrcp.pop %v2928
        %v3227 = vmul.f32 %v2928, %v3226
        %v3228 = vsub.f32 1.0, %v3227
        %v3229 = vmul.f32 %v3226, %v3228
        %v3230 = vadd.f32 %v3226, %v3229
        %vm3231 = vweird.f32 %v2928
        %vm3232 = vweird.f32 %v3226
        %vm3233 = vmor %vm3231, %vm3232
        %v3234 = vsel %vm3233, %v3226, %v3230
        %v3235 = vand.u32 2147483647, %v2928
        %vm3236 = vcmp.eq.f32.partialorder %v3235, 8.507059e+37
        %v3237 = vand.u32 %v2928, 2147483648
        %v3238 = vor.u32 1.1754944e-38, %v3237
        %v3239 = vsel %vm3236, %v3238, %v3234
        %v3240 = vmul.f32 1.0, %v3239
        %v3241 = vrcp.pop %v2929
        %v3242 = vmul.f32 %v2929, %v3241
        %v3243 = vsub.f32 1.0, %v3242
        %v3244 = vmul.f32 %v3241, %v3243
        %v3245 = vadd.f32 %v3241, %v3244
        %vm3246 = vweird.f32 %v2929
        %vm3247 = vweird.f32 %v3241
        %vm3248 = vmor %vm3246, %vm3247
        %v3249 = vsel %vm3248, %v3241, %v3245
        %v3250 = vand.u32 2147483647, %v2929
        %vm3251 = vcmp.eq.f32.partialorder %v3250, 8.507059e+37
        %v3252 = vand.u32 %v2929, 2147483648
        %v3253 = vor.u32 1.1754944e-38, %v3252
        %v3254 = vsel %vm3251, %v3253, %v3249
        %v3255 = vmul.f32 1.0, %v3254
        %v3256 = vrcp.pop %v2930
        %v3257 = vmul.f32 %v2930, %v3256
        %v3258 = vsub.f32 1.0, %v3257
        %v3259 = vmul.f32 %v3256, %v3258
        %v3260 = vadd.f32 %v3256, %v3259
        %vm3261 = vweird.f32 %v2930
        %vm3262 = vweird.f32 %v3256
        %vm3263 = vmor %vm3261, %vm3262
        %v3264 = vsel %vm3263, %v3256, %v3260
        %v3265 = vand.u32 2147483647, %v2930
        %vm3266 = vcmp.eq.f32.partialorder %v3265, 8.507059e+37
        %v3267 = vand.u32 %v2930, 2147483648
        %v3268 = vor.u32 1.1754944e-38, %v3267
        %v3269 = vsel %vm3266, %v3268, %v3264
        %v3270 = vmul.f32 1.0, %v3269
        %v3271 = vrcp.pop %v2931
        %v3272 = vmul.f32 %v2931, %v3271
        %v3273 = vsub.f32 1.0, %v3272
        %v3274 = vmul.f32 %v3271, %v3273
        %v3275 = vadd.f32 %v3271, %v3274
        %vm3276 = vweird.f32 %v2931
        %vm3277 = vweird.f32 %v3271
        %vm3278 = vmor %vm3276, %vm3277
        %v3279 = vsel %vm3278, %v3271, %v3275
        %v3280 = vand.u32 2147483647, %v2931
        %vm3281 = vcmp.eq.f32.partialorder %v3280, 8.507059e+37
        %v3282 = vand.u32 %v2931, 2147483648
        %v3283 = vor.u32 1.1754944e-38, %v3282
        %v3284 = vsel %vm3281, %v3283, %v3279
        %v3285 = vmul.f32 1.0, %v3284
        %v3286 = vrcp.pop %v2932
        %v3287 = vmul.f32 %v2932, %v3286
        %v3288 = vsub.f32 1.0, %v3287
        %v3289 = vmul.f32 %v3286, %v3288
        %v3290 = vadd.f32 %v3286, %v3289
        %vm3291 = vweird.f32 %v2932
        %vm3292 = vweird.f32 %v3286
        %vm3293 = vmor %vm3291, %vm3292
        %v3294 = vsel %vm3293, %v3286, %v3290
        %v3295 = vand.u32 2147483647, %v2932
        %vm3296 = vcmp.eq.f32.partialorder %v3295, 8.507059e+37
        %v3297 = vand.u32 %v2932, 2147483648
        %v3298 = vor.u32 1.1754944e-38, %v3297
        %v3299 = vsel %vm3296, %v3298, %v3294
        %v3300 = vmul.f32 1.0, %v3299
        %v3301 = vrcp.pop %v2933
        %v3302 = vmul.f32 %v2933, %v3301
        %v3303 = vsub.f32 1.0, %v3302
        %v3304 = vmul.f32 %v3301, %v3303
        %v3305 = vadd.f32 %v3301, %v3304
        %vm3306 = vweird.f32 %v2933
        %vm3307 = vweird.f32 %v3301
        %vm3308 = vmor %vm3306, %vm3307
        %v3309 = vsel %vm3308, %v3301, %v3305
        %v3310 = vand.u32 2147483647, %v2933
        %vm3311 = vcmp.eq.f32.partialorder %v3310, 8.507059e+37
        %v3312 = vand.u32 %v2933, 2147483648
        %v3313 = vor.u32 1.1754944e-38, %v3312
        %v3314 = vsel %vm3311, %v3313, %v3309
        %v3315 = vmul.f32 1.0, %v3314
        %v3316 = vrcp.pop %v2934
        %v3317 = vmul.f32 %v2934, %v3316
        %v3318 = vsub.f32 1.0, %v3317
        %v3319 = vmul.f32 %v3316, %v3318
        %v3320 = vadd.f32 %v3316, %v3319
        %vm3321 = vweird.f32 %v2934
        %vm3322 = vweird.f32 %v3316
        %vm3323 = vmor %vm3321, %vm3322
        %v3324 = vsel %vm3323, %v3316, %v3320
        %v3325 = vand.u32 2147483647, %v2934
        %vm3326 = vcmp.eq.f32.partialorder %v3325, 8.507059e+37
        %v3327 = vand.u32 %v2934, 2147483648
        %v3328 = vor.u32 1.1754944e-38, %v3327
        %v3329 = vsel %vm3326, %v3328, %v3324
        %v3330 = vmul.f32 1.0, %v3329
        %v3331 = vrcp.pop %v2935
        %v3332 = vmul.f32 %v2935, %v3331
        %v3333 = vsub.f32 1.0, %v3332
        %v3334 = vmul.f32 %v3331, %v3333
        %v3335 = vadd.f32 %v3331, %v3334
        %vm3336 = vweird.f32 %v2935
        %vm3337 = vweird.f32 %v3331
        %vm3338 = vmor %vm3336, %vm3337
        %v3339 = vsel %vm3338, %v3331, %v3335
        %v3340 = vand.u32 2147483647, %v2935
        %vm3341 = vcmp.eq.f32.partialorder %v3340, 8.507059e+37
        %v3342 = vand.u32 %v2935, 2147483648
        %v3343 = vor.u32 1.1754944e-38, %v3342
        %v3344 = vsel %vm3341, %v3343, %v3339
        %v3345 = vmul.f32 1.0, %v3344
        %v3346 = vrcp.pop %v2936
        %v3347 = vmul.f32 %v2936, %v3346
        %v3348 = vsub.f32 1.0, %v3347
        %v3349 = vmul.f32 %v3346, %v3348
        %v3350 = vadd.f32 %v3346, %v3349
        %vm3351 = vweird.f32 %v2936
        %vm3352 = vweird.f32 %v3346
        %vm3353 = vmor %vm3351, %vm3352
        %v3354 = vsel %vm3353, %v3346, %v3350
        %v3355 = vand.u32 2147483647, %v2936
        %vm3356 = vcmp.eq.f32.partialorder %v3355, 8.507059e+37
        %v3357 = vand.u32 %v2936, 2147483648
        %v3358 = vor.u32 1.1754944e-38, %v3357
        %v3359 = vsel %vm3356, %v3358, %v3354
        %v3360 = vmul.f32 1.0, %v3359
        %v3361 = vrcp.pop %v2937
        %v3362 = vmul.f32 %v2937, %v3361
        %v3363 = vsub.f32 1.0, %v3362
        %v3364 = vmul.f32 %v3361, %v3363
        %v3365 = vadd.f32 %v3361, %v3364
        %vm3366 = vweird.f32 %v2937
        %vm3367 = vweird.f32 %v3361
        %vm3368 = vmor %vm3366, %vm3367
        %v3369 = vsel %vm3368, %v3361, %v3365
        %v3370 = vand.u32 2147483647, %v2937
        %vm3371 = vcmp.eq.f32.partialorder %v3370, 8.507059e+37
        %v3372 = vand.u32 %v2937, 2147483648
        %v3373 = vor.u32 1.1754944e-38, %v3372
        %v3374 = vsel %vm3371, %v3373, %v3369
        %v3375 = vmul.f32 1.0, %v3374
        %v3376 = vrcp.pop %v2938
        %v3377 = vmul.f32 %v2938, %v3376
        %v3378 = vsub.f32 1.0, %v3377
        %v3379 = vmul.f32 %v3376, %v3378
        %v3380 = vadd.f32 %v3376, %v3379
        %vm3381 = vweird.f32 %v2938
        %vm3382 = vweird.f32 %v3376
        %vm3383 = vmor %vm3381, %vm3382
        %v3384 = vsel %vm3383, %v3376, %v3380
        %v3385 = vand.u32 2147483647, %v2938
        %vm3386 = vcmp.eq.f32.partialorder %v3385, 8.507059e+37
        %v3387 = vand.u32 %v2938, 2147483648
        %v3388 = vor.u32 1.1754944e-38, %v3387
        %v3389 = vsel %vm3386, %v3388, %v3384
        %v3390 = vmul.f32 1.0, %v3389
        %v3391 = vrcp.pop %v2939
        %v3392 = vmul.f32 %v2939, %v3391
        %v3393 = vsub.f32 1.0, %v3392
        %v3394 = vmul.f32 %v3391, %v3393
        %v3395 = vadd.f32 %v3391, %v3394
        %vm3396 = vweird.f32 %v2939
        %vm3397 = vweird.f32 %v3391
        %vm3398 = vmor %vm3396, %vm3397
        %v3399 = vsel %vm3398, %v3391, %v3395
        %v3400 = vand.u32 2147483647, %v2939
        %vm3401 = vcmp.eq.f32.partialorder %v3400, 8.507059e+37
        %v3402 = vand.u32 %v2939, 2147483648
        %v3403 = vor.u32 1.1754944e-38, %v3402
        %v3404 = vsel %vm3401, %v3403, %v3399
        %v3405 = vmul.f32 1.0, %v3404
        %v3406 = vrcp.pop %v2940
        %v3407 = vmul.f32 %v2940, %v3406
        %v3408 = vsub.f32 1.0, %v3407
        %v3409 = vmul.f32 %v3406, %v3408
        %v3410 = vadd.f32 %v3406, %v3409
        %vm3411 = vweird.f32 %v2940
        %vm3412 = vweird.f32 %v3406
        %vm3413 = vmor %vm3411, %vm3412
        %v3414 = vsel %vm3413, %v3406, %v3410
        %v3415 = vand.u32 2147483647, %v2940
        %vm3416 = vcmp.eq.f32.partialorder %v3415, 8.507059e+37
        %v3417 = vand.u32 %v2940, 2147483648
        %v3418 = vor.u32 1.1754944e-38, %v3417
        %v3419 = vsel %vm3416, %v3418, %v3414
        %v3420 = vmul.f32 1.0, %v3419
        %v3421 = vmul.f32 %v2718, %v2955
        %v3422 = vmul.f32 %v2721, %v2970
        %v3423 = vmul.f32 %v2724, %v2985
        %v3424 = vmul.f32 %v2727, %v3000
        %v3425 = vmul.f32 %v2730, %v3015
        %v3426 = vmul.f32 %v2733, %v3030
        %v3427 = vmul.f32 %v2736, %v3045
        %v3428 = vmul.f32 %v2739, %v3060
        %v3429 = vmul.f32 %v2742, %v3075
        %v3430 = vmul.f32 %v2745, %v3090
        %v3431 = vmul.f32 %v2748, %v3105
        %v3432 = vmul.f32 %v2751, %v3120
        %v3433 = vmul.f32 %v2754, %v3135
        %v3434 = vmul.f32 %v2757, %v3150
        %v3435 = vmul.f32 %v2760, %v3165
        %v3436 = vmul.f32 %v2763, %v3180
        %v3437 = vmul.f32 %v2766, %v3195
        %v3438 = vmul.f32 %v2769, %v3210
        %v3439 = vmul.f32 %v2772, %v3225
        %v3440 = vmul.f32 %v2775, %v3240
        %v3441 = vmul.f32 %v2778, %v3255
        %v3442 = vmul.f32 %v2781, %v3270
        %v3443 = vmul.f32 %v2784, %v3285
        %v3444 = vmul.f32 %v2787, %v3300
        %v3445 = vmul.f32 %v2790, %v3315
        %v3446 = vmul.f32 %v2793, %v3330
        %v3447 = vmul.f32 %v2796, %v3345
        %v3448 = vmul.f32 %v2799, %v3360
        %v3449 = vmul.f32 %v2802, %v3375
        %v3450 = vmul.f32 %v2805, %v3390
        %v3451 = vmul.f32 %v2808, %v3405
        %v3452 = vmul.f32 %v2811, %v3420
        %v3453 = vld [vmem:[%s9] sm:$0xff]
        %v3454 = vld [vmem:[%s9 + $0x8] sm:$0xff]
        %v3455 = vld [vmem:[%s9 + $0x10] sm:$0xff]
        %v3456 = vld [vmem:[%s9 + $0x18] sm:$0xff]
        %v3457 = vld [vmem:[%s9 + $0x20] sm:$0xff]
        %v3458 = vld [vmem:[%s9 + $0x28] sm:$0xff]
        %v3459 = vld [vmem:[%s9 + $0x30] sm:$0xff]
        %v3460 = vld [vmem:[%s9 + $0x38] sm:$0xff]
        %v3461 = vld [vmem:[%s9 + $0x40] sm:$0xff]
        %v3462 = vld [vmem:[%s9 + $0x48] sm:$0xff]
        %v3463 = vld [vmem:[%s9 + $0x50] sm:$0xff]
        %v3464 = vld [vmem:[%s9 + $0x58] sm:$0xff]
        %v3465 = vld [vmem:[%s9 + $0x60] sm:$0xff]
        %v3466 = vld [vmem:[%s9 + $0x68] sm:$0xff]
        %v3467 = vld [vmem:[%s9 + $0x70] sm:$0xff]
        %v3468 = vld [vmem:[%s9 + $0x78] sm:$0xff]
        %v3469 = vld [vmem:[%s10] sm:$0x1]
        %v3471 = vperm.slane %v3469, 0
        %3473 = vmatpush.msra.mxu0 %v3468
        %3474 = vmatpush.msra.mxu0 %v3467
        %3475 = vmatpush.msra.mxu0 %v3466
        %3476 = vmatpush.msra.mxu0 %v3465
        %3477 = vmatpush.msra.mxu0 %v3464
        %3478 = vmatpush.msra.mxu0 %v3463
        %3479 = vmatpush.msra.mxu0 %v3462
        %3480 = vmatpush.msra.mxu0 %v3461
        %3481 = vmatpush.msra.mxu0 %v3460
        %3482 = vmatpush.msra.mxu0 %v3459
        %3483 = vmatpush.msra.mxu0 %v3458
        %3484 = vmatpush.msra.mxu0 %v3457
        %3485 = vmatpush.msra.mxu0 %v3456
        %3486 = vmatpush.msra.mxu0 %v3455
        %3487 = vmatpush.msra.mxu0 %v3454
        %3488 = vmatpush.msra.mxu0 %v3453
        %3489 = vmatmul.f32.gmra.mxu0 %v3421
        %v3490 = vpop.f32.mrf.mxu0
        %v3491 = vadd.f32 %v3471, %v3490
        %3492 = vmatmul.f32.gmra.mxu0 %v3422
        %v3493 = vpop.f32.mrf.mxu0
        %v3494 = vadd.f32 %v3471, %v3493
        %3495 = vmatmul.f32.gmra.mxu0 %v3423
        %v3496 = vpop.f32.mrf.mxu0
        %v3497 = vadd.f32 %v3471, %v3496
        %3498 = vmatmul.f32.gmra.mxu0 %v3424
        %v3499 = vpop.f32.mrf.mxu0
        %v3500 = vadd.f32 %v3471, %v3499
        %3501 = vmatmul.f32.gmra.mxu0 %v3425
        %v3502 = vpop.f32.mrf.mxu0
        %v3503 = vadd.f32 %v3471, %v3502
        %3504 = vmatmul.f32.gmra.mxu0 %v3426
        %v3505 = vpop.f32.mrf.mxu0
        %v3506 = vadd.f32 %v3471, %v3505
        %3507 = vmatmul.f32.gmra.mxu0 %v3427
        %v3508 = vpop.f32.mrf.mxu0
        %v3509 = vadd.f32 %v3471, %v3508
        %3510 = vmatmul.f32.gmra.mxu0 %v3428
        %v3511 = vpop.f32.mrf.mxu0
        %v3512 = vadd.f32 %v3471, %v3511
        %3513 = vmatmul.f32.gmra.mxu0 %v3429
        %v3514 = vpop.f32.mrf.mxu0
        %v3515 = vadd.f32 %v3471, %v3514
        %3516 = vmatmul.f32.gmra.mxu0 %v3430
        %v3517 = vpop.f32.mrf.mxu0
        %v3518 = vadd.f32 %v3471, %v3517
        %3519 = vmatmul.f32.gmra.mxu0 %v3431
        %v3520 = vpop.f32.mrf.mxu0
        %v3521 = vadd.f32 %v3471, %v3520
        %3522 = vmatmul.f32.gmra.mxu0 %v3432
        %v3523 = vpop.f32.mrf.mxu0
        %v3524 = vadd.f32 %v3471, %v3523
        %3525 = vmatmul.f32.gmra.mxu0 %v3433
        %v3526 = vpop.f32.mrf.mxu0
        %v3527 = vadd.f32 %v3471, %v3526
        %3528 = vmatmul.f32.gmra.mxu0 %v3434
        %v3529 = vpop.f32.mrf.mxu0
        %v3530 = vadd.f32 %v3471, %v3529
        %3531 = vmatmul.f32.gmra.mxu0 %v3435
        %v3532 = vpop.f32.mrf.mxu0
        %v3533 = vadd.f32 %v3471, %v3532
        %3534 = vmatmul.f32.gmra.mxu0 %v3436
        %v3535 = vpop.f32.mrf.mxu0
        %v3536 = vadd.f32 %v3471, %v3535
        %3537 = vmatmul.f32.gmra.mxu0 %v3437
        %v3538 = vpop.f32.mrf.mxu0
        %v3539 = vadd.f32 %v3471, %v3538
        %3540 = vmatmul.f32.gmra.mxu0 %v3438
        %v3541 = vpop.f32.mrf.mxu0
        %v3542 = vadd.f32 %v3471, %v3541
        %3543 = vmatmul.f32.gmra.mxu0 %v3439
        %v3544 = vpop.f32.mrf.mxu0
        %v3545 = vadd.f32 %v3471, %v3544
        %3546 = vmatmul.f32.gmra.mxu0 %v3440
        %v3547 = vpop.f32.mrf.mxu0
        %v3548 = vadd.f32 %v3471, %v3547
        %3549 = vmatmul.f32.gmra.mxu0 %v3441
        %v3550 = vpop.f32.mrf.mxu0
        %v3551 = vadd.f32 %v3471, %v3550
        %3552 = vmatmul.f32.gmra.mxu0 %v3442
        %v3553 = vpop.f32.mrf.mxu0
        %v3554 = vadd.f32 %v3471, %v3553
        %3555 = vmatmul.f32.gmra.mxu0 %v3443
        %v3556 = vpop.f32.mrf.mxu0
        %v3557 = vadd.f32 %v3471, %v3556
        %3558 = vmatmul.f32.gmra.mxu0 %v3444
        %v3559 = vpop.f32.mrf.mxu0
        %v3560 = vadd.f32 %v3471, %v3559
        %3561 = vmatmul.f32.gmra.mxu0 %v3445
        %v3562 = vpop.f32.mrf.mxu0
        %v3563 = vadd.f32 %v3471, %v3562
        %3564 = vmatmul.f32.gmra.mxu0 %v3446
        %v3565 = vpop.f32.mrf.mxu0
        %v3566 = vadd.f32 %v3471, %v3565
        %3567 = vmatmul.f32.gmra.mxu0 %v3447
        %v3568 = vpop.f32.mrf.mxu0
        %v3569 = vadd.f32 %v3471, %v3568
        %3570 = vmatmul.f32.gmra.mxu0 %v3448
        %v3571 = vpop.f32.mrf.mxu0
        %v3572 = vadd.f32 %v3471, %v3571
        %3573 = vmatmul.f32.gmra.mxu0 %v3449
        %v3574 = vpop.f32.mrf.mxu0
        %v3575 = vadd.f32 %v3471, %v3574
        %3576 = vmatmul.f32.gmra.mxu0 %v3450
        %v3577 = vpop.f32.mrf.mxu0
        %v3578 = vadd.f32 %v3471, %v3577
        %3579 = vmatmul.f32.gmra.mxu0 %v3451
        %v3580 = vpop.f32.mrf.mxu0
        %v3581 = vadd.f32 %v3471, %v3580
        %3582 = vmatmul.f32.gmra.mxu0 %v3452
        %v3583 = vpop.f32.mrf.mxu0
        %v3584 = vadd.f32 %v3471, %v3583
        %3585 = vdwg.mxu0
        %v3586 = vxor.u32 %v3491, 2147483648
        %v3587 = vxor.u32 %v3494, 2147483648
        %v3588 = vxor.u32 %v3497, 2147483648
        %v3589 = vxor.u32 %v3500, 2147483648
        %v3590 = vxor.u32 %v3503, 2147483648
        %v3591 = vxor.u32 %v3506, 2147483648
        %v3592 = vxor.u32 %v3509, 2147483648
        %v3593 = vxor.u32 %v3512, 2147483648
        %v3594 = vxor.u32 %v3515, 2147483648
        %v3595 = vxor.u32 %v3518, 2147483648
        %v3596 = vxor.u32 %v3521, 2147483648
        %v3597 = vxor.u32 %v3524, 2147483648
        %v3598 = vxor.u32 %v3527, 2147483648
        %v3599 = vxor.u32 %v3530, 2147483648
        %v3600 = vxor.u32 %v3533, 2147483648
        %v3601 = vxor.u32 %v3536, 2147483648
        %v3602 = vxor.u32 %v3539, 2147483648
        %v3603 = vxor.u32 %v3542, 2147483648
        %v3604 = vxor.u32 %v3545, 2147483648
        %v3605 = vxor.u32 %v3548, 2147483648
        %v3606 = vxor.u32 %v3551, 2147483648
        %v3607 = vxor.u32 %v3554, 2147483648
        %v3608 = vxor.u32 %v3557, 2147483648
        %v3609 = vxor.u32 %v3560, 2147483648
        %v3610 = vxor.u32 %v3563, 2147483648
        %v3611 = vxor.u32 %v3566, 2147483648
        %v3612 = vxor.u32 %v3569, 2147483648
        %v3613 = vxor.u32 %v3572, 2147483648
        %v3614 = vxor.u32 %v3575, 2147483648
        %v3615 = vxor.u32 %v3578, 2147483648
        %v3616 = vxor.u32 %v3581, 2147483648
        %v3617 = vxor.u32 %v3584, 2147483648
        %v3618 = vmul.f32 %v3586, 1.442695
        %v3619 = vpow.pop %v3618
        %v3620 = vmul.f32 %v3587, 1.442695
        %v3621 = vpow.pop %v3620
        %v3622 = vmul.f32 %v3588, 1.442695
        %v3623 = vpow.pop %v3622
        %v3624 = vmul.f32 %v3589, 1.442695
        %v3625 = vpow.pop %v3624
        %v3626 = vmul.f32 %v3590, 1.442695
        %v3627 = vpow.pop %v3626
        %v3628 = vmul.f32 %v3591, 1.442695
        %v3629 = vpow.pop %v3628
        %v3630 = vmul.f32 %v3592, 1.442695
        %v3631 = vpow.pop %v3630
        %v3632 = vmul.f32 %v3593, 1.442695
        %v3633 = vpow.pop %v3632
        %v3634 = vmul.f32 %v3594, 1.442695
        %v3635 = vpow.pop %v3634
        %v3636 = vmul.f32 %v3595, 1.442695
        %v3637 = vpow.pop %v3636
        %v3638 = vmul.f32 %v3596, 1.442695
        %v3639 = vpow.pop %v3638
        %v3640 = vmul.f32 %v3597, 1.442695
        %v3641 = vpow.pop %v3640
        %v3642 = vmul.f32 %v3598, 1.442695
        %v3643 = vpow.pop %v3642
        %v3644 = vmul.f32 %v3599, 1.442695
        %v3645 = vpow.pop %v3644
        %v3646 = vmul.f32 %v3600, 1.442695
        %v3647 = vpow.pop %v3646
        %v3648 = vmul.f32 %v3601, 1.442695
        %v3649 = vpow.pop %v3648
        %v3650 = vmul.f32 %v3602, 1.442695
        %v3651 = vpow.pop %v3650
        %v3652 = vmul.f32 %v3603, 1.442695
        %v3653 = vpow.pop %v3652
        %v3654 = vmul.f32 %v3604, 1.442695
        %v3655 = vpow.pop %v3654
        %v3656 = vmul.f32 %v3605, 1.442695
        %v3657 = vpow.pop %v3656
        %v3658 = vmul.f32 %v3606, 1.442695
        %v3659 = vpow.pop %v3658
        %v3660 = vmul.f32 %v3607, 1.442695
        %v3661 = vpow.pop %v3660
        %v3662 = vmul.f32 %v3608, 1.442695
        %v3663 = vpow.pop %v3662
        %v3664 = vmul.f32 %v3609, 1.442695
        %v3665 = vpow.pop %v3664
        %v3666 = vmul.f32 %v3610, 1.442695
        %v3667 = vpow.pop %v3666
        %v3668 = vmul.f32 %v3611, 1.442695
        %v3669 = vpow.pop %v3668
        %v3670 = vmul.f32 %v3612, 1.442695
        %v3671 = vpow.pop %v3670
        %v3672 = vmul.f32 %v3613, 1.442695
        %v3673 = vpow.pop %v3672
        %v3674 = vmul.f32 %v3614, 1.442695
        %v3675 = vpow.pop %v3674
        %v3676 = vmul.f32 %v3615, 1.442695
        %v3677 = vpow.pop %v3676
        %v3678 = vmul.f32 %v3616, 1.442695
        %v3679 = vpow.pop %v3678
        %v3680 = vmul.f32 %v3617, 1.442695
        %v3681 = vpow.pop %v3680
        %v3682 = vadd.f32 %v3619, 1.0
        %v3683 = vadd.f32 %v3621, 1.0
        %v3684 = vadd.f32 %v3623, 1.0
        %v3685 = vadd.f32 %v3625, 1.0
        %v3686 = vadd.f32 %v3627, 1.0
        %v3687 = vadd.f32 %v3629, 1.0
        %v3688 = vadd.f32 %v3631, 1.0
        %v3689 = vadd.f32 %v3633, 1.0
        %v3690 = vadd.f32 %v3635, 1.0
        %v3691 = vadd.f32 %v3637, 1.0
        %v3692 = vadd.f32 %v3639, 1.0
        %v3693 = vadd.f32 %v3641, 1.0
        %v3694 = vadd.f32 %v3643, 1.0
        %v3695 = vadd.f32 %v3645, 1.0
        %v3696 = vadd.f32 %v3647, 1.0
        %v3697 = vadd.f32 %v3649, 1.0
        %v3698 = vadd.f32 %v3651, 1.0
        %v3699 = vadd.f32 %v3653, 1.0
        %v3700 = vadd.f32 %v3655, 1.0
        %v3701 = vadd.f32 %v3657, 1.0
        %v3702 = vadd.f32 %v3659, 1.0
        %v3703 = vadd.f32 %v3661, 1.0
        %v3704 = vadd.f32 %v3663, 1.0
        %v3705 = vadd.f32 %v3665, 1.0
        %v3706 = vadd.f32 %v3667, 1.0
        %v3707 = vadd.f32 %v3669, 1.0
        %v3708 = vadd.f32 %v3671, 1.0
        %v3709 = vadd.f32 %v3673, 1.0
        %v3710 = vadd.f32 %v3675, 1.0
        %v3711 = vadd.f32 %v3677, 1.0
        %v3712 = vadd.f32 %v3679, 1.0
        %v3713 = vadd.f32 %v3681, 1.0
        %v3714 = vrcp.pop %v3682
        %v3715 = vmul.f32 %v3682, %v3714
        %v3716 = vsub.f32 1.0, %v3715
        %v3717 = vmul.f32 %v3714, %v3716
        %v3718 = vadd.f32 %v3714, %v3717
        %vm3719 = vweird.f32 %v3682
        %vm3720 = vweird.f32 %v3714
        %vm3721 = vmor %vm3719, %vm3720
        %v3722 = vsel %vm3721, %v3714, %v3718
        %v3723 = vand.u32 2147483647, %v3682
        %vm3724 = vcmp.eq.f32.partialorder %v3723, 8.507059e+37
        %v3725 = vand.u32 %v3682, 2147483648
        %v3726 = vor.u32 1.1754944e-38, %v3725
        %v3727 = vsel %vm3724, %v3726, %v3722
        %v3728 = vmul.f32 1.0, %v3727
        %v3729 = vrcp.pop %v3683
        %v3730 = vmul.f32 %v3683, %v3729
        %v3731 = vsub.f32 1.0, %v3730
        %v3732 = vmul.f32 %v3729, %v3731
        %v3733 = vadd.f32 %v3729, %v3732
        %vm3734 = vweird.f32 %v3683
        %vm3735 = vweird.f32 %v3729
        %vm3736 = vmor %vm3734, %vm3735
        %v3737 = vsel %vm3736, %v3729, %v3733
        %v3738 = vand.u32 2147483647, %v3683
        %vm3739 = vcmp.eq.f32.partialorder %v3738, 8.507059e+37
        %v3740 = vand.u32 %v3683, 2147483648
        %v3741 = vor.u32 1.1754944e-38, %v3740
        %v3742 = vsel %vm3739, %v3741, %v3737
        %v3743 = vmul.f32 1.0, %v3742
        %v3744 = vrcp.pop %v3684
        %v3745 = vmul.f32 %v3684, %v3744
        %v3746 = vsub.f32 1.0, %v3745
        %v3747 = vmul.f32 %v3744, %v3746
        %v3748 = vadd.f32 %v3744, %v3747
        %vm3749 = vweird.f32 %v3684
        %vm3750 = vweird.f32 %v3744
        %vm3751 = vmor %vm3749, %vm3750
        %v3752 = vsel %vm3751, %v3744, %v3748
        %v3753 = vand.u32 2147483647, %v3684
        %vm3754 = vcmp.eq.f32.partialorder %v3753, 8.507059e+37
        %v3755 = vand.u32 %v3684, 2147483648
        %v3756 = vor.u32 1.1754944e-38, %v3755
        %v3757 = vsel %vm3754, %v3756, %v3752
        %v3758 = vmul.f32 1.0, %v3757
        %v3759 = vrcp.pop %v3685
        %v3760 = vmul.f32 %v3685, %v3759
        %v3761 = vsub.f32 1.0, %v3760
        %v3762 = vmul.f32 %v3759, %v3761
        %v3763 = vadd.f32 %v3759, %v3762
        %vm3764 = vweird.f32 %v3685
        %vm3765 = vweird.f32 %v3759
        %vm3766 = vmor %vm3764, %vm3765
        %v3767 = vsel %vm3766, %v3759, %v3763
        %v3768 = vand.u32 2147483647, %v3685
        %vm3769 = vcmp.eq.f32.partialorder %v3768, 8.507059e+37
        %v3770 = vand.u32 %v3685, 2147483648
        %v3771 = vor.u32 1.1754944e-38, %v3770
        %v3772 = vsel %vm3769, %v3771, %v3767
        %v3773 = vmul.f32 1.0, %v3772
        %v3774 = vrcp.pop %v3686
        %v3775 = vmul.f32 %v3686, %v3774
        %v3776 = vsub.f32 1.0, %v3775
        %v3777 = vmul.f32 %v3774, %v3776
        %v3778 = vadd.f32 %v3774, %v3777
        %vm3779 = vweird.f32 %v3686
        %vm3780 = vweird.f32 %v3774
        %vm3781 = vmor %vm3779, %vm3780
        %v3782 = vsel %vm3781, %v3774, %v3778
        %v3783 = vand.u32 2147483647, %v3686
        %vm3784 = vcmp.eq.f32.partialorder %v3783, 8.507059e+37
        %v3785 = vand.u32 %v3686, 2147483648
        %v3786 = vor.u32 1.1754944e-38, %v3785
        %v3787 = vsel %vm3784, %v3786, %v3782
        %v3788 = vmul.f32 1.0, %v3787
        %v3789 = vrcp.pop %v3687
        %v3790 = vmul.f32 %v3687, %v3789
        %v3791 = vsub.f32 1.0, %v3790
        %v3792 = vmul.f32 %v3789, %v3791
        %v3793 = vadd.f32 %v3789, %v3792
        %vm3794 = vweird.f32 %v3687
        %vm3795 = vweird.f32 %v3789
        %vm3796 = vmor %vm3794, %vm3795
        %v3797 = vsel %vm3796, %v3789, %v3793
        %v3798 = vand.u32 2147483647, %v3687
        %vm3799 = vcmp.eq.f32.partialorder %v3798, 8.507059e+37
        %v3800 = vand.u32 %v3687, 2147483648
        %v3801 = vor.u32 1.1754944e-38, %v3800
        %v3802 = vsel %vm3799, %v3801, %v3797
        %v3803 = vmul.f32 1.0, %v3802
        %v3804 = vrcp.pop %v3688
        %v3805 = vmul.f32 %v3688, %v3804
        %v3806 = vsub.f32 1.0, %v3805
        %v3807 = vmul.f32 %v3804, %v3806
        %v3808 = vadd.f32 %v3804, %v3807
        %vm3809 = vweird.f32 %v3688
        %vm3810 = vweird.f32 %v3804
        %vm3811 = vmor %vm3809, %vm3810
        %v3812 = vsel %vm3811, %v3804, %v3808
        %v3813 = vand.u32 2147483647, %v3688
        %vm3814 = vcmp.eq.f32.partialorder %v3813, 8.507059e+37
        %v3815 = vand.u32 %v3688, 2147483648
        %v3816 = vor.u32 1.1754944e-38, %v3815
        %v3817 = vsel %vm3814, %v3816, %v3812
        %v3818 = vmul.f32 1.0, %v3817
        %v3819 = vrcp.pop %v3689
        %v3820 = vmul.f32 %v3689, %v3819
        %v3821 = vsub.f32 1.0, %v3820
        %v3822 = vmul.f32 %v3819, %v3821
        %v3823 = vadd.f32 %v3819, %v3822
        %vm3824 = vweird.f32 %v3689
        %vm3825 = vweird.f32 %v3819
        %vm3826 = vmor %vm3824, %vm3825
        %v3827 = vsel %vm3826, %v3819, %v3823
        %v3828 = vand.u32 2147483647, %v3689
        %vm3829 = vcmp.eq.f32.partialorder %v3828, 8.507059e+37
        %v3830 = vand.u32 %v3689, 2147483648
        %v3831 = vor.u32 1.1754944e-38, %v3830
        %v3832 = vsel %vm3829, %v3831, %v3827
        %v3833 = vmul.f32 1.0, %v3832
        %v3834 = vrcp.pop %v3690
        %v3835 = vmul.f32 %v3690, %v3834
        %v3836 = vsub.f32 1.0, %v3835
        %v3837 = vmul.f32 %v3834, %v3836
        %v3838 = vadd.f32 %v3834, %v3837
        %vm3839 = vweird.f32 %v3690
        %vm3840 = vweird.f32 %v3834
        %vm3841 = vmor %vm3839, %vm3840
        %v3842 = vsel %vm3841, %v3834, %v3838
        %v3843 = vand.u32 2147483647, %v3690
        %vm3844 = vcmp.eq.f32.partialorder %v3843, 8.507059e+37
        %v3845 = vand.u32 %v3690, 2147483648
        %v3846 = vor.u32 1.1754944e-38, %v3845
        %v3847 = vsel %vm3844, %v3846, %v3842
        %v3848 = vmul.f32 1.0, %v3847
        %v3849 = vrcp.pop %v3691
        %v3850 = vmul.f32 %v3691, %v3849
        %v3851 = vsub.f32 1.0, %v3850
        %v3852 = vmul.f32 %v3849, %v3851
        %v3853 = vadd.f32 %v3849, %v3852
        %vm3854 = vweird.f32 %v3691
        %vm3855 = vweird.f32 %v3849
        %vm3856 = vmor %vm3854, %vm3855
        %v3857 = vsel %vm3856, %v3849, %v3853
        %v3858 = vand.u32 2147483647, %v3691
        %vm3859 = vcmp.eq.f32.partialorder %v3858, 8.507059e+37
        %v3860 = vand.u32 %v3691, 2147483648
        %v3861 = vor.u32 1.1754944e-38, %v3860
        %v3862 = vsel %vm3859, %v3861, %v3857
        %v3863 = vmul.f32 1.0, %v3862
        %v3864 = vrcp.pop %v3692
        %v3865 = vmul.f32 %v3692, %v3864
        %v3866 = vsub.f32 1.0, %v3865
        %v3867 = vmul.f32 %v3864, %v3866
        %v3868 = vadd.f32 %v3864, %v3867
        %vm3869 = vweird.f32 %v3692
        %vm3870 = vweird.f32 %v3864
        %vm3871 = vmor %vm3869, %vm3870
        %v3872 = vsel %vm3871, %v3864, %v3868
        %v3873 = vand.u32 2147483647, %v3692
        %vm3874 = vcmp.eq.f32.partialorder %v3873, 8.507059e+37
        %v3875 = vand.u32 %v3692, 2147483648
        %v3876 = vor.u32 1.1754944e-38, %v3875
        %v3877 = vsel %vm3874, %v3876, %v3872
        %v3878 = vmul.f32 1.0, %v3877
        %v3879 = vrcp.pop %v3693
        %v3880 = vmul.f32 %v3693, %v3879
        %v3881 = vsub.f32 1.0, %v3880
        %v3882 = vmul.f32 %v3879, %v3881
        %v3883 = vadd.f32 %v3879, %v3882
        %vm3884 = vweird.f32 %v3693
        %vm3885 = vweird.f32 %v3879
        %vm3886 = vmor %vm3884, %vm3885
        %v3887 = vsel %vm3886, %v3879, %v3883
        %v3888 = vand.u32 2147483647, %v3693
        %vm3889 = vcmp.eq.f32.partialorder %v3888, 8.507059e+37
        %v3890 = vand.u32 %v3693, 2147483648
        %v3891 = vor.u32 1.1754944e-38, %v3890
        %v3892 = vsel %vm3889, %v3891, %v3887
        %v3893 = vmul.f32 1.0, %v3892
        %v3894 = vrcp.pop %v3694
        %v3895 = vmul.f32 %v3694, %v3894
        %v3896 = vsub.f32 1.0, %v3895
        %v3897 = vmul.f32 %v3894, %v3896
        %v3898 = vadd.f32 %v3894, %v3897
        %vm3899 = vweird.f32 %v3694
        %vm3900 = vweird.f32 %v3894
        %vm3901 = vmor %vm3899, %vm3900
        %v3902 = vsel %vm3901, %v3894, %v3898
        %v3903 = vand.u32 2147483647, %v3694
        %vm3904 = vcmp.eq.f32.partialorder %v3903, 8.507059e+37
        %v3905 = vand.u32 %v3694, 2147483648
        %v3906 = vor.u32 1.1754944e-38, %v3905
        %v3907 = vsel %vm3904, %v3906, %v3902
        %v3908 = vmul.f32 1.0, %v3907
        %v3909 = vrcp.pop %v3695
        %v3910 = vmul.f32 %v3695, %v3909
        %v3911 = vsub.f32 1.0, %v3910
        %v3912 = vmul.f32 %v3909, %v3911
        %v3913 = vadd.f32 %v3909, %v3912
        %vm3914 = vweird.f32 %v3695
        %vm3915 = vweird.f32 %v3909
        %vm3916 = vmor %vm3914, %vm3915
        %v3917 = vsel %vm3916, %v3909, %v3913
        %v3918 = vand.u32 2147483647, %v3695
        %vm3919 = vcmp.eq.f32.partialorder %v3918, 8.507059e+37
        %v3920 = vand.u32 %v3695, 2147483648
        %v3921 = vor.u32 1.1754944e-38, %v3920
        %v3922 = vsel %vm3919, %v3921, %v3917
        %v3923 = vmul.f32 1.0, %v3922
        %v3924 = vrcp.pop %v3696
        %v3925 = vmul.f32 %v3696, %v3924
        %v3926 = vsub.f32 1.0, %v3925
        %v3927 = vmul.f32 %v3924, %v3926
        %v3928 = vadd.f32 %v3924, %v3927
        %vm3929 = vweird.f32 %v3696
        %vm3930 = vweird.f32 %v3924
        %vm3931 = vmor %vm3929, %vm3930
        %v3932 = vsel %vm3931, %v3924, %v3928
        %v3933 = vand.u32 2147483647, %v3696
        %vm3934 = vcmp.eq.f32.partialorder %v3933, 8.507059e+37
        %v3935 = vand.u32 %v3696, 2147483648
        %v3936 = vor.u32 1.1754944e-38, %v3935
        %v3937 = vsel %vm3934, %v3936, %v3932
        %v3938 = vmul.f32 1.0, %v3937
        %v3939 = vrcp.pop %v3697
        %v3940 = vmul.f32 %v3697, %v3939
        %v3941 = vsub.f32 1.0, %v3940
        %v3942 = vmul.f32 %v3939, %v3941
        %v3943 = vadd.f32 %v3939, %v3942
        %vm3944 = vweird.f32 %v3697
        %vm3945 = vweird.f32 %v3939
        %vm3946 = vmor %vm3944, %vm3945
        %v3947 = vsel %vm3946, %v3939, %v3943
        %v3948 = vand.u32 2147483647, %v3697
        %vm3949 = vcmp.eq.f32.partialorder %v3948, 8.507059e+37
        %v3950 = vand.u32 %v3697, 2147483648
        %v3951 = vor.u32 1.1754944e-38, %v3950
        %v3952 = vsel %vm3949, %v3951, %v3947
        %v3953 = vmul.f32 1.0, %v3952
        %v3954 = vrcp.pop %v3698
        %v3955 = vmul.f32 %v3698, %v3954
        %v3956 = vsub.f32 1.0, %v3955
        %v3957 = vmul.f32 %v3954, %v3956
        %v3958 = vadd.f32 %v3954, %v3957
        %vm3959 = vweird.f32 %v3698
        %vm3960 = vweird.f32 %v3954
        %vm3961 = vmor %vm3959, %vm3960
        %v3962 = vsel %vm3961, %v3954, %v3958
        %v3963 = vand.u32 2147483647, %v3698
        %vm3964 = vcmp.eq.f32.partialorder %v3963, 8.507059e+37
        %v3965 = vand.u32 %v3698, 2147483648
        %v3966 = vor.u32 1.1754944e-38, %v3965
        %v3967 = vsel %vm3964, %v3966, %v3962
        %v3968 = vmul.f32 1.0, %v3967
        %v3969 = vrcp.pop %v3699
        %v3970 = vmul.f32 %v3699, %v3969
        %v3971 = vsub.f32 1.0, %v3970
        %v3972 = vmul.f32 %v3969, %v3971
        %v3973 = vadd.f32 %v3969, %v3972
        %vm3974 = vweird.f32 %v3699
        %vm3975 = vweird.f32 %v3969
        %vm3976 = vmor %vm3974, %vm3975
        %v3977 = vsel %vm3976, %v3969, %v3973
        %v3978 = vand.u32 2147483647, %v3699
        %vm3979 = vcmp.eq.f32.partialorder %v3978, 8.507059e+37
        %v3980 = vand.u32 %v3699, 2147483648
        %v3981 = vor.u32 1.1754944e-38, %v3980
        %v3982 = vsel %vm3979, %v3981, %v3977
        %v3983 = vmul.f32 1.0, %v3982
        %v3984 = vrcp.pop %v3700
        %v3985 = vmul.f32 %v3700, %v3984
        %v3986 = vsub.f32 1.0, %v3985
        %v3987 = vmul.f32 %v3984, %v3986
        %v3988 = vadd.f32 %v3984, %v3987
        %vm3989 = vweird.f32 %v3700
        %vm3990 = vweird.f32 %v3984
        %vm3991 = vmor %vm3989, %vm3990
        %v3992 = vsel %vm3991, %v3984, %v3988
        %v3993 = vand.u32 2147483647, %v3700
        %vm3994 = vcmp.eq.f32.partialorder %v3993, 8.507059e+37
        %v3995 = vand.u32 %v3700, 2147483648
        %v3996 = vor.u32 1.1754944e-38, %v3995
        %v3997 = vsel %vm3994, %v3996, %v3992
        %v3998 = vmul.f32 1.0, %v3997
        %v3999 = vrcp.pop %v3701
        %v4000 = vmul.f32 %v3701, %v3999
        %v4001 = vsub.f32 1.0, %v4000
        %v4002 = vmul.f32 %v3999, %v4001
        %v4003 = vadd.f32 %v3999, %v4002
        %vm4004 = vweird.f32 %v3701
        %vm4005 = vweird.f32 %v3999
        %vm4006 = vmor %vm4004, %vm4005
        %v4007 = vsel %vm4006, %v3999, %v4003
        %v4008 = vand.u32 2147483647, %v3701
        %vm4009 = vcmp.eq.f32.partialorder %v4008, 8.507059e+37
        %v4010 = vand.u32 %v3701, 2147483648
        %v4011 = vor.u32 1.1754944e-38, %v4010
        %v4012 = vsel %vm4009, %v4011, %v4007
        %v4013 = vmul.f32 1.0, %v4012
        %v4014 = vrcp.pop %v3702
        %v4015 = vmul.f32 %v3702, %v4014
        %v4016 = vsub.f32 1.0, %v4015
        %v4017 = vmul.f32 %v4014, %v4016
        %v4018 = vadd.f32 %v4014, %v4017
        %vm4019 = vweird.f32 %v3702
        %vm4020 = vweird.f32 %v4014
        %vm4021 = vmor %vm4019, %vm4020
        %v4022 = vsel %vm4021, %v4014, %v4018
        %v4023 = vand.u32 2147483647, %v3702
        %vm4024 = vcmp.eq.f32.partialorder %v4023, 8.507059e+37
        %v4025 = vand.u32 %v3702, 2147483648
        %v4026 = vor.u32 1.1754944e-38, %v4025
        %v4027 = vsel %vm4024, %v4026, %v4022
        %v4028 = vmul.f32 1.0, %v4027
        %v4029 = vrcp.pop %v3703
        %v4030 = vmul.f32 %v3703, %v4029
        %v4031 = vsub.f32 1.0, %v4030
        %v4032 = vmul.f32 %v4029, %v4031
        %v4033 = vadd.f32 %v4029, %v4032
        %vm4034 = vweird.f32 %v3703
        %vm4035 = vweird.f32 %v4029
        %vm4036 = vmor %vm4034, %vm4035
        %v4037 = vsel %vm4036, %v4029, %v4033
        %v4038 = vand.u32 2147483647, %v3703
        %vm4039 = vcmp.eq.f32.partialorder %v4038, 8.507059e+37
        %v4040 = vand.u32 %v3703, 2147483648
        %v4041 = vor.u32 1.1754944e-38, %v4040
        %v4042 = vsel %vm4039, %v4041, %v4037
        %v4043 = vmul.f32 1.0, %v4042
        %v4044 = vrcp.pop %v3704
        %v4045 = vmul.f32 %v3704, %v4044
        %v4046 = vsub.f32 1.0, %v4045
        %v4047 = vmul.f32 %v4044, %v4046
        %v4048 = vadd.f32 %v4044, %v4047
        %vm4049 = vweird.f32 %v3704
        %vm4050 = vweird.f32 %v4044
        %vm4051 = vmor %vm4049, %vm4050
        %v4052 = vsel %vm4051, %v4044, %v4048
        %v4053 = vand.u32 2147483647, %v3704
        %vm4054 = vcmp.eq.f32.partialorder %v4053, 8.507059e+37
        %v4055 = vand.u32 %v3704, 2147483648
        %v4056 = vor.u32 1.1754944e-38, %v4055
        %v4057 = vsel %vm4054, %v4056, %v4052
        %v4058 = vmul.f32 1.0, %v4057
        %v4059 = vrcp.pop %v3705
        %v4060 = vmul.f32 %v3705, %v4059
        %v4061 = vsub.f32 1.0, %v4060
        %v4062 = vmul.f32 %v4059, %v4061
        %v4063 = vadd.f32 %v4059, %v4062
        %vm4064 = vweird.f32 %v3705
        %vm4065 = vweird.f32 %v4059
        %vm4066 = vmor %vm4064, %vm4065
        %v4067 = vsel %vm4066, %v4059, %v4063
        %v4068 = vand.u32 2147483647, %v3705
        %vm4069 = vcmp.eq.f32.partialorder %v4068, 8.507059e+37
        %v4070 = vand.u32 %v3705, 2147483648
        %v4071 = vor.u32 1.1754944e-38, %v4070
        %v4072 = vsel %vm4069, %v4071, %v4067
        %v4073 = vmul.f32 1.0, %v4072
        %v4074 = vrcp.pop %v3706
        %v4075 = vmul.f32 %v3706, %v4074
        %v4076 = vsub.f32 1.0, %v4075
        %v4077 = vmul.f32 %v4074, %v4076
        %v4078 = vadd.f32 %v4074, %v4077
        %vm4079 = vweird.f32 %v3706
        %vm4080 = vweird.f32 %v4074
        %vm4081 = vmor %vm4079, %vm4080
        %v4082 = vsel %vm4081, %v4074, %v4078
        %v4083 = vand.u32 2147483647, %v3706
        %vm4084 = vcmp.eq.f32.partialorder %v4083, 8.507059e+37
        %v4085 = vand.u32 %v3706, 2147483648
        %v4086 = vor.u32 1.1754944e-38, %v4085
        %v4087 = vsel %vm4084, %v4086, %v4082
        %v4088 = vmul.f32 1.0, %v4087
        %v4089 = vrcp.pop %v3707
        %v4090 = vmul.f32 %v3707, %v4089
        %v4091 = vsub.f32 1.0, %v4090
        %v4092 = vmul.f32 %v4089, %v4091
        %v4093 = vadd.f32 %v4089, %v4092
        %vm4094 = vweird.f32 %v3707
        %vm4095 = vweird.f32 %v4089
        %vm4096 = vmor %vm4094, %vm4095
        %v4097 = vsel %vm4096, %v4089, %v4093
        %v4098 = vand.u32 2147483647, %v3707
        %vm4099 = vcmp.eq.f32.partialorder %v4098, 8.507059e+37
        %v4100 = vand.u32 %v3707, 2147483648
        %v4101 = vor.u32 1.1754944e-38, %v4100
        %v4102 = vsel %vm4099, %v4101, %v4097
        %v4103 = vmul.f32 1.0, %v4102
        %v4104 = vrcp.pop %v3708
        %v4105 = vmul.f32 %v3708, %v4104
        %v4106 = vsub.f32 1.0, %v4105
        %v4107 = vmul.f32 %v4104, %v4106
        %v4108 = vadd.f32 %v4104, %v4107
        %vm4109 = vweird.f32 %v3708
        %vm4110 = vweird.f32 %v4104
        %vm4111 = vmor %vm4109, %vm4110
        %v4112 = vsel %vm4111, %v4104, %v4108
        %v4113 = vand.u32 2147483647, %v3708
        %vm4114 = vcmp.eq.f32.partialorder %v4113, 8.507059e+37
        %v4115 = vand.u32 %v3708, 2147483648
        %v4116 = vor.u32 1.1754944e-38, %v4115
        %v4117 = vsel %vm4114, %v4116, %v4112
        %v4118 = vmul.f32 1.0, %v4117
        %v4119 = vrcp.pop %v3709
        %v4120 = vmul.f32 %v3709, %v4119
        %v4121 = vsub.f32 1.0, %v4120
        %v4122 = vmul.f32 %v4119, %v4121
        %v4123 = vadd.f32 %v4119, %v4122
        %vm4124 = vweird.f32 %v3709
        %vm4125 = vweird.f32 %v4119
        %vm4126 = vmor %vm4124, %vm4125
        %v4127 = vsel %vm4126, %v4119, %v4123
        %v4128 = vand.u32 2147483647, %v3709
        %vm4129 = vcmp.eq.f32.partialorder %v4128, 8.507059e+37
        %v4130 = vand.u32 %v3709, 2147483648
        %v4131 = vor.u32 1.1754944e-38, %v4130
        %v4132 = vsel %vm4129, %v4131, %v4127
        %v4133 = vmul.f32 1.0, %v4132
        %v4134 = vrcp.pop %v3710
        %v4135 = vmul.f32 %v3710, %v4134
        %v4136 = vsub.f32 1.0, %v4135
        %v4137 = vmul.f32 %v4134, %v4136
        %v4138 = vadd.f32 %v4134, %v4137
        %vm4139 = vweird.f32 %v3710
        %vm4140 = vweird.f32 %v4134
        %vm4141 = vmor %vm4139, %vm4140
        %v4142 = vsel %vm4141, %v4134, %v4138
        %v4143 = vand.u32 2147483647, %v3710
        %vm4144 = vcmp.eq.f32.partialorder %v4143, 8.507059e+37
        %v4145 = vand.u32 %v3710, 2147483648
        %v4146 = vor.u32 1.1754944e-38, %v4145
        %v4147 = vsel %vm4144, %v4146, %v4142
        %v4148 = vmul.f32 1.0, %v4147
        %v4149 = vrcp.pop %v3711
        %v4150 = vmul.f32 %v3711, %v4149
        %v4151 = vsub.f32 1.0, %v4150
        %v4152 = vmul.f32 %v4149, %v4151
        %v4153 = vadd.f32 %v4149, %v4152
        %vm4154 = vweird.f32 %v3711
        %vm4155 = vweird.f32 %v4149
        %vm4156 = vmor %vm4154, %vm4155
        %v4157 = vsel %vm4156, %v4149, %v4153
        %v4158 = vand.u32 2147483647, %v3711
        %vm4159 = vcmp.eq.f32.partialorder %v4158, 8.507059e+37
        %v4160 = vand.u32 %v3711, 2147483648
        %v4161 = vor.u32 1.1754944e-38, %v4160
        %v4162 = vsel %vm4159, %v4161, %v4157
        %v4163 = vmul.f32 1.0, %v4162
        %v4164 = vrcp.pop %v3712
        %v4165 = vmul.f32 %v3712, %v4164
        %v4166 = vsub.f32 1.0, %v4165
        %v4167 = vmul.f32 %v4164, %v4166
        %v4168 = vadd.f32 %v4164, %v4167
        %vm4169 = vweird.f32 %v3712
        %vm4170 = vweird.f32 %v4164
        %vm4171 = vmor %vm4169, %vm4170
        %v4172 = vsel %vm4171, %v4164, %v4168
        %v4173 = vand.u32 2147483647, %v3712
        %vm4174 = vcmp.eq.f32.partialorder %v4173, 8.507059e+37
        %v4175 = vand.u32 %v3712, 2147483648
        %v4176 = vor.u32 1.1754944e-38, %v4175
        %v4177 = vsel %vm4174, %v4176, %v4172
        %v4178 = vmul.f32 1.0, %v4177
        %v4179 = vrcp.pop %v3713
        %v4180 = vmul.f32 %v3713, %v4179
        %v4181 = vsub.f32 1.0, %v4180
        %v4182 = vmul.f32 %v4179, %v4181
        %v4183 = vadd.f32 %v4179, %v4182
        %vm4184 = vweird.f32 %v3713
        %vm4185 = vweird.f32 %v4179
        %vm4186 = vmor %vm4184, %vm4185
        %v4187 = vsel %vm4186, %v4179, %v4183
        %v4188 = vand.u32 2147483647, %v3713
        %vm4189 = vcmp.eq.f32.partialorder %v4188, 8.507059e+37
        %v4190 = vand.u32 %v3713, 2147483648
        %v4191 = vor.u32 1.1754944e-38, %v4190
        %v4192 = vsel %vm4189, %v4191, %v4187
        %v4193 = vmul.f32 1.0, %v4192
        %v4194 = vmul.f32 %v3491, %v3728
        %v4195 = vmul.f32 %v3494, %v3743
        %v4196 = vmul.f32 %v3497, %v3758
        %v4197 = vmul.f32 %v3500, %v3773
        %v4198 = vmul.f32 %v3503, %v3788
        %v4199 = vmul.f32 %v3506, %v3803
        %v4200 = vmul.f32 %v3509, %v3818
        %v4201 = vmul.f32 %v3512, %v3833
        %v4202 = vmul.f32 %v3515, %v3848
        %v4203 = vmul.f32 %v3518, %v3863
        %v4204 = vmul.f32 %v3521, %v3878
        %v4205 = vmul.f32 %v3524, %v3893
        %v4206 = vmul.f32 %v3527, %v3908
        %v4207 = vmul.f32 %v3530, %v3923
        %v4208 = vmul.f32 %v3533, %v3938
        %v4209 = vmul.f32 %v3536, %v3953
        %v4210 = vmul.f32 %v3539, %v3968
        %v4211 = vmul.f32 %v3542, %v3983
        %v4212 = vmul.f32 %v3545, %v3998
        %v4213 = vmul.f32 %v3548, %v4013
        %v4214 = vmul.f32 %v3551, %v4028
        %v4215 = vmul.f32 %v3554, %v4043
        %v4216 = vmul.f32 %v3557, %v4058
        %v4217 = vmul.f32 %v3560, %v4073
        %v4218 = vmul.f32 %v3563, %v4088
        %v4219 = vmul.f32 %v3566, %v4103
        %v4220 = vmul.f32 %v3569, %v4118
        %v4221 = vmul.f32 %v3572, %v4133
        %v4222 = vmul.f32 %v3575, %v4148
        %v4223 = vmul.f32 %v3578, %v4163
        %v4224 = vmul.f32 %v3581, %v4178
        %v4225 = vmul.f32 %v3584, %v4193
        %v4226 = vld [vmem:[%s11] sm:$0xff]
        %v4227 = vld [vmem:[%s11 + $0x8] sm:$0xff]
        %v4228 = vld [vmem:[%s11 + $0x10] sm:$0xff]
        %v4229 = vld [vmem:[%s11 + $0x18] sm:$0xff]
        %v4230 = vld [vmem:[%s11 + $0x20] sm:$0xff]
        %v4231 = vld [vmem:[%s11 + $0x28] sm:$0xff]
        %v4232 = vld [vmem:[%s11 + $0x30] sm:$0xff]
        %v4233 = vld [vmem:[%s11 + $0x38] sm:$0xff]
        %v4234 = vld [vmem:[%s11 + $0x40] sm:$0xff]
        %v4235 = vld [vmem:[%s11 + $0x48] sm:$0xff]
        %v4236 = vld [vmem:[%s11 + $0x50] sm:$0xff]
        %v4237 = vld [vmem:[%s11 + $0x58] sm:$0xff]
        %v4238 = vld [vmem:[%s11 + $0x60] sm:$0xff]
        %v4239 = vld [vmem:[%s11 + $0x68] sm:$0xff]
        %v4240 = vld [vmem:[%s11 + $0x70] sm:$0xff]
        %v4241 = vld [vmem:[%s11 + $0x78] sm:$0xff]
        %4242 = vmatpush.msra.mxu0 %v4241
        %4243 = vmatpush.msra.mxu0 %v4240
        %4244 = vmatpush.msra.mxu0 %v4239
        %4245 = vmatpush.msra.mxu0 %v4238
        %4246 = vmatpush.msra.mxu0 %v4237
        %4247 = vmatpush.msra.mxu0 %v4236
        %4248 = vmatpush.msra.mxu0 %v4235
        %4249 = vmatpush.msra.mxu0 %v4234
        %4250 = vmatpush.msra.mxu0 %v4233
        %4251 = vmatpush.msra.mxu0 %v4232
        %4252 = vmatpush.msra.mxu0 %v4231
        %4253 = vmatpush.msra.mxu0 %v4230
        %4254 = vmatpush.msra.mxu0 %v4229
        %4255 = vmatpush.msra.mxu0 %v4228
        %4256 = vmatpush.msra.mxu0 %v4227
        %4257 = vmatpush.msra.mxu0 %v4226
        %4258 = vmatmul.f32.gmra.mxu0 %v4194
        %v4259 = vpop.f32.mrf.mxu0
        %v4260 = vadd.f32 0.0, %v4259
        %4261 = vmatmul.f32.gmra.mxu0 %v4195
        %v4262 = vpop.f32.mrf.mxu0
        %v4263 = vadd.f32 0.0, %v4262
        %4264 = vmatmul.f32.gmra.mxu0 %v4196
        %v4265 = vpop.f32.mrf.mxu0
        %v4266 = vadd.f32 0.0, %v4265
        %4267 = vmatmul.f32.gmra.mxu0 %v4197
        %v4268 = vpop.f32.mrf.mxu0
        %v4269 = vadd.f32 0.0, %v4268
        %4270 = vmatmul.f32.gmra.mxu0 %v4198
        %v4271 = vpop.f32.mrf.mxu0
        %v4272 = vadd.f32 0.0, %v4271
        %4273 = vmatmul.f32.gmra.mxu0 %v4199
        %v4274 = vpop.f32.mrf.mxu0
        %v4275 = vadd.f32 0.0, %v4274
        %4276 = vmatmul.f32.gmra.mxu0 %v4200
        %v4277 = vpop.f32.mrf.mxu0
        %v4278 = vadd.f32 0.0, %v4277
        %4279 = vmatmul.f32.gmra.mxu0 %v4201
        %v4280 = vpop.f32.mrf.mxu0
        %v4281 = vadd.f32 0.0, %v4280
        %4282 = vmatmul.f32.gmra.mxu0 %v4202
        %v4283 = vpop.f32.mrf.mxu0
        %v4284 = vadd.f32 0.0, %v4283
        %4285 = vmatmul.f32.gmra.mxu0 %v4203
        %v4286 = vpop.f32.mrf.mxu0
        %v4287 = vadd.f32 0.0, %v4286
        %4288 = vmatmul.f32.gmra.mxu0 %v4204
        %v4289 = vpop.f32.mrf.mxu0
        %v4290 = vadd.f32 0.0, %v4289
        %4291 = vmatmul.f32.gmra.mxu0 %v4205
        %v4292 = vpop.f32.mrf.mxu0
        %v4293 = vadd.f32 0.0, %v4292
        %4294 = vmatmul.f32.gmra.mxu0 %v4206
        %v4295 = vpop.f32.mrf.mxu0
        %v4296 = vadd.f32 0.0, %v4295
        %4297 = vmatmul.f32.gmra.mxu0 %v4207
        %v4298 = vpop.f32.mrf.mxu0
        %v4299 = vadd.f32 0.0, %v4298
        %4300 = vmatmul.f32.gmra.mxu0 %v4208
        %v4301 = vpop.f32.mrf.mxu0
        %v4302 = vadd.f32 0.0, %v4301
        %4303 = vmatmul.f32.gmra.mxu0 %v4209
        %v4304 = vpop.f32.mrf.mxu0
        %v4305 = vadd.f32 0.0, %v4304
        %4306 = vmatmul.f32.gmra.mxu0 %v4210
        %v4307 = vpop.f32.mrf.mxu0
        %v4308 = vadd.f32 0.0, %v4307
        %4309 = vmatmul.f32.gmra.mxu0 %v4211
        %v4310 = vpop.f32.mrf.mxu0
        %v4311 = vadd.f32 0.0, %v4310
        %4312 = vmatmul.f32.gmra.mxu0 %v4212
        %v4313 = vpop.f32.mrf.mxu0
        %v4314 = vadd.f32 0.0, %v4313
        %4315 = vmatmul.f32.gmra.mxu0 %v4213
        %v4316 = vpop.f32.mrf.mxu0
        %v4317 = vadd.f32 0.0, %v4316
        %4318 = vmatmul.f32.gmra.mxu0 %v4214
        %v4319 = vpop.f32.mrf.mxu0
        %v4320 = vadd.f32 0.0, %v4319
        %4321 = vmatmul.f32.gmra.mxu0 %v4215
        %v4322 = vpop.f32.mrf.mxu0
        %v4323 = vadd.f32 0.0, %v4322
        %4324 = vmatmul.f32.gmra.mxu0 %v4216
        %v4325 = vpop.f32.mrf.mxu0
        %v4326 = vadd.f32 0.0, %v4325
        %4327 = vmatmul.f32.gmra.mxu0 %v4217
        %v4328 = vpop.f32.mrf.mxu0
        %v4329 = vadd.f32 0.0, %v4328
        %4330 = vmatmul.f32.gmra.mxu0 %v4218
        %v4331 = vpop.f32.mrf.mxu0
        %v4332 = vadd.f32 0.0, %v4331
        %4333 = vmatmul.f32.gmra.mxu0 %v4219
        %v4334 = vpop.f32.mrf.mxu0
        %v4335 = vadd.f32 0.0, %v4334
        %4336 = vmatmul.f32.gmra.mxu0 %v4220
        %v4337 = vpop.f32.mrf.mxu0
        %v4338 = vadd.f32 0.0, %v4337
        %4339 = vmatmul.f32.gmra.mxu0 %v4221
        %v4340 = vpop.f32.mrf.mxu0
        %v4341 = vadd.f32 0.0, %v4340
        %4342 = vmatmul.f32.gmra.mxu0 %v4222
        %v4343 = vpop.f32.mrf.mxu0
        %v4344 = vadd.f32 0.0, %v4343
        %4345 = vmatmul.f32.gmra.mxu0 %v4223
        %v4346 = vpop.f32.mrf.mxu0
        %v4347 = vadd.f32 0.0, %v4346
        %4348 = vmatmul.f32.gmra.mxu0 %v4224
        %v4349 = vpop.f32.mrf.mxu0
        %v4350 = vadd.f32 0.0, %v4349
        %4351 = vmatmul.f32.gmra.mxu0 %v4225
        %v4352 = vpop.f32.mrf.mxu0
        %v4353 = vadd.f32 0.0, %v4352
        %4354 = vdwg.mxu0
        %4356 = vset.pattern.permute.xlu0 0
        %4357 = vperm.xlu0 %4356, %v4260
        %v4358 = vpop.permute.xlu0 %4357
        %4361 = vset.pattern.permute.xlu0 0
        %4362 = vperm.xlu0 %4361, %v4263
        %v4363 = vpop.permute.xlu0 %4362
        %4366 = vset.pattern.permute.xlu0 0
        %4367 = vperm.xlu0 %4366, %v4266
        %v4368 = vpop.permute.xlu0 %4367
        %4371 = vset.pattern.permute.xlu0 0
        %4372 = vperm.xlu0 %4371, %v4269
        %v4373 = vpop.permute.xlu0 %4372
        %4376 = vset.pattern.permute.xlu0 0
        %4377 = vperm.xlu0 %4376, %v4272
        %v4378 = vpop.permute.xlu0 %4377
        %4381 = vset.pattern.permute.xlu0 0
        %4382 = vperm.xlu0 %4381, %v4275
        %v4383 = vpop.permute.xlu0 %4382
        %4386 = vset.pattern.permute.xlu0 0
        %4387 = vperm.xlu0 %4386, %v4278
        %v4388 = vpop.permute.xlu0 %4387
        %4391 = vset.pattern.permute.xlu0 0
        %4392 = vperm.xlu0 %4391, %v4281
        %v4393 = vpop.permute.xlu0 %4392
        %4396 = vset.pattern.permute.xlu0 0
        %4397 = vperm.xlu0 %4396, %v4284
        %v4398 = vpop.permute.xlu0 %4397
        %4401 = vset.pattern.permute.xlu0 0
        %4402 = vperm.xlu0 %4401, %v4287
        %v4403 = vpop.permute.xlu0 %4402
        %4406 = vset.pattern.permute.xlu0 0
        %4407 = vperm.xlu0 %4406, %v4290
        %v4408 = vpop.permute.xlu0 %4407
        %4411 = vset.pattern.permute.xlu0 0
        %4412 = vperm.xlu0 %4411, %v4293
        %v4413 = vpop.permute.xlu0 %4412
        %4416 = vset.pattern.permute.xlu0 0
        %4417 = vperm.xlu0 %4416, %v4296
        %v4418 = vpop.permute.xlu0 %4417
        %4421 = vset.pattern.permute.xlu0 0
        %4422 = vperm.xlu0 %4421, %v4299
        %v4423 = vpop.permute.xlu0 %4422
        %4426 = vset.pattern.permute.xlu0 0
        %4427 = vperm.xlu0 %4426, %v4302
        %v4428 = vpop.permute.xlu0 %4427
        %4431 = vset.pattern.permute.xlu0 0
        %4432 = vperm.xlu0 %4431, %v4305
        %v4433 = vpop.permute.xlu0 %4432
        %4436 = vset.pattern.permute.xlu0 0
        %4437 = vperm.xlu0 %4436, %v4308
        %v4438 = vpop.permute.xlu0 %4437
        %4441 = vset.pattern.permute.xlu0 0
        %4442 = vperm.xlu0 %4441, %v4311
        %v4443 = vpop.permute.xlu0 %4442
        %4446 = vset.pattern.permute.xlu0 0
        %4447 = vperm.xlu0 %4446, %v4314
        %v4448 = vpop.permute.xlu0 %4447
        %4451 = vset.pattern.permute.xlu0 0
        %4452 = vperm.xlu0 %4451, %v4317
        %v4453 = vpop.permute.xlu0 %4452
        %4456 = vset.pattern.permute.xlu0 0
        %4457 = vperm.xlu0 %4456, %v4320
        %v4458 = vpop.permute.xlu0 %4457
        %4461 = vset.pattern.permute.xlu0 0
        %4462 = vperm.xlu0 %4461, %v4323
        %v4463 = vpop.permute.xlu0 %4462
        %4466 = vset.pattern.permute.xlu0 0
        %4467 = vperm.xlu0 %4466, %v4326
        %v4468 = vpop.permute.xlu0 %4467
        %4471 = vset.pattern.permute.xlu0 0
        %4472 = vperm.xlu0 %4471, %v4329
        %v4473 = vpop.permute.xlu0 %4472
        %4476 = vset.pattern.permute.xlu0 0
        %4477 = vperm.xlu0 %4476, %v4332
        %v4478 = vpop.permute.xlu0 %4477
        %4481 = vset.pattern.permute.xlu0 0
        %4482 = vperm.xlu0 %4481, %v4335
        %v4483 = vpop.permute.xlu0 %4482
        %4486 = vset.pattern.permute.xlu0 0
        %4487 = vperm.xlu0 %4486, %v4338
        %v4488 = vpop.permute.xlu0 %4487
        %4491 = vset.pattern.permute.xlu0 0
        %4492 = vperm.xlu0 %4491, %v4341
        %v4493 = vpop.permute.xlu0 %4492
        %4496 = vset.pattern.permute.xlu0 0
        %4497 = vperm.xlu0 %4496, %v4344
        %v4498 = vpop.permute.xlu0 %4497
        %4501 = vset.pattern.permute.xlu0 0
        %4502 = vperm.xlu0 %4501, %v4347
        %v4503 = vpop.permute.xlu0 %4502
        %4506 = vset.pattern.permute.xlu0 0
        %4507 = vperm.xlu0 %4506, %v4350
        %v4508 = vpop.permute.xlu0 %4507
        %4511 = vset.pattern.permute.xlu0 0
        %4512 = vperm.xlu0 %4511, %v4353
        %v4513 = vpop.permute.xlu0 %4512
        %v4515 = vmul.f32 %v1389, %v4358
        %v4516 = vmul.f32 %v1390, %v4363
        %v4517 = vmul.f32 %v1391, %v4368
        %v4518 = vmul.f32 %v1392, %v4373
        %v4519 = vmul.f32 %v1393, %v4378
        %v4520 = vmul.f32 %v1394, %v4383
        %v4521 = vmul.f32 %v1395, %v4388
        %v4522 = vmul.f32 %v1396, %v4393
        %v4523 = vmul.f32 %v1397, %v4398
        %v4524 = vmul.f32 %v1398, %v4403
        %v4525 = vmul.f32 %v1399, %v4408
        %v4526 = vmul.f32 %v1400, %v4413
        %v4527 = vmul.f32 %v1401, %v4418
        %v4528 = vmul.f32 %v1402, %v4423
        %v4529 = vmul.f32 %v1403, %v4428
        %v4530 = vmul.f32 %v1404, %v4433
        %v4531 = vmul.f32 %v1405, %v4438
        %v4532 = vmul.f32 %v1406, %v4443
        %v4533 = vmul.f32 %v1407, %v4448
        %v4534 = vmul.f32 %v1408, %v4453
        %v4535 = vmul.f32 %v1409, %v4458
        %v4536 = vmul.f32 %v1410, %v4463
        %v4537 = vmul.f32 %v1411, %v4468
        %v4538 = vmul.f32 %v1412, %v4473
        %v4539 = vmul.f32 %v1413, %v4478
        %v4540 = vmul.f32 %v1414, %v4483
        %v4541 = vmul.f32 %v1415, %v4488
        %v4542 = vmul.f32 %v1416, %v4493
        %v4543 = vmul.f32 %v1417, %v4498
        %v4544 = vmul.f32 %v1418, %v4503
        %v4545 = vmul.f32 %v1419, %v4508
        %v4546 = vmul.f32 %v1420, %v4513
        %4579 = vrot.lane.b32.xlu0 %v4515, 96
        %v4580 = vpop.permute.xlu0 %4579
        %4581 = vrot.lane.b32.xlu0 %v4516, 96
        %v4582 = vpop.permute.xlu0 %4581
        %4583 = vrot.lane.b32.xlu0 %v4517, 96
        %v4584 = vpop.permute.xlu0 %4583
        %4585 = vrot.lane.b32.xlu0 %v4518, 96
        %v4586 = vpop.permute.xlu0 %4585
        %4587 = vrot.lane.b32.xlu0 %v4519, 96
        %v4588 = vpop.permute.xlu0 %4587
        %4589 = vrot.lane.b32.xlu0 %v4520, 96
        %v4590 = vpop.permute.xlu0 %4589
        %4591 = vrot.lane.b32.xlu0 %v4521, 96
        %v4592 = vpop.permute.xlu0 %4591
        %4593 = vrot.lane.b32.xlu0 %v4522, 96
        %v4594 = vpop.permute.xlu0 %4593
        %4595 = vrot.lane.b32.xlu0 %v4523, 96
        %v4596 = vpop.permute.xlu0 %4595
        %4597 = vrot.lane.b32.xlu0 %v4524, 96
        %v4598 = vpop.permute.xlu0 %4597
        %4599 = vrot.lane.b32.xlu0 %v4525, 96
        %v4600 = vpop.permute.xlu0 %4599
        %4601 = vrot.lane.b32.xlu0 %v4526, 96
        %v4602 = vpop.permute.xlu0 %4601
        %4603 = vrot.lane.b32.xlu0 %v4527, 96
        %v4604 = vpop.permute.xlu0 %4603
        %4605 = vrot.lane.b32.xlu0 %v4528, 96
        %v4606 = vpop.permute.xlu0 %4605
        %4607 = vrot.lane.b32.xlu0 %v4529, 96
        %v4608 = vpop.permute.xlu0 %4607
        %4609 = vrot.lane.b32.xlu0 %v4530, 96
        %v4610 = vpop.permute.xlu0 %4609
        %4611 = vrot.lane.b32.xlu0 %v4531, 96
        %v4612 = vpop.permute.xlu0 %4611
        %4613 = vrot.lane.b32.xlu0 %v4532, 96
        %v4614 = vpop.permute.xlu0 %4613
        %4615 = vrot.lane.b32.xlu0 %v4533, 96
        %v4616 = vpop.permute.xlu0 %4615
        %4617 = vrot.lane.b32.xlu0 %v4534, 96
        %v4618 = vpop.permute.xlu0 %4617
        %4619 = vrot.lane.b32.xlu0 %v4535, 96
        %v4620 = vpop.permute.xlu0 %4619
        %4621 = vrot.lane.b32.xlu0 %v4536, 96
        %v4622 = vpop.permute.xlu0 %4621
        %4623 = vrot.lane.b32.xlu0 %v4537, 96
        %v4624 = vpop.permute.xlu0 %4623
        %4625 = vrot.lane.b32.xlu0 %v4538, 96
        %v4626 = vpop.permute.xlu0 %4625
        %4627 = vrot.lane.b32.xlu0 %v4539, 96
        %v4628 = vpop.permute.xlu0 %4627
        %4629 = vrot.lane.b32.xlu0 %v4540, 96
        %v4630 = vpop.permute.xlu0 %4629
        %4631 = vrot.lane.b32.xlu0 %v4541, 96
        %v4632 = vpop.permute.xlu0 %4631
        %4633 = vrot.lane.b32.xlu0 %v4542, 96
        %v4634 = vpop.permute.xlu0 %4633
        %4635 = vrot.lane.b32.xlu0 %v4543, 96
        %v4636 = vpop.permute.xlu0 %4635
        %4637 = vrot.lane.b32.xlu0 %v4544, 96
        %v4638 = vpop.permute.xlu0 %4637
        %4639 = vrot.lane.b32.xlu0 %v4545, 96
        %v4640 = vpop.permute.xlu0 %4639
        %4641 = vrot.lane.b32.xlu0 %v4546, 96
        %v4642 = vpop.permute.xlu0 %4641
        %v4675 = vsel %vm1581, %v4580, 1.0
        %v4676 = vsel %vm1581, %v4582, 1.0
        %v4677 = vsel %vm1581, %v4584, 1.0
        %v4678 = vsel %vm1581, %v4586, 1.0
        %v4679 = vsel %vm1581, %v4588, 1.0
        %v4680 = vsel %vm1581, %v4590, 1.0
        %v4681 = vsel %vm1581, %v4592, 1.0
        %v4682 = vsel %vm1581, %v4594, 1.0
        %v4683 = vsel %vm1581, %v4596, 1.0
        %v4684 = vsel %vm1581, %v4598, 1.0
        %v4685 = vsel %vm1581, %v4600, 1.0
        %v4686 = vsel %vm1581, %v4602, 1.0
        %v4687 = vsel %vm1581, %v4604, 1.0
        %v4688 = vsel %vm1581, %v4606, 1.0
        %v4689 = vsel %vm1581, %v4608, 1.0
        %v4690 = vsel %vm1581, %v4610, 1.0
        %v4691 = vsel %vm1581, %v4612, 1.0
        %v4692 = vsel %vm1581, %v4614, 1.0
        %v4693 = vsel %vm1581, %v4616, 1.0
        %v4694 = vsel %vm1581, %v4618, 1.0
        %v4695 = vsel %vm1581, %v4620, 1.0
        %v4696 = vsel %vm1581, %v4622, 1.0
        %v4697 = vsel %vm1581, %v4624, 1.0
        %v4698 = vsel %vm1581, %v4626, 1.0
        %v4699 = vsel %vm1581, %v4628, 1.0
        %v4700 = vsel %vm1581, %v4630, 1.0
        %v4701 = vsel %vm1581, %v4632, 1.0
        %v4702 = vsel %vm1581, %v4634, 1.0
        %v4703 = vsel %vm1581, %v4636, 1.0
        %v4704 = vsel %vm1581, %v4638, 1.0
        %v4705 = vsel %vm1581, %v4640, 1.0
        %v4706 = vsel %vm1581, %v4642, 1.0
        %vm4707 = vcmask 31744
        %v4708 = vsel %vm4707, %v4675, 0.0
        %v4709 = vsel %vm4707, %v4676, 0.0
        %v4710 = vsel %vm4707, %v4677, 0.0
        %v4711 = vsel %vm4707, %v4678, 0.0
        %v4712 = vsel %vm4707, %v4679, 0.0
        %v4713 = vsel %vm4707, %v4680, 0.0
        %v4714 = vsel %vm4707, %v4681, 0.0
        %v4715 = vsel %vm4707, %v4682, 0.0
        %v4716 = vsel %vm4707, %v4683, 0.0
        %v4717 = vsel %vm4707, %v4684, 0.0
        %v4718 = vsel %vm4707, %v4685, 0.0
        %v4719 = vsel %vm4707, %v4686, 0.0
        %v4720 = vsel %vm4707, %v4687, 0.0
        %v4721 = vsel %vm4707, %v4688, 0.0
        %v4722 = vsel %vm4707, %v4689, 0.0
        %v4723 = vsel %vm4707, %v4690, 0.0
        %v4724 = vsel %vm4707, %v4691, 0.0
        %v4725 = vsel %vm4707, %v4692, 0.0
        %v4726 = vsel %vm4707, %v4693, 0.0
        %v4727 = vsel %vm4707, %v4694, 0.0
        %v4728 = vsel %vm4707, %v4695, 0.0
        %v4729 = vsel %vm4707, %v4696, 0.0
        %v4730 = vsel %vm4707, %v4697, 0.0
        %v4731 = vsel %vm4707, %v4698, 0.0
        %v4732 = vsel %vm4707, %v4699, 0.0
        %v4733 = vsel %vm4707, %v4700, 0.0
        %v4734 = vsel %vm4707, %v4701, 0.0
        %v4735 = vsel %vm4707, %v4702, 0.0
        %v4736 = vsel %vm4707, %v4703, 0.0
        %v4737 = vsel %vm4707, %v4704, 0.0
        %v4738 = vsel %vm4707, %v4705, 0.0
        %v4739 = vsel %vm4707, %v4706, 0.0
        %v4740 = vld [vmem:[#allocation2] sm:$0xff]
        %v4741 = vld [vmem:[#allocation2 + $0x8] sm:$0xff]
        %4742 = vxpose.xlu0.b32.start [1/16] %v714, 128
        %4743 = vxpose.xlu0.b32.cont [2/16] %v715, 128
        %4744 = vxpose.xlu0.b32.cont [3/16] %v716, 128
        %4745 = vxpose.xlu0.b32.cont [4/16] %v717, 128
        %4746 = vxpose.xlu0.b32.cont [5/16] %v718, 128
        %4747 = vxpose.xlu0.b32.cont [6/16] %v719, 128
        %4748 = vxpose.xlu0.b32.cont [7/16] %v720, 128
        %4749 = vxpose.xlu0.b32.cont [8/16] %v721, 128
        %4750 = vxpose.xlu0.b32.cont [9/16] %v722, 128
        %4751 = vxpose.xlu0.b32.cont [10/16] %v723, 128
        %4752 = vxpose.xlu0.b32.cont [11/16] %v724, 128
        %4753 = vxpose.xlu0.b32.cont [12/16] %v725, 128
        %4754 = vxpose.xlu0.b32.cont [13/16] %v726, 128
        %4755 = vxpose.xlu0.b32.cont [14/16] %v727, 128
        %4756 = vxpose.xlu0.b32.cont [15/16] %v728, 128
        %4757 = vxpose.xlu0.b32.end [16/16] %v729, 128
        %v4758 = vpop.trf.xlu0
        %v4759 = vpop.trf.xlu0
        %v4760 = vpop.trf.xlu0
        %v4761 = vpop.trf.xlu0
        %v4762 = vpop.trf.xlu0
        %v4763 = vpop.trf.xlu0
        %v4764 = vpop.trf.xlu0
        %v4765 = vpop.trf.xlu0
        %v4766 = vpop.trf.xlu0
        %v4767 = vpop.trf.xlu0
        %v4768 = vpop.trf.xlu0
        %v4769 = vpop.trf.xlu0
        %v4770 = vpop.trf.xlu0
        %v4771 = vpop.trf.xlu0
        %v4772 = vpop.trf.xlu0
        %v4773 = vpop.trf.xlu0
        %4774 = vxpose.xlu0.b32.start [1/16] %v730, 128
        %4775 = vxpose.xlu0.b32.cont [2/16] %v731, 128
        %4776 = vxpose.xlu0.b32.cont [3/16] %v732, 128
        %4777 = vxpose.xlu0.b32.cont [4/16] %v733, 128
        %4778 = vxpose.xlu0.b32.cont [5/16] %v734, 128
        %4779 = vxpose.xlu0.b32.cont [6/16] %v735, 128
        %4780 = vxpose.xlu0.b32.cont [7/16] %v736, 128
        %4781 = vxpose.xlu0.b32.cont [8/16] %v737, 128
        %4782 = vxpose.xlu0.b32.cont [9/16] %v738, 128
        %4783 = vxpose.xlu0.b32.cont [10/16] %v739, 128
        %4784 = vxpose.xlu0.b32.cont [11/16] %v740, 128
        %4785 = vxpose.xlu0.b32.cont [12/16] %v741, 128
        %4786 = vxpose.xlu0.b32.cont [13/16] %v742, 128
        %4787 = vxpose.xlu0.b32.cont [14/16] %v743, 128
        %4788 = vxpose.xlu0.b32.cont [15/16] %v744, 128
        %4789 = vxpose.xlu0.b32.end [16/16] %v745, 128
        %v4790 = vpop.trf.xlu0
        %v4791 = vpop.trf.xlu0
        %v4792 = vpop.trf.xlu0
        %v4793 = vpop.trf.xlu0
        %v4794 = vpop.trf.xlu0
        %v4795 = vpop.trf.xlu0
        %v4796 = vpop.trf.xlu0
        %v4797 = vpop.trf.xlu0
        %v4798 = vpop.trf.xlu0
        %v4799 = vpop.trf.xlu0
        %v4800 = vpop.trf.xlu0
        %v4801 = vpop.trf.xlu0
        %v4802 = vpop.trf.xlu0
        %v4803 = vpop.trf.xlu0
        %v4804 = vpop.trf.xlu0
        %v4805 = vpop.trf.xlu0
        %4806 = vmatpush.msra.mxu0 %v3436
        %4807 = vmatpush.msra.mxu0 %v3435
        %4808 = vmatpush.msra.mxu0 %v3434
        %4809 = vmatpush.msra.mxu0 %v3433
        %4810 = vmatpush.msra.mxu0 %v3432
        %4811 = vmatpush.msra.mxu0 %v3431
        %4812 = vmatpush.msra.mxu0 %v3430
        %4813 = vmatpush.msra.mxu0 %v3429
        %4814 = vmatpush.msra.mxu0 %v3428
        %4815 = vmatpush.msra.mxu0 %v3427
        %4816 = vmatpush.msra.mxu0 %v3426
        %4817 = vmatpush.msra.mxu0 %v3425
        %4818 = vmatpush.msra.mxu0 %v3424
        %4819 = vmatpush.msra.mxu0 %v3423
        %4820 = vmatpush.msra.mxu0 %v3422
        %4821 = vmatpush.msra.mxu0 %v3421
        %4822 = vmatmul.f32.gmra.mxu0 %v4758
        %v4823 = vpop.f32.mrf.mxu0
        %v4824 = vadd.f32 0.0, %v4823
        %4825 = vmatmul.f32.gmra.mxu0 %v4759
        %v4826 = vpop.f32.mrf.mxu0
        %v4827 = vadd.f32 0.0, %v4826
        %4828 = vdwg.mxu0
        %4829 = vmatpush.msra.mxu0 %v3452
        %4830 = vmatpush.msra.mxu0 %v3451
        %4831 = vmatpush.msra.mxu0 %v3450
        %4832 = vmatpush.msra.mxu0 %v3449
        %4833 = vmatpush.msra.mxu0 %v3448
        %4834 = vmatpush.msra.mxu0 %v3447
        %4835 = vmatpush.msra.mxu0 %v3446
        %4836 = vmatpush.msra.mxu0 %v3445
        %4837 = vmatpush.msra.mxu0 %v3444
        %4838 = vmatpush.msra.mxu0 %v3443
        %4839 = vmatpush.msra.mxu0 %v3442
        %4840 = vmatpush.msra.mxu0 %v3441
        %4841 = vmatpush.msra.mxu0 %v3440
        %4842 = vmatpush.msra.mxu0 %v3439
        %4843 = vmatpush.msra.mxu0 %v3438
        %4844 = vmatpush.msra.mxu0 %v3437
        %4845 = vmatmul.f32.gmra.mxu0 %v4790
        %v4846 = vpop.f32.mrf.mxu0
        %v4847 = vadd.f32 %v4824, %v4846
        %4848 = vmatmul.f32.gmra.mxu0 %v4791
        %v4849 = vpop.f32.mrf.mxu0
        %v4850 = vadd.f32 %v4827, %v4849
        %4851 = vdwg.mxu0
        %v4852 = vadd.f32 %v4740, %v4847
        %v4853 = vadd.f32 %v4741, %v4850
        %4854 = vst [vmem:[#allocation2] sm:$0xff] %v4852
        %4855 = vst [vmem:[#allocation2 + $0x8] sm:$0xff] %v4853
        %v4856 = vld [vmem:[%s508] sm:$0xff]
        %v4857 = vld [vmem:[%s508 + $0x8] sm:$0xff]
        %4858 = vmatpush.msra.mxu0 %v4723
        %4859 = vmatpush.msra.mxu0 %v4722
        %4860 = vmatpush.msra.mxu0 %v4721
        %4861 = vmatpush.msra.mxu0 %v4720
        %4862 = vmatpush.msra.mxu0 %v4719
        %4863 = vmatpush.msra.mxu0 %v4718
        %4864 = vmatpush.msra.mxu0 %v4717
        %4865 = vmatpush.msra.mxu0 %v4716
        %4866 = vmatpush.msra.mxu0 %v4715
        %4867 = vmatpush.msra.mxu0 %v4714
        %4868 = vmatpush.msra.mxu0 %v4713
        %4869 = vmatpush.msra.mxu0 %v4712
        %4870 = vmatpush.msra.mxu0 %v4711
        %4871 = vmatpush.msra.mxu0 %v4710
        %4872 = vmatpush.msra.mxu0 %v4709
        %4873 = vmatpush.msra.mxu0 %v4708
        %4874 = vmatmul.f32.gmra.mxu0 %v4758
        %v4875 = vpop.f32.mrf.mxu0
        %v4876 = vadd.f32 0.0, %v4875
        %4877 = vmatmul.f32.gmra.mxu0 %v4759
        %v4878 = vpop.f32.mrf.mxu0
        %v4879 = vadd.f32 0.0, %v4878
        %4880 = vdwg.mxu0
        %4881 = vmatpush.msra.mxu0 %v4739
        %4882 = vmatpush.msra.mxu0 %v4738
        %4883 = vmatpush.msra.mxu0 %v4737
        %4884 = vmatpush.msra.mxu0 %v4736
        %4885 = vmatpush.msra.mxu0 %v4735
        %4886 = vmatpush.msra.mxu0 %v4734
        %4887 = vmatpush.msra.mxu0 %v4733
        %4888 = vmatpush.msra.mxu0 %v4732
        %4889 = vmatpush.msra.mxu0 %v4731
        %4890 = vmatpush.msra.mxu0 %v4730
        %4891 = vmatpush.msra.mxu0 %v4729
        %4892 = vmatpush.msra.mxu0 %v4728
        %4893 = vmatpush.msra.mxu0 %v4727
        %4894 = vmatpush.msra.mxu0 %v4726
        %4895 = vmatpush.msra.mxu0 %v4725
        %4896 = vmatpush.msra.mxu0 %v4724
        %4897 = vmatmul.f32.gmra.mxu0 %v4790
        %v4898 = vpop.f32.mrf.mxu0
        %v4899 = vadd.f32 %v4876, %v4898
        %4900 = vmatmul.f32.gmra.mxu0 %v4791
        %v4901 = vpop.f32.mrf.mxu0
        %v4902 = vadd.f32 %v4879, %v4901
        %4903 = vdwg.mxu0
        %v4904 = vadd.f32 %v4856, %v4899
        %v4905 = vadd.f32 %v4857, %v4902
        %vm4906 = vcmask 64512
        %4907 = vst.msk [vmem:[%s508] sm:$0xff] %vm4906, %v4904
        %4908 = vst.msk [vmem:[%s508 + $0x8] sm:$0xff] %vm4906, %v4905
        %p4909 = scmp.lt.s32.totalorder %s30, 0
        %s4910 = scalar_select %p4909, %s30, 0
        %s4911 = smul.addr %s4910, 2
        %s4912 = smul.addr %s4911, 8
        %s4913 = scalar_lea.vmem %s13, %s4912
        // Predicated region
        $region73: #{tpu_custom_call.1} parent=67 // pred_check
          %p4914 = pneg %p326
        $region74: #{tpu_custom_call.1} parent=67 // pred_check_branch
          %4916 = sbr.rel (%p4914) target = $region76
        $region75: #{tpu_custom_call.1} parent=67 // pred_region
          %4918 = vsyncadd [#allocation3], 0
          %s4919 = smul.addr %s30, 2
          %s4920 = smul.addr %s4919, 8
          %s4921 = scalar_lea.hbm %s12, %s4920
          %s4922 = sshll.u32 [#allocation2], 4
          %s4923 = int_to_ptr.vmem [resolvable:$true] %s4922
          %s4924 = sshll.u32 %s4921, 4
          %s4925 = int_to_ptr.hbm [resolvable:$true] %s4924
          %4930 = dma.vmem_to_hbm [thread:$0]  %s4923, 256, %s4925, [#allocation3], 128, 128, 8
        $region76: #{tpu_custom_call.1} parent=67 // pred_fallthru
          _
        // Predicated region
        $region77: #{tpu_custom_call.1} parent=67 // pred_check
          %p4931 = pneg %p352
        $region78: #{tpu_custom_call.1} parent=67 // pred_check_branch
          %4933 = sbr.rel (%p4931) target = $region80
        $region79: #{tpu_custom_call.1} parent=67 // pred_region
          _
        $region80: #{tpu_custom_call.1} parent=67 // pred_fallthru
          _
        // Predicated region
        $region81: #{tpu_custom_call.1} parent=67 // pred_check
          %p4934 = pneg %p326
        $region82: #{tpu_custom_call.1} parent=67 // pred_check_branch
          %4936 = sbr.rel (%p4934) target = $region84
        $region83: #{tpu_custom_call.1} parent=67 // pred_region
          %4938 = dma.done [#allocation3], 256
        $region84: #{tpu_custom_call.1} parent=67 // pred_fallthru
          _
        // Predicated region
        $region85: #{tpu_custom_call.1} parent=67 // pred_check
          %p4939 = pneg %p352
        $region86: #{tpu_custom_call.1} parent=67 // pred_check_branch
          %4941 = sbr.rel (%p4939) target = $region88
        $region87: #{tpu_custom_call.1} parent=67 // pred_region
          %p4942 = scmp.lt.s32.totalorder %s30, 0
          %s4943 = scalar_select %p4942, %s30, 0
          %s4944 = smul.addr %s4943, 2
          %s4945 = smul.addr %s4944, 8
          %s4946 = scalar_lea.vmem %s13, %s4945
        $region88: #{tpu_custom_call.1} parent=67 // pred_fallthru
          _
      $region68: #{tpu_custom_call.1} parent=5 // pred_fallthru
        _
      %p4947 = scmp.le.s32.totalorder 2, %s21
      // Predicated region
      $region89: #{tpu_custom_call.1} parent=5 // pred_check
        %p4948 = pneg %p4947
      $region90: #{tpu_custom_call.1} parent=5 // pred_check_branch
        %4950 = sbr.rel (%p4948) target = $region92
      $region91: #{tpu_custom_call.1} parent=5 // pred_region
        %s4951 = ssub.s32 %s21, 2
      $region92: #{tpu_custom_call.1} parent=5 // pred_fallthru
        _
    $region6: #{tpu_custom_call.1} parent=1 // loop_footer
      %s25 = sadd.s32 1, %s21
    $region7: #{tpu_custom_call.1} parent=1 // loop_footer_branch
      %20 = sbr.rel target = $region3
    $region8: #{tpu_custom_call.1} parent=1 // loop_exit
      _
    %4952 = vsyncpa [#allocation3], 1
    %s4953 = scalar_lea.sflag [#allocation3], 1
    %4954 = vsyncpa %s4953, 1

</llo_original>
